<compile_context>
chip_gen: v5e
topology: v5e:2x2
jax: 0.10.0
libtpu: 0.0.40
codegen_flags: <defaults>
</compile_context>

<pallas_src>
import numpy as np
import jax
import jax.numpy as jnp
from jax.experimental import pallas as pl
from jax.experimental.pallas import tpu as pltpu


# ----------------------------------------------------------------------------
# small padding helpers (wrapper-side glue)
# ----------------------------------------------------------------------------
def _round_up(x, m):
    return ((x + m - 1) // m) * m


def _pad_to(a, shape):
    return jnp.pad(a, [(0, s - d) for d, s in zip(a.shape, shape)])


def _pad_cols(a, n):
    return jnp.pad(a, ((0, 0), (0, n - a.shape[1])))


def _pad_rows(a, n):
    return jnp.pad(a, ((0, n - a.shape[0]), (0, 0)))


def _gate_pad_cols(w, H, Hp):
    """[in, 4H] -> [in, 4Hp]; gate block g moved to columns [g*Hp, g*Hp+H)."""
    blocks = [jnp.pad(w[:, g * H:(g + 1) * H], ((0, 0), (0, Hp - H)))
              for g in range(4)]
    return jnp.concatenate(blocks, axis=1)


def _gate_pad_bias(b, H, Hp):
    blocks = [jnp.pad(b[g * H:(g + 1) * H], (0, Hp - H)) for g in range(4)]
    return jnp.concatenate(blocks)[None, :]


def _musig_pad_cols(w, L, Lp):
    """[in, 2L] -> [in, 2Lp]; mu block at cols [0,L), sigma block at [Lp,Lp+L)."""
    return jnp.concatenate([jnp.pad(w[:, :L], ((0, 0), (0, Lp - L))),
                            jnp.pad(w[:, L:], ((0, 0), (0, Lp - L)))], axis=1)


def _musig_pad_bias(b, L, Lp):
    return jnp.concatenate([jnp.pad(b[:L], (0, Lp - L)),
                            jnp.pad(b[L:], (0, Lp - L))])[None, :]


def _padded_vmem_bytes(shape, itemsize=4):
    """Approximate VMEM footprint of an f32 array ((8,128) tile padding)."""
    if len(shape) == 1:
        rows, cols = 1, shape[0]
    else:
        rows, cols = int(np.prod(shape[:-1])), shape[-1]
    return _round_up(max(rows, 1), 8) * _round_up(max(cols, 1), 128) * itemsize


# ----------------------------------------------------------------------------
# Pallas kernel
# ----------------------------------------------------------------------------
def make_vrnn_kernel(num_layers, T, z_step, Bp, E, H, Hp, Lp, Vp, V, T_det,
                     compact, GAp):
    f32 = jnp.float32
    Hc = H if compact else Hp   # width of h/c state and row dim of h-weights

    def kernel(*refs):
        it = iter(refs)
        emb_ref = next(it)             # [(T+1)*Bp, E]  row-block 0 = features
        eps_ref = next(it)             # [Bp, Lp]
        w0e_ref = next(it)             # [E, GAp]   layer-0 w_ih, emb part
        w0z_ref = next(it)             # [Lp, GAp]  layer-0 w_ih, z part
        w0hh_ref = next(it)            # [Hc, GAp]  layer-0 w_hh
        b0_ref = next(it)              # [1, GAp]
        wf_refs = [None]
        b_refs = [b0_ref]
        for _ in range(1, num_layers):
            wf_refs.append(next(it))   # [2*Hc, GAp]  fused [w_ih ; w_hh]
            b_refs.append(next(it))    # [1, GAp]
        prior_w_ref = next(it)         # [Hc, 2Lp]
        prior_b_ref = next(it)         # [1, 2Lp]
        qz_we_ref = next(it)           # [E, 2Lp]
        qz_wh_ref = next(it)           # [Hc, 2Lp]
        qz_b_ref = next(it)            # [1, 2Lp]
        qx_wz_ref = next(it)           # [Lp, Vp]
        qx_wh_ref = next(it)           # [Hc, Vp]
        qx_b_ref = next(it)            # [1, Vp]
        detx_w_ref = next(it)          # [Hc, Vp]
        detx_b_ref = next(it)          # [1, Vp]
        # outputs
        p_mu_ref = next(it)            # [Bp, Lp]
        p_sigma_ref = next(it)         # [Bp, Lp]
        q_mu_ref = next(it)            # [Bp, Lp]
        q_sigma_ref = next(it)         # [Bp, Lp]
        q_x_ref = next(it)             # [Bp, Vp]
        det_ref = next(it)             # [T_det*Bp, Vp]
        # scratch
        xproj_ref = next(it)           # [(T+1)*Bp, GAp]
        h_acc_ref = next(it)           # [T_det*Bp, Hc]

        # Hoisted constants (broadcast_in_dim / iota are not CSE'd across the
        # unrolled time loop).
        b_bc = [None] + [jnp.broadcast_to(b_refs[l][...], (Bp, GAp))
                         for l in range(1, num_layers)]
        if compact:
            gl = jax.lax.broadcasted_iota(jnp.int32, (Bp, GAp), 1)
            g_mask = (gl >= 2 * H) & (gl < 3 * H)   # g-gate lanes -> tanh
        else:
            g_mask = None

        # One tall input projection covering the features step (row block 0)
        # and all T caption steps; layer-0 bias folded in.  Only h @ w_hh
        # remains inside the recurrence.
        xproj_ref[...] = (jnp.dot(emb_ref[...], w0e_ref[...],
                                  preferred_element_type=f32)
                          + b0_ref[...])

        def gate_math(gates, c_prev):
            """PyTorch gate order (i, f, g, o)."""
            if compact:
                # one lane-masked select instead of 4x padded-lane work
                act = jnp.where(g_mask, jnp.tanh(gates), jax.nn.sigmoid(gates))
                i_g = act[:, 0 * H:1 * H]
                f_g = act[:, 1 * H:2 * H]
                g_g = act[:, 2 * H:3 * H]
                o_g = act[:, 3 * H:4 * H]
            else:
                i_g = jax.nn.sigmoid(gates[:, 0 * Hp:1 * Hp])
                f_g = jax.nn.sigmoid(gates[:, 1 * Hp:2 * Hp])
                g_g = jnp.tanh(gates[:, 2 * Hp:3 * Hp])
                o_g = jax.nn.sigmoid(gates[:, 3 * Hp:4 * Hp])
            c = f_g * c_prev + i_g * g_g
            h = o_g * jnp.tanh(c)
            return h, c

        def lstm_step(in_gates0, h_list, c_list):
            """One multi-layer LSTM step; in_gates0 = x @ W_ih0 + b0."""
            new_h, new_c = [], []
            for layer in range(num_layers):
                if layer == 0:
                    gates = in_gates0 + jnp.dot(h_list[0], w0hh_ref[...],
                                                preferred_element_type=f32)
                else:
                    # single fused matmul against [w_ih ; w_hh]
                    xh = jnp.concatenate([new_h[layer - 1], h_list[layer]],
                                         axis=1)
                    gates = (jnp.dot(xh, wf_refs[layer][...],
                                     preferred_element_type=f32)
                             + b_bc[layer])
                h, c = gate_math(gates, c_list[layer])
                new_h.append(h)
                new_c.append(c)
            return new_h[-1], new_h, new_c

        zeros_bh = jnp.zeros((Bp, Hc), f32)
        h_list = [zeros_bh] * num_layers
        c_list = [zeros_bh] * num_layers

        # features step: x0 = [features, z_0 = 0]  (z contributes nothing)
        h_top, h_list, c_list = lstm_step(xproj_ref[pl.ds(0, Bp), :],
                                          h_list, c_list)

        # TODO(synk): at production T, split into lax.fori_loop phases.
        for i in range(T):
            in_g0 = xproj_ref[pl.ds((i + 1) * Bp, Bp), :]
            if i == z_step:
                # prior(h) -> p_mu, p_sigma (mu/sigma blocks vreg-aligned)
                prior_out = (jnp.dot(h_top, prior_w_ref[...],
                                     preferred_element_type=f32)
                             + prior_b_ref[...])
                p_mu = prior_out[:, :Lp]
                p_sigma = prior_out[:, Lp:]
                # q_z(cat([emb_i, h])) as split dots
                emb_i = emb_ref[pl.ds((i + 1) * Bp, Bp), :]
                qz_out = (jnp.dot(emb_i, qz_we_ref[...],
                                  preferred_element_type=f32)
                          + jnp.dot(h_top, qz_wh_ref[...],
                                    preferred_element_type=f32)
                          + qz_b_ref[...])
                q_mu = qz_out[:, :Lp]
                q_sigma = qz_out[:, Lp:]
                # reparameterized sample (padded lanes of z are exactly 0)
                z = eps_ref[...] * q_sigma + q_mu
                # q_x(cat([z, h])) as split dots, then masked log_softmax
                logits = (jnp.dot(z, qx_wz_ref[...],
                                  preferred_element_type=f32)
                          + jnp.dot(h_top, qx_wh_ref[...],
                                    preferred_element_type=f32)
                          + qx_b_ref[...])
                col = jax.lax.broadcasted_iota(jnp.int32, (Bp, Vp), 1)
                logits = jnp.where(col < V, logits, jnp.float32(-1e30))
                m = jnp.max(logits, axis=1, keepdims=True)
                log_q_x = (logits - m
                           - jnp.log(jnp.sum(jnp.exp(logits - m),
                                             axis=1, keepdims=True)))
                p_mu_ref[...] = p_mu
                p_sigma_ref[...] = p_sigma
                q_mu_ref[...] = q_mu
                q_sigma_ref[...] = q_sigma
                q_x_ref[...] = log_q_x
                # layer-0 gates gain the z contribution only on this step
                in_g0 = in_g0 + jnp.dot(z, w0z_ref[...],
                                        preferred_element_type=f32)

            h_top, h_list, c_list = lstm_step(in_g0, h_list, c_list)

            if i > z_step:
                # defer det_x: stash h (sublane-aligned static slice)
                h_acc_ref[pl.ds((i - z_step - 1) * Bp, Bp), :] = h_top

        # deferred det_x: one matmul + one lane-dense unmasked store
        det_ref[...] = (jnp.dot(h_acc_ref[...], detx_w_ref[...],
                                preferred_element_type=f32)
                        + detx_b_ref[...])

    return kernel


# ----------------------------------------------------------------------------
# Wrapper (glue: embedding lookup, weight split/transpose/pad/fuse, packing)
# ----------------------------------------------------------------------------
def vrnn_forward_pallas(features, captions, lengths, params, eps, z_step):
    f32 = jnp.float32
    B, E = features.shape
    T = int(max(lengths))
    H = params["lstm"][0]["w_hh"].shape[1]
    L = params["prior_w"].shape[0] // 2
    V = params["q_x_w"].shape[0]
    num_layers = len(params["lstm"])
    T_det = T - z_step - 1
    assert T_det >= 1

    # padded dims: sublane-tile batch, 128-lane feature dims
    Bp = _round_up(max(B, 8), 8)
    Hp = _round_up(H, 128)
    Lp = _round_up(L, 128)
    Vp = _round_up(V, 128)

    # compact gate layout while all four gates fit one 128-lane vreg
    compact = (4 * H <= 128) and (H % 8 == 0)
    Hc = H if compact else Hp            # h/c width and h-weight row dim
    GAp = 128 if compact else 4 * Hp     # padded gate-array lane width

    if compact:
        gpad_cols = lambda w: _pad_cols(w, GAp)
        gpad_bias = lambda b: jnp.pad(b, (0, GAp - b.shape[0]))[None, :]
    else:
        gpad_cols = lambda w: _gate_pad_cols(w, H, Hp)
        gpad_bias = lambda b: _gate_pad_bias(b, H, Hp)

    # glue: embedding lookup, time-major, batch-padded, features prepended as
    # row-block 0 so the one tall projection also covers the initial step.
    emb = params["embed"][captions].astype(f32)             # [B, T, E]
    emb_tm = jnp.transpose(emb, (1, 0, 2))                   # [T, B, E]
    emb_tm = jnp.pad(emb_tm, ((0, 0), (0, Bp - B), (0, 0)))
    feat_p = jnp.pad(features.astype(f32), ((0, Bp - B), (0, 0)))[None]
    x_all = jnp.concatenate([feat_p, emb_tm], axis=0).reshape((T + 1) * Bp, E)
    eps_p = jnp.pad(eps.astype(f32), ((0, Bp - B), (0, Lp - L)))

    # LSTM weights: transpose, split layer-0 into emb/z parts, fuse layers>=1.
    l0 = params["lstm"][0]
    w0t = l0["w_ih"].T.astype(f32)                           # [E+L, 4H]
    w0e = gpad_cols(w0t[:E])                                 # [E, GAp]
    w0z = _pad_rows(gpad_cols(w0t[E:]), Lp)                  # [Lp, GAp]
    w0hh = _pad_rows(gpad_cols(l0["w_hh"].T.astype(f32)), Hc)   # [Hc, GAp]
    b0 = gpad_bias((l0["b_ih"] + l0["b_hh"]).astype(f32))    # [1, GAp]
    lstm_inputs = [w0e, w0z, w0hh, b0]
    for l in range(1, num_layers):
        layer = params["lstm"][l]
        wih = _pad_rows(gpad_cols(layer["w_ih"].T.astype(f32)), Hc)
        whh = _pad_rows(gpad_cols(layer["w_hh"].T.astype(f32)), Hc)
        lstm_inputs.append(jnp.concatenate([wih, whh], axis=0))   # [2*Hc, GAp]
        lstm_inputs.append(
            gpad_bias((layer["b_ih"] + layer["b_hh"]).astype(f32)))

    prior_w = _pad_rows(_musig_pad_cols(params["prior_w"].T.astype(f32), L, Lp),
                        Hc)
    prior_b = _musig_pad_bias(params["prior_b"].astype(f32), L, Lp)
    qzt = params["q_z_w"].T.astype(f32)                      # [E+H, 2L]
    qz_we = _musig_pad_cols(qzt[:E], L, Lp)                  # [E, 2Lp]
    qz_wh = _pad_rows(_musig_pad_cols(qzt[E:], L, Lp), Hc)   # [Hc, 2Lp]
    qz_b = _musig_pad_bias(params["q_z_b"].astype(f32), L, Lp)
    qxt = params["q_x_w"].T.astype(f32)                      # [L+H, V]
    qx_wz = _pad_to(qxt[:L], (Lp, Vp))
    qx_wh = _pad_to(qxt[L:], (Hc, Vp))
    qx_b = _pad_to(params["q_x_b"].astype(f32), (Vp,))[None, :]
    detx_w = _pad_to(params["det_x_w"].T.astype(f32), (Hc, Vp))
    detx_b = _pad_to(params["det_x_b"].astype(f32), (Vp,))[None, :]

    inputs = [x_all, eps_p] + lstm_inputs + [
        prior_w, prior_b, qz_we, qz_wh, qz_b,
        qx_wz, qx_wh, qx_b, detx_w, detx_b]

    out_shapes = (
        jax.ShapeDtypeStruct((Bp, Lp), f32),            # p_mu
        jax.ShapeDtypeStruct((Bp, Lp), f32),            # p_sigma
        jax.ShapeDtypeStruct((Bp, Lp), f32),            # q_mu
        jax.ShapeDtypeStruct((Bp, Lp), f32),            # q_sigma
        jax.ShapeDtypeStruct((Bp, Vp), f32),            # q_x (log-softmax)
        jax.ShapeDtypeStruct((T_det * Bp, Vp), f32),    # det_xs, (t,b)-major
    )
    scratch_shapes = [
        pltpu.VMEM(((T + 1) * Bp, GAp), f32),   # xproj (layer-0 input gates)
        pltpu.VMEM((T_det * Bp, Hc), f32),      # h accumulator for det_x
    ]

    # tight computed VMEM bound (2x padded footprint, 8 MiB floor, 48 MiB cap)
    all_shapes = ([tuple(a.shape) for a in inputs]
                  + [tuple(s.shape) for s in out_shapes]
                  + [((T + 1) * Bp, GAp), (T_det * Bp, Hc)])
    footprint = sum(_padded_vmem_bytes(s) for s in all_shapes)
    vmem_limit = int(min(48 * 2**20, max(8 * 2**20, 2 * footprint)))

    kernel = make_vrnn_kernel(num_layers, T, z_step, Bp, E, H, Hp, Lp, Vp, V,
                              T_det, compact, GAp)
    vmem_spec = pl.BlockSpec(memory_space=pltpu.MemorySpace.VMEM)

    outs = pl.pallas_call(
        kernel,
        out_shape=out_shapes,
        in_specs=[vmem_spec] * len(inputs),
        out_specs=tuple(vmem_spec for _ in out_shapes),
        scratch_shapes=scratch_shapes,
        compiler_params=pltpu.CompilerParams(vmem_limit_bytes=vmem_limit),
    )(*inputs)

    p_mu_p, p_sigma_p, q_mu_p, q_sigma_p, q_x_p, det_p = outs

    # slice valid regions back out of the padded slabs
    p_mu = p_mu_p[:B, :L]
    p_sigma = p_sigma_p[:B, :L]
    q_mu = q_mu_p[:B, :L]
    q_sigma = q_sigma_p[:B, :L]
    q_x = q_x_p[:B, :V]
    det_full = det_p.reshape(T_det, Bp, Vp)[:, :B, :V]      # [T_det, B, V]

    # glue: emulate pack_padded_sequence(...)[0] (lengths sorted descending)
    det_lengths = [l - z_step - 1 for l in lengths]
    rows = []
    for t in range(max(det_lengths)):
        for b in range(B):
            if det_lengths[b] > t:
                rows.append((t, b))
    t_idx = jnp.array([r[0] for r in rows], dtype=jnp.int32)
    b_idx = jnp.array([r[1] for r in rows], dtype=jnp.int32)
    det_packed = det_full[t_idx, b_idx]                     # [sum(det_len), V]

    return (p_mu, p_sigma), (q_mu, q_sigma), q_x, det_packed


# ----------------------------------------------------------------------------
# Pure-JAX reference (same math, no Pallas) — correctness check
# ----------------------------------------------------------------------------
def vrnn_forward_ref(features, captions, lengths, params, eps, z_step):
    B, E = features.shape
    T = int(max(lengths))
    H = params["lstm"][0]["w_hh"].shape[1]
    L = params["prior_w"].shape[0] // 2
    num_layers = len(params["lstm"])

    emb = params["embed"][captions]

    def lstm_step(x, h_list, c_list):
        new_h, new_c = [], []
        inp = x
        for layer in range(num_layers):
            p = params["lstm"][layer]
            gates = inp @ p["w_ih"].T + h_list[layer] @ p["w_hh"].T \
                + p["b_ih"] + p["b_hh"]
            i_g = jax.nn.sigmoid(gates[:, 0 * H:1 * H])
            f_g = jax.nn.sigmoid(gates[:, 1 * H:2 * H])
            g_g = jnp.tanh(gates[:, 2 * H:3 * H])
            o_g = jax.nn.sigmoid(gates[:, 3 * H:4 * H])
            c = f_g * c_list[layer] + i_g * g_g
            h = o_g * jnp.tanh(c)
            new_h.append(h); new_c.append(c)
            inp = h
        return inp, new_h, new_c

    h_list = [jnp.zeros((B, H))] * num_layers
    c_list = [jnp.zeros((B, H))] * num_layers
    z_pad = jnp.zeros((B, L))
    h, h_list, c_list = lstm_step(jnp.concatenate([features, z_pad], 1),
                                  h_list, c_list)

    dets = []
    for i in range(T):
        emb_i = emb[:, i]
        if i == z_step:
            prior_out = h @ params["prior_w"].T + params["prior_b"]
            p_mu, p_sigma = prior_out[:, :L], prior_out[:, L:]
            qz_out = jnp.concatenate([emb_i, h], 1) @ params["q_z_w"].T \
                + params["q_z_b"]
            q_mu, q_sigma = qz_out[:, :L], qz_out[:, L:]
            z = eps * q_sigma + q_mu
            logits = jnp.concatenate([z, h], 1) @ params["q_x_w"].T \
                + params["q_x_b"]
            q_x = jax.nn.log_softmax(logits, axis=1)
            x_t = jnp.concatenate([emb_i, z], 1)
        else:
            x_t = jnp.concatenate([emb_i, z_pad], 1)
        h, h_list, c_list = lstm_step(x_t, h_list, c_list)
        if i > z_step:
            dets.append(h @ params["det_x_w"].T + params["det_x_b"])

    det_full = jnp.stack(dets, axis=0)               # [T_det, B, V]
    det_lengths = [l - z_step - 1 for l in lengths]
    rows = []
    for t in range(max(det_lengths)):
        for b in range(B):
            if det_lengths[b] > t:
                rows.append(det_full[t, b])
    det_packed = jnp.stack(rows, axis=0)
    return (p_mu, p_sigma), (q_mu, q_sigma), q_x, det_packed


# ----------------------------------------------------------------------------
# Deterministic parameter construction (matches VRNN.__init__ / init_weights)
# ----------------------------------------------------------------------------
def build_params(key, embed_size, hidden_size, vocab_size, latent_size,
                 num_layers):
    keys = jax.random.split(key, 16)
    k = iter(keys)

    def uni(rng, shape, a):
        return jax.random.uniform(rng, shape, jnp.float32, -a, a)

    lstm_in = embed_size + latent_size
    stdv = 1.0 / np.sqrt(hidden_size)
    lstm_layers = []
    for layer in range(num_layers):
        in_dim = lstm_in if layer == 0 else hidden_size
        lstm_layers.append({
            "w_ih": uni(next(k), (4 * hidden_size, in_dim), stdv),
            "w_hh": uni(next(k), (4 * hidden_size, hidden_size), stdv),
            "b_ih": uni(next(k), (4 * hidden_size,), stdv),
            "b_hh": uni(next(k), (4 * hidden_size,), stdv),
        })

    params = {
        "embed": uni(next(k), (vocab_size, embed_size), 0.1),
        "lstm": lstm_layers,
        "q_z_w": uni(next(k), (2 * latent_size, embed_size + hidden_size), 0.1),
        "q_z_b": jnp.zeros((2 * latent_size,), jnp.float32),
        "prior_w": uni(next(k), (2 * latent_size, hidden_size), 0.1),
        "prior_b": jnp.zeros((2 * latent_size,), jnp.float32),
        "q_x_w": uni(next(k), (vocab_size, latent_size + hidden_size), 0.1),
        "q_x_b": jnp.zeros((vocab_size,), jnp.float32),
        "det_x_w": uni(next(k), (vocab_size, hidden_size), 0.1),
        "det_x_b": jnp.zeros((vocab_size,), jnp.float32),
    }
    return params


if __name__ == "__main__":
    # small, forward-consistent shapes
    embed_size, hidden_size, vocab_size, latent_size, num_layers = 16, 32, 24, 8, 2
    B, T = 2, 8
    lengths = [8, 6]          # sorted descending (pack_padded_sequence convention)
    z_step = 2                # integer z_step branch of forward()

    key = jax.random.PRNGKey(0)
    k_par, k_feat, k_cap, k_eps = jax.random.split(key, 4)

    params = build_params(k_par, embed_size, hidden_size, vocab_size,
                          latent_size, num_layers)
    features = jax.random.normal(k_feat, (B, embed_size), jnp.float32)
    captions = jax.random.randint(k_cap, (B, T), 0, vocab_size, jnp.int32)
    eps = jax.random.normal(k_eps, (B, latent_size), jnp.float32)

    out = vrnn_forward_pallas(features, captions, lengths, params, eps, z_step)
    out = jax.block_until_ready(out)
    (p_mu, p_sigma), (q_mu, q_sigma), q_x, det_xs = out

    ref = vrnn_forward_ref(features, captions, lengths, params, eps, z_step)
    (rp_mu, rp_sigma), (rq_mu, rq_sigma), rq_x, rdet_xs = ref

    for a, b in [(p_mu, rp_mu), (p_sigma, rp_sigma), (q_mu, rq_mu),
                 (q_sigma, rq_sigma), (q_x, rq_x), (det_xs, rdet_xs)]:
        np.testing.assert_allclose(np.asarray(a), np.asarray(b),
                                   rtol=2e-4, atol=2e-4)

    print("KERNEL_OK")
</pallas_src>

<mosaic_0001>
module attributes {stable_mosaic.version = 11 : i64} {
  func.func @kernel(%arg0: memref<72x16xf32, #tpu.memory_space<vmem>>, %arg1: memref<8x128xf32, #tpu.memory_space<vmem>>, %arg2: memref<16x128xf32, #tpu.memory_space<vmem>>, %arg3: memref<128x128xf32, #tpu.memory_space<vmem>>, %arg4: memref<32x128xf32, #tpu.memory_space<vmem>>, %arg5: memref<1x128xf32, #tpu.memory_space<vmem>>, %arg6: memref<64x128xf32, #tpu.memory_space<vmem>>, %arg7: memref<1x128xf32, #tpu.memory_space<vmem>>, %arg8: memref<32x256xf32, #tpu.memory_space<vmem>>, %arg9: memref<1x256xf32, #tpu.memory_space<vmem>>, %arg10: memref<16x256xf32, #tpu.memory_space<vmem>>, %arg11: memref<32x256xf32, #tpu.memory_space<vmem>>, %arg12: memref<1x256xf32, #tpu.memory_space<vmem>>, %arg13: memref<128x128xf32, #tpu.memory_space<vmem>>, %arg14: memref<32x128xf32, #tpu.memory_space<vmem>>, %arg15: memref<1x128xf32, #tpu.memory_space<vmem>>, %arg16: memref<32x128xf32, #tpu.memory_space<vmem>>, %arg17: memref<1x128xf32, #tpu.memory_space<vmem>>, %arg18: memref<8x128xf32, #tpu.memory_space<vmem>>, %arg19: memref<8x128xf32, #tpu.memory_space<vmem>>, %arg20: memref<8x128xf32, #tpu.memory_space<vmem>>, %arg21: memref<8x128xf32, #tpu.memory_space<vmem>>, %arg22: memref<8x128xf32, #tpu.memory_space<vmem>>, %arg23: memref<40x128xf32, #tpu.memory_space<vmem>>, %arg24: memref<72x128xf32, #tpu.memory_space<vmem>>, %arg25: memref<40x32xf32, #tpu.memory_space<vmem>>) attributes {dimension_semantics = [], scalar_prefetch = 0 : i64, scratch_operands = 2 : i64, tpu.core_type = #tpu.core_type<tc>} {
    %c0 = arith.constant 0 : index
    %c0_0 = arith.constant 0 : index
    %0 = vector.load %arg7[%c0, %c0_0] : memref<1x128xf32, #tpu.memory_space<vmem>>, vector<1x128xf32>
    %1 = vector.shape_cast %0 : vector<1x128xf32> to vector<1x128xf32>
    %2 = vector.broadcast %1 : vector<1x128xf32> to vector<8x128xf32>
    %3 = tpu.iota {dimensions = array<i32: 1>} : vector<8x128xi32>
    %c64_i32 = arith.constant 64 : i32
    %4 = vector.broadcast %c64_i32 : i32 to vector<8x128xi32>
    %5 = arith.cmpi sge, %3, %4 : vector<8x128xi32>
    %c96_i32 = arith.constant 96 : i32
    %6 = vector.broadcast %c96_i32 : i32 to vector<8x128xi32>
    %7 = arith.cmpi slt, %3, %6 : vector<8x128xi32>
    %8 = arith.andi %5, %7 : vector<8x128xi1>
    %c0_1 = arith.constant 0 : index
    %c0_2 = arith.constant 0 : index
    %9 = vector.load %arg0[%c0_1, %c0_2] : memref<72x16xf32, #tpu.memory_space<vmem>>, vector<72x16xf32>
    %c0_3 = arith.constant 0 : index
    %c0_4 = arith.constant 0 : index
    %10 = vector.load %arg2[%c0_3, %c0_4] : memref<16x128xf32, #tpu.memory_space<vmem>>, vector<16x128xf32>
    %cst = arith.constant dense<0.000000e+00> : vector<72x128xf32>
    %11 = tpu.matmul %9, %10, %cst {dimension_numbers = #tpu.dot_dimension_numbers<[1], [0], [0], [1], [0, 0, 1, 1], [], []>} : vector<72x16xf32>, vector<16x128xf32>, vector<72x128xf32> -> vector<72x128xf32>
    %c0_5 = arith.constant 0 : index
    %c0_6 = arith.constant 0 : index
    %12 = vector.load %arg5[%c0_5, %c0_6] : memref<1x128xf32, #tpu.memory_space<vmem>>, vector<1x128xf32>
    %13 = vector.broadcast %12 : vector<1x128xf32> to vector<72x128xf32>
    %14 = arith.addf %11, %13 : vector<72x128xf32>
    %c0_7 = arith.constant 0 : index
    %c0_8 = arith.constant 0 : index
    %15 = vector.load %arg24[%c0_7, %c0_8] : memref<72x128xf32, #tpu.memory_space<vmem>>, vector<72x128xf32>
    tpu.vector_store %arg24[%c0_7, %c0_8], %14 {strides = array<i32>} : memref<72x128xf32, #tpu.memory_space<vmem>>, vector<72x128xf32>,
    %cst_9 = arith.constant 0.000000e+00 : f32
    %16 = vector.broadcast %cst_9 : f32 to vector<8x32xf32>
    %c0_10 = arith.constant 0 : index
    %c0_11 = arith.constant 0 : index
    %17 = vector.load %arg24[%c0_10, %c0_11] : memref<72x128xf32, #tpu.memory_space<vmem>>, vector<8x128xf32>
    %c0_12 = arith.constant 0 : index
    %c0_13 = arith.constant 0 : index
    %18 = vector.load %arg4[%c0_12, %c0_13] : memref<32x128xf32, #tpu.memory_space<vmem>>, vector<32x128xf32>
    %cst_14 = arith.constant dense<0.000000e+00> : vector<8x128xf32>
    %19 = tpu.matmul %16, %18, %cst_14 {dimension_numbers = #tpu.dot_dimension_numbers<[1], [0], [0], [1], [0, 0, 1, 1], [], []>} : vector<8x32xf32>, vector<32x128xf32>, vector<8x128xf32> -> vector<8x128xf32>
    %20 = arith.addf %17, %19 : vector<8x128xf32>
    %21 = math.tanh %20 : vector<8x128xf32>
    %22 = arith.negf %20 : vector<8x128xf32>
    %23 = math.exp %22 : vector<8x128xf32>
    %cst_15 = arith.constant 1.000000e+00 : f32
    %24 = vector.broadcast %cst_15 : f32 to vector<8x128xf32>
    %25 = arith.addf %24, %23 : vector<8x128xf32>
    %26 = arith.divf %24, %25 : vector<8x128xf32>
    %27 = arith.select %8, %21, %26 : vector<8x128xi1>, vector<8x128xf32>
    %28 = vector.extract_strided_slice %27 {offsets = [0, 0], sizes = [8, 32], strides = [1, 1]} : vector<8x128xf32> to vector<8x32xf32>
    %29 = vector.extract_strided_slice %27 {offsets = [0, 32], sizes = [8, 32], strides = [1, 1]} : vector<8x128xf32> to vector<8x32xf32>
    %30 = vector.extract_strided_slice %27 {offsets = [0, 64], sizes = [8, 32], strides = [1, 1]} : vector<8x128xf32> to vector<8x32xf32>
    %31 = vector.extract_strided_slice %27 {offsets = [0, 96], sizes = [8, 32], strides = [1, 1]} : vector<8x128xf32> to vector<8x32xf32>
    %32 = arith.mulf %29, %16 : vector<8x32xf32>
    %33 = arith.mulf %28, %30 : vector<8x32xf32>
    %34 = arith.addf %32, %33 : vector<8x32xf32>
    %35 = math.tanh %34 : vector<8x32xf32>
    %36 = arith.mulf %31, %35 : vector<8x32xf32>
    %37 = tpu.concatenate %36, %16 in 1 : vector<8x32xf32>, vector<8x32xf32> -> vector<8x64xf32>
    %c0_16 = arith.constant 0 : index
    %c0_17 = arith.constant 0 : index
    %38 = vector.load %arg6[%c0_16, %c0_17] : memref<64x128xf32, #tpu.memory_space<vmem>>, vector<64x128xf32>
    %cst_18 = arith.constant dense<0.000000e+00> : vector<8x128xf32>
    %39 = tpu.matmul %37, %38, %cst_18 {dimension_numbers = #tpu.dot_dimension_numbers<[1], [0], [0], [1], [0, 0, 1, 1], [], []>} : vector<8x64xf32>, vector<64x128xf32>, vector<8x128xf32> -> vector<8x128xf32>
    %40 = arith.addf %39, %2 : vector<8x128xf32>
    %41 = math.tanh %40 : vector<8x128xf32>
    %42 = arith.negf %40 : vector<8x128xf32>
    %43 = math.exp %42 : vector<8x128xf32>
    %cst_19 = arith.constant 1.000000e+00 : f32
    %44 = vector.broadcast %cst_19 : f32 to vector<8x128xf32>
    %45 = arith.addf %44, %43 : vector<8x128xf32>
    %46 = arith.divf %44, %45 : vector<8x128xf32>
    %47 = arith.select %8, %41, %46 : vector<8x128xi1>, vector<8x128xf32>
    %48 = vector.extract_strided_slice %47 {offsets = [0, 0], sizes = [8, 32], strides = [1, 1]} : vector<8x128xf32> to vector<8x32xf32>
    %49 = vector.extract_strided_slice %47 {offsets = [0, 32], sizes = [8, 32], strides = [1, 1]} : vector<8x128xf32> to vector<8x32xf32>
    %50 = vector.extract_strided_slice %47 {offsets = [0, 64], sizes = [8, 32], strides = [1, 1]} : vector<8x128xf32> to vector<8x32xf32>
    %51 = vector.extract_strided_slice %47 {offsets = [0, 96], sizes = [8, 32], strides = [1, 1]} : vector<8x128xf32> to vector<8x32xf32>
    %52 = arith.mulf %49, %16 : vector<8x32xf32>
    %53 = arith.mulf %48, %50 : vector<8x32xf32>
    %54 = arith.addf %52, %53 : vector<8x32xf32>
    %55 = math.tanh %54 : vector<8x32xf32>
    %56 = arith.mulf %51, %55 : vector<8x32xf32>
    %c8 = arith.constant 8 : index
    %c0_20 = arith.constant 0 : index
    %57 = vector.load %arg24[%c8, %c0_20] : memref<72x128xf32, #tpu.memory_space<vmem>>, vector<8x128xf32>
    %c0_21 = arith.constant 0 : index
    %c0_22 = arith.constant 0 : index
    %58 = vector.load %arg4[%c0_21, %c0_22] : memref<32x128xf32, #tpu.memory_space<vmem>>, vector<32x128xf32>
    %cst_23 = arith.constant dense<0.000000e+00> : vector<8x128xf32>
    %59 = tpu.matmul %36, %58, %cst_23 {dimension_numbers = #tpu.dot_dimension_numbers<[1], [0], [0], [1], [0, 0, 1, 1], [], []>} : vector<8x32xf32>, vector<32x128xf32>, vector<8x128xf32> -> vector<8x128xf32>
    %60 = arith.addf %57, %59 : vector<8x128xf32>
    %61 = math.tanh %60 : vector<8x128xf32>
    %62 = arith.negf %60 : vector<8x128xf32>
    %63 = math.exp %62 : vector<8x128xf32>
    %cst_24 = arith.constant 1.000000e+00 : f32
    %64 = vector.broadcast %cst_24 : f32 to vector<8x128xf32>
    %65 = arith.addf %64, %63 : vector<8x128xf32>
    %66 = arith.divf %64, %65 : vector<8x128xf32>
    %67 = arith.select %8, %61, %66 : vector<8x128xi1>, vector<8x128xf32>
    %68 = vector.extract_strided_slice %67 {offsets = [0, 0], sizes = [8, 32], strides = [1, 1]} : vector<8x128xf32> to vector<8x32xf32>
    %69 = vector.extract_strided_slice %67 {offsets = [0, 32], sizes = [8, 32], strides = [1, 1]} : vector<8x128xf32> to vector<8x32xf32>
    %70 = vector.extract_strided_slice %67 {offsets = [0, 64], sizes = [8, 32], strides = [1, 1]} : vector<8x128xf32> to vector<8x32xf32>
    %71 = vector.extract_strided_slice %67 {offsets = [0, 96], sizes = [8, 32], strides = [1, 1]} : vector<8x128xf32> to vector<8x32xf32>
    %72 = arith.mulf %69, %34 : vector<8x32xf32>
    %73 = arith.mulf %68, %70 : vector<8x32xf32>
    %74 = arith.addf %72, %73 : vector<8x32xf32>
    %75 = math.tanh %74 : vector<8x32xf32>
    %76 = arith.mulf %71, %75 : vector<8x32xf32>
    %77 = tpu.concatenate %76, %56 in 1 : vector<8x32xf32>, vector<8x32xf32> -> vector<8x64xf32>
    %c0_25 = arith.constant 0 : index
    %c0_26 = arith.constant 0 : index
    %78 = vector.load %arg6[%c0_25, %c0_26] : memref<64x128xf32, #tpu.memory_space<vmem>>, vector<64x128xf32>
    %cst_27 = arith.constant dense<0.000000e+00> : vector<8x128xf32>
    %79 = tpu.matmul %77, %78, %cst_27 {dimension_numbers = #tpu.dot_dimension_numbers<[1], [0], [0], [1], [0, 0, 1, 1], [], []>} : vector<8x64xf32>, vector<64x128xf32>, vector<8x128xf32> -> vector<8x128xf32>
    %80 = arith.addf %79, %2 : vector<8x128xf32>
    %81 = math.tanh %80 : vector<8x128xf32>
    %82 = arith.negf %80 : vector<8x128xf32>
    %83 = math.exp %82 : vector<8x128xf32>
    %cst_28 = arith.constant 1.000000e+00 : f32
    %84 = vector.broadcast %cst_28 : f32 to vector<8x128xf32>
    %85 = arith.addf %84, %83 : vector<8x128xf32>
    %86 = arith.divf %84, %85 : vector<8x128xf32>
    %87 = arith.select %8, %81, %86 : vector<8x128xi1>, vector<8x128xf32>
    %88 = vector.extract_strided_slice %87 {offsets = [0, 0], sizes = [8, 32], strides = [1, 1]} : vector<8x128xf32> to vector<8x32xf32>
    %89 = vector.extract_strided_slice %87 {offsets = [0, 32], sizes = [8, 32], strides = [1, 1]} : vector<8x128xf32> to vector<8x32xf32>
    %90 = vector.extract_strided_slice %87 {offsets = [0, 64], sizes = [8, 32], strides = [1, 1]} : vector<8x128xf32> to vector<8x32xf32>
    %91 = vector.extract_strided_slice %87 {offsets = [0, 96], sizes = [8, 32], strides = [1, 1]} : vector<8x128xf32> to vector<8x32xf32>
    %92 = arith.mulf %89, %54 : vector<8x32xf32>
    %93 = arith.mulf %88, %90 : vector<8x32xf32>
    %94 = arith.addf %92, %93 : vector<8x32xf32>
    %95 = math.tanh %94 : vector<8x32xf32>
    %96 = arith.mulf %91, %95 : vector<8x32xf32>
    %c16 = arith.constant 16 : index
    %c0_29 = arith.constant 0 : index
    %97 = vector.load %arg24[%c16, %c0_29] : memref<72x128xf32, #tpu.memory_space<vmem>>, vector<8x128xf32>
    %c0_30 = arith.constant 0 : index
    %c0_31 = arith.constant 0 : index
    %98 = vector.load %arg4[%c0_30, %c0_31] : memref<32x128xf32, #tpu.memory_space<vmem>>, vector<32x128xf32>
    %cst_32 = arith.constant dense<0.000000e+00> : vector<8x128xf32>
    %99 = tpu.matmul %76, %98, %cst_32 {dimension_numbers = #tpu.dot_dimension_numbers<[1], [0], [0], [1], [0, 0, 1, 1], [], []>} : vector<8x32xf32>, vector<32x128xf32>, vector<8x128xf32> -> vector<8x128xf32>
    %100 = arith.addf %97, %99 : vector<8x128xf32>
    %101 = math.tanh %100 : vector<8x128xf32>
    %102 = arith.negf %100 : vector<8x128xf32>
    %103 = math.exp %102 : vector<8x128xf32>
    %cst_33 = arith.constant 1.000000e+00 : f32
    %104 = vector.broadcast %cst_33 : f32 to vector<8x128xf32>
    %105 = arith.addf %104, %103 : vector<8x128xf32>
    %106 = arith.divf %104, %105 : vector<8x128xf32>
    %107 = arith.select %8, %101, %106 : vector<8x128xi1>, vector<8x128xf32>
    %108 = vector.extract_strided_slice %107 {offsets = [0, 0], sizes = [8, 32], strides = [1, 1]} : vector<8x128xf32> to vector<8x32xf32>
    %109 = vector.extract_strided_slice %107 {offsets = [0, 32], sizes = [8, 32], strides = [1, 1]} : vector<8x128xf32> to vector<8x32xf32>
    %110 = vector.extract_strided_slice %107 {offsets = [0, 64], sizes = [8, 32], strides = [1, 1]} : vector<8x128xf32> to vector<8x32xf32>
    %111 = vector.extract_strided_slice %107 {offsets = [0, 96], sizes = [8, 32], strides = [1, 1]} : vector<8x128xf32> to vector<8x32xf32>
    %112 = arith.mulf %109, %74 : vector<8x32xf32>
    %113 = arith.mulf %108, %110 : vector<8x32xf32>
    %114 = arith.addf %112, %113 : vector<8x32xf32>
    %115 = math.tanh %114 : vector<8x32xf32>
    %116 = arith.mulf %111, %115 : vector<8x32xf32>
    %117 = tpu.concatenate %116, %96 in 1 : vector<8x32xf32>, vector<8x32xf32> -> vector<8x64xf32>
    %c0_34 = arith.constant 0 : index
    %c0_35 = arith.constant 0 : index
    %118 = vector.load %arg6[%c0_34, %c0_35] : memref<64x128xf32, #tpu.memory_space<vmem>>, vector<64x128xf32>
    %cst_36 = arith.constant dense<0.000000e+00> : vector<8x128xf32>
    %119 = tpu.matmul %117, %118, %cst_36 {dimension_numbers = #tpu.dot_dimension_numbers<[1], [0], [0], [1], [0, 0, 1, 1], [], []>} : vector<8x64xf32>, vector<64x128xf32>, vector<8x128xf32> -> vector<8x128xf32>
    %120 = arith.addf %119, %2 : vector<8x128xf32>
    %121 = math.tanh %120 : vector<8x128xf32>
    %122 = arith.negf %120 : vector<8x128xf32>
    %123 = math.exp %122 : vector<8x128xf32>
    %cst_37 = arith.constant 1.000000e+00 : f32
    %124 = vector.broadcast %cst_37 : f32 to vector<8x128xf32>
    %125 = arith.addf %124, %123 : vector<8x128xf32>
    %126 = arith.divf %124, %125 : vector<8x128xf32>
    %127 = arith.select %8, %121, %126 : vector<8x128xi1>, vector<8x128xf32>
    %128 = vector.extract_strided_slice %127 {offsets = [0, 0], sizes = [8, 32], strides = [1, 1]} : vector<8x128xf32> to vector<8x32xf32>
    %129 = vector.extract_strided_slice %127 {offsets = [0, 32], sizes = [8, 32], strides = [1, 1]} : vector<8x128xf32> to vector<8x32xf32>
    %130 = vector.extract_strided_slice %127 {offsets = [0, 64], sizes = [8, 32], strides = [1, 1]} : vector<8x128xf32> to vector<8x32xf32>
    %131 = vector.extract_strided_slice %127 {offsets = [0, 96], sizes = [8, 32], strides = [1, 1]} : vector<8x128xf32> to vector<8x32xf32>
    %132 = arith.mulf %129, %94 : vector<8x32xf32>
    %133 = arith.mulf %128, %130 : vector<8x32xf32>
    %134 = arith.addf %132, %133 : vector<8x32xf32>
    %135 = math.tanh %134 : vector<8x32xf32>
    %136 = arith.mulf %131, %135 : vector<8x32xf32>
    %c24 = arith.constant 24 : index
    %c0_38 = arith.constant 0 : index
    %137 = vector.load %arg24[%c24, %c0_38] : memref<72x128xf32, #tpu.memory_space<vmem>>, vector<8x128xf32>
    %c0_39 = arith.constant 0 : index
    %c0_40 = arith.constant 0 : index
    %138 = vector.load %arg8[%c0_39, %c0_40] : memref<32x256xf32, #tpu.memory_space<vmem>>, vector<32x256xf32>
    %cst_41 = arith.constant dense<0.000000e+00> : vector<8x256xf32>
    %139 = tpu.matmul %136, %138, %cst_41 {dimension_numbers = #tpu.dot_dimension_numbers<[1], [0], [0], [1], [0, 0, 1, 1], [], []>} : vector<8x32xf32>, vector<32x256xf32>, vector<8x256xf32> -> vector<8x256xf32>
    %c0_42 = arith.constant 0 : index
    %c0_43 = arith.constant 0 : index
    %140 = vector.load %arg9[%c0_42, %c0_43] : memref<1x256xf32, #tpu.memory_space<vmem>>, vector<1x256xf32>
    %141 = vector.broadcast %140 : vector<1x256xf32> to vector<8x256xf32>
    %142 = arith.addf %139, %141 : vector<8x256xf32>
    %143 = vector.extract_strided_slice %142 {offsets = [0, 0], sizes = [8, 128], strides = [1, 1]} : vector<8x256xf32> to vector<8x128xf32>
    %144 = vector.extract_strided_slice %142 {offsets = [0, 128], sizes = [8, 128], strides = [1, 1]} : vector<8x256xf32> to vector<8x128xf32>
    %c24_44 = arith.constant 24 : index
    %c0_45 = arith.constant 0 : index
    %145 = vector.load %arg0[%c24_44, %c0_45] : memref<72x16xf32, #tpu.memory_space<vmem>>, vector<8x16xf32>
    %c0_46 = arith.constant 0 : index
    %c0_47 = arith.constant 0 : index
    %146 = vector.load %arg10[%c0_46, %c0_47] : memref<16x256xf32, #tpu.memory_space<vmem>>, vector<16x256xf32>
    %cst_48 = arith.constant dense<0.000000e+00> : vector<8x256xf32>
    %147 = tpu.matmul %145, %146, %cst_48 {dimension_numbers = #tpu.dot_dimension_numbers<[1], [0], [0], [1], [0, 0, 1, 1], [], []>} : vector<8x16xf32>, vector<16x256xf32>, vector<8x256xf32> -> vector<8x256xf32>
    %c0_49 = arith.constant 0 : index
    %c0_50 = arith.constant 0 : index
    %148 = vector.load %arg11[%c0_49, %c0_50] : memref<32x256xf32, #tpu.memory_space<vmem>>, vector<32x256xf32>
    %cst_51 = arith.constant dense<0.000000e+00> : vector<8x256xf32>
    %149 = tpu.matmul %136, %148, %cst_51 {dimension_numbers = #tpu.dot_dimension_numbers<[1], [0], [0], [1], [0, 0, 1, 1], [], []>} : vector<8x32xf32>, vector<32x256xf32>, vector<8x256xf32> -> vector<8x256xf32>
    %150 = arith.addf %147, %149 : vector<8x256xf32>
    %c0_52 = arith.constant 0 : index
    %c0_53 = arith.constant 0 : index
    %151 = vector.load %arg12[%c0_52, %c0_53] : memref<1x256xf32, #tpu.memory_space<vmem>>, vector<1x256xf32>
    %152 = vector.broadcast %151 : vector<1x256xf32> to vector<8x256xf32>
    %153 = arith.addf %150, %152 : vector<8x256xf32>
    %154 = vector.extract_strided_slice %153 {offsets = [0, 0], sizes = [8, 128], strides = [1, 1]} : vector<8x256xf32> to vector<8x128xf32>
    %155 = vector.extract_strided_slice %153 {offsets = [0, 128], sizes = [8, 128], strides = [1, 1]} : vector<8x256xf32> to vector<8x128xf32>
    %c0_54 = arith.constant 0 : index
    %c0_55 = arith.constant 0 : index
    %156 = vector.load %arg1[%c0_54, %c0_55] : memref<8x128xf32, #tpu.memory_space<vmem>>, vector<8x128xf32>
    %157 = arith.mulf %156, %155 : vector<8x128xf32>
    %158 = arith.addf %157, %154 : vector<8x128xf32>
    %c0_56 = arith.constant 0 : index
    %c0_57 = arith.constant 0 : index
    %159 = vector.load %arg13[%c0_56, %c0_57] : memref<128x128xf32, #tpu.memory_space<vmem>>, vector<128x128xf32>
    %cst_58 = arith.constant dense<0.000000e+00> : vector<8x128xf32>
    %160 = tpu.matmul %158, %159, %cst_58 {dimension_numbers = #tpu.dot_dimension_numbers<[1], [0], [0], [1], [0, 0, 1, 1], [], []>} : vector<8x128xf32>, vector<128x128xf32>, vector<8x128xf32> -> vector<8x128xf32>
    %c0_59 = arith.constant 0 : index
    %c0_60 = arith.constant 0 : index
    %161 = vector.load %arg14[%c0_59, %c0_60] : memref<32x128xf32, #tpu.memory_space<vmem>>, vector<32x128xf32>
    %cst_61 = arith.constant dense<0.000000e+00> : vector<8x128xf32>
    %162 = tpu.matmul %136, %161, %cst_61 {dimension_numbers = #tpu.dot_dimension_numbers<[1], [0], [0], [1], [0, 0, 1, 1], [], []>} : vector<8x32xf32>, vector<32x128xf32>, vector<8x128xf32> -> vector<8x128xf32>
    %163 = arith.addf %160, %162 : vector<8x128xf32>
    %c0_62 = arith.constant 0 : index
    %c0_63 = arith.constant 0 : index
    %164 = vector.load %arg15[%c0_62, %c0_63] : memref<1x128xf32, #tpu.memory_space<vmem>>, vector<1x128xf32>
    %165 = vector.broadcast %164 : vector<1x128xf32> to vector<8x128xf32>
    %166 = arith.addf %163, %165 : vector<8x128xf32>
    %167 = tpu.iota {dimensions = array<i32: 1>} : vector<8x128xi32>
    %c24_i32 = arith.constant 24 : i32
    %168 = vector.broadcast %c24_i32 : i32 to vector<8x128xi32>
    %169 = arith.cmpi slt, %167, %168 : vector<8x128xi32>
    %cst_64 = arith.constant -1.000000e+30 : f32
    %170 = vector.broadcast %cst_64 : f32 to vector<8x128xf32>
    %171 = arith.select %169, %166, %170 : vector<8x128xi1>, vector<8x128xf32>
    %cst_65 = arith.constant dense<0xFF800000> : vector<8xf32>
    %172 = vector.multi_reduction <maximumf>, %171, %cst_65 [1] : vector<8x128xf32> to vector<8xf32>
    %173 = vector.shape_cast %172 : vector<8xf32> to vector<8x1xf32>
    %174 = vector.broadcast %173 : vector<8x1xf32> to vector<8x128xf32>
    %175 = arith.subf %171, %174 : vector<8x128xf32>
    %176 = vector.broadcast %173 : vector<8x1xf32> to vector<8x128xf32>
    %177 = arith.subf %171, %176 : vector<8x128xf32>
    %178 = math.exp %177 : vector<8x128xf32>
    %cst_66 = arith.constant dense<0.000000e+00> : vector<8xf32>
    %179 = vector.multi_reduction <add>, %178, %cst_66 [1] : vector<8x128xf32> to vector<8xf32>
    %180 = vector.shape_cast %179 : vector<8xf32> to vector<8x1xf32>
    %181 = math.log %180 : vector<8x1xf32>
    %182 = vector.broadcast %181 : vector<8x1xf32> to vector<8x128xf32>
    %183 = arith.subf %175, %182 : vector<8x128xf32>
    %c0_67 = arith.constant 0 : index
    %c0_68 = arith.constant 0 : index
    %184 = vector.load %arg18[%c0_67, %c0_68] : memref<8x128xf32, #tpu.memory_space<vmem>>, vector<8x128xf32>
    tpu.vector_store %arg18[%c0_67, %c0_68], %143 {strides = array<i32>} : memref<8x128xf32, #tpu.memory_space<vmem>>, vector<8x128xf32>,
    %c0_69 = arith.constant 0 : index
    %c0_70 = arith.constant 0 : index
    %185 = vector.load %arg19[%c0_69, %c0_70] : memref<8x128xf32, #tpu.memory_space<vmem>>, vector<8x128xf32>
    tpu.vector_store %arg19[%c0_69, %c0_70], %144 {strides = array<i32>} : memref<8x128xf32, #tpu.memory_space<vmem>>, vector<8x128xf32>,
    %c0_71 = arith.constant 0 : index
    %c0_72 = arith.constant 0 : index
    %186 = vector.load %arg20[%c0_71, %c0_72] : memref<8x128xf32, #tpu.memory_space<vmem>>, vector<8x128xf32>
    tpu.vector_store %arg20[%c0_71, %c0_72], %154 {strides = array<i32>} : memref<8x128xf32, #tpu.memory_space<vmem>>, vector<8x128xf32>,
    %c0_73 = arith.constant 0 : index
    %c0_74 = arith.constant 0 : index
    %187 = vector.load %arg21[%c0_73, %c0_74] : memref<8x128xf32, #tpu.memory_space<vmem>>, vector<8x128xf32>
    tpu.vector_store %arg21[%c0_73, %c0_74], %155 {strides = array<i32>} : memref<8x128xf32, #tpu.memory_space<vmem>>, vector<8x128xf32>,
    %c0_75 = arith.constant 0 : index
    %c0_76 = arith.constant 0 : index
    %188 = vector.load %arg22[%c0_75, %c0_76] : memref<8x128xf32, #tpu.memory_space<vmem>>, vector<8x128xf32>
    tpu.vector_store %arg22[%c0_75, %c0_76], %183 {strides = array<i32>} : memref<8x128xf32, #tpu.memory_space<vmem>>, vector<8x128xf32>,
    %c0_77 = arith.constant 0 : index
    %c0_78 = arith.constant 0 : index
    %189 = vector.load %arg3[%c0_77, %c0_78] : memref<128x128xf32, #tpu.memory_space<vmem>>, vector<128x128xf32>
    %cst_79 = arith.constant dense<0.000000e+00> : vector<8x128xf32>
    %190 = tpu.matmul %158, %189, %cst_79 {dimension_numbers = #tpu.dot_dimension_numbers<[1], [0], [0], [1], [0, 0, 1, 1], [], []>} : vector<8x128xf32>, vector<128x128xf32>, vector<8x128xf32> -> vector<8x128xf32>
    %191 = arith.addf %137, %190 : vector<8x128xf32>
    %c0_80 = arith.constant 0 : index
    %c0_81 = arith.constant 0 : index
    %192 = vector.load %arg4[%c0_80, %c0_81] : memref<32x128xf32, #tpu.memory_space<vmem>>, vector<32x128xf32>
    %cst_82 = arith.constant dense<0.000000e+00> : vector<8x128xf32>
    %193 = tpu.matmul %116, %192, %cst_82 {dimension_numbers = #tpu.dot_dimension_numbers<[1], [0], [0], [1], [0, 0, 1, 1], [], []>} : vector<8x32xf32>, vector<32x128xf32>, vector<8x128xf32> -> vector<8x128xf32>
    %194 = arith.addf %191, %193 : vector<8x128xf32>
    %195 = math.tanh %194 : vector<8x128xf32>
    %196 = arith.negf %194 : vector<8x128xf32>
    %197 = math.exp %196 : vector<8x128xf32>
    %cst_83 = arith.constant 1.000000e+00 : f32
    %198 = vector.broadcast %cst_83 : f32 to vector<8x128xf32>
    %199 = arith.addf %198, %197 : vector<8x128xf32>
    %200 = arith.divf %198, %199 : vector<8x128xf32>
    %201 = arith.select %8, %195, %200 : vector<8x128xi1>, vector<8x128xf32>
    %202 = vector.extract_strided_slice %201 {offsets = [0, 0], sizes = [8, 32], strides = [1, 1]} : vector<8x128xf32> to vector<8x32xf32>
    %203 = vector.extract_strided_slice %201 {offsets = [0, 32], sizes = [8, 32], strides = [1, 1]} : vector<8x128xf32> to vector<8x32xf32>
    %204 = vector.extract_strided_slice %201 {offsets = [0, 64], sizes = [8, 32], strides = [1, 1]} : vector<8x128xf32> to vector<8x32xf32>
    %205 = vector.extract_strided_slice %201 {offsets = [0, 96], sizes = [8, 32], strides = [1, 1]} : vector<8x128xf32> to vector<8x32xf32>
    %206 = arith.mulf %203, %114 : vector<8x32xf32>
    %207 = arith.mulf %202, %204 : vector<8x32xf32>
    %208 = arith.addf %206, %207 : vector<8x32xf32>
    %209 = math.tanh %208 : vector<8x32xf32>
    %210 = arith.mulf %205, %209 : vector<8x32xf32>
    %211 = tpu.concatenate %210, %136 in 1 : vector<8x32xf32>, vector<8x32xf32> -> vector<8x64xf32>
    %c0_84 = arith.constant 0 : index
    %c0_85 = arith.constant 0 : index
    %212 = vector.load %arg6[%c0_84, %c0_85] : memref<64x128xf32, #tpu.memory_space<vmem>>, vector<64x128xf32>
    %cst_86 = arith.constant dense<0.000000e+00> : vector<8x128xf32>
    %213 = tpu.matmul %211, %212, %cst_86 {dimension_numbers = #tpu.dot_dimension_numbers<[1], [0], [0], [1], [0, 0, 1, 1], [], []>} : vector<8x64xf32>, vector<64x128xf32>, vector<8x128xf32> -> vector<8x128xf32>
    %214 = arith.addf %213, %2 : vector<8x128xf32>
    %215 = math.tanh %214 : vector<8x128xf32>
    %216 = arith.negf %214 : vector<8x128xf32>
    %217 = math.exp %216 : vector<8x128xf32>
    %cst_87 = arith.constant 1.000000e+00 : f32
    %218 = vector.broadcast %cst_87 : f32 to vector<8x128xf32>
    %219 = arith.addf %218, %217 : vector<8x128xf32>
    %220 = arith.divf %218, %219 : vector<8x128xf32>
    %221 = arith.select %8, %215, %220 : vector<8x128xi1>, vector<8x128xf32>
    %222 = vector.extract_strided_slice %221 {offsets = [0, 0], sizes = [8, 32], strides = [1, 1]} : vector<8x128xf32> to vector<8x32xf32>
    %223 = vector.extract_strided_slice %221 {offsets = [0, 32], sizes = [8, 32], strides = [1, 1]} : vector<8x128xf32> to vector<8x32xf32>
    %224 = vector.extract_strided_slice %221 {offsets = [0, 64], sizes = [8, 32], strides = [1, 1]} : vector<8x128xf32> to vector<8x32xf32>
    %225 = vector.extract_strided_slice %221 {offsets = [0, 96], sizes = [8, 32], strides = [1, 1]} : vector<8x128xf32> to vector<8x32xf32>
    %226 = arith.mulf %223, %134 : vector<8x32xf32>
    %227 = arith.mulf %222, %224 : vector<8x32xf32>
    %228 = arith.addf %226, %227 : vector<8x32xf32>
    %229 = math.tanh %228 : vector<8x32xf32>
    %230 = arith.mulf %225, %229 : vector<8x32xf32>
    %c32 = arith.constant 32 : index
    %c0_88 = arith.constant 0 : index
    %231 = vector.load %arg24[%c32, %c0_88] : memref<72x128xf32, #tpu.memory_space<vmem>>, vector<8x128xf32>
    %c0_89 = arith.constant 0 : index
    %c0_90 = arith.constant 0 : index
    %232 = vector.load %arg4[%c0_89, %c0_90] : memref<32x128xf32, #tpu.memory_space<vmem>>, vector<32x128xf32>
    %cst_91 = arith.constant dense<0.000000e+00> : vector<8x128xf32>
    %233 = tpu.matmul %210, %232, %cst_91 {dimension_numbers = #tpu.dot_dimension_numbers<[1], [0], [0], [1], [0, 0, 1, 1], [], []>} : vector<8x32xf32>, vector<32x128xf32>, vector<8x128xf32> -> vector<8x128xf32>
    %234 = arith.addf %231, %233 : vector<8x128xf32>
    %235 = math.tanh %234 : vector<8x128xf32>
    %236 = arith.negf %234 : vector<8x128xf32>
    %237 = math.exp %236 : vector<8x128xf32>
    %cst_92 = arith.constant 1.000000e+00 : f32
    %238 = vector.broadcast %cst_92 : f32 to vector<8x128xf32>
    %239 = arith.addf %238, %237 : vector<8x128xf32>
    %240 = arith.divf %238, %239 : vector<8x128xf32>
    %241 = arith.select %8, %235, %240 : vector<8x128xi1>, vector<8x128xf32>
    %242 = vector.extract_strided_slice %241 {offsets = [0, 0], sizes = [8, 32], strides = [1, 1]} : vector<8x128xf32> to vector<8x32xf32>
    %243 = vector.extract_strided_slice %241 {offsets = [0, 32], sizes = [8, 32], strides = [1, 1]} : vector<8x128xf32> to vector<8x32xf32>
    %244 = vector.extract_strided_slice %241 {offsets = [0, 64], sizes = [8, 32], strides = [1, 1]} : vector<8x128xf32> to vector<8x32xf32>
    %245 = vector.extract_strided_slice %241 {offsets = [0, 96], sizes = [8, 32], strides = [1, 1]} : vector<8x128xf32> to vector<8x32xf32>
    %246 = arith.mulf %243, %208 : vector<8x32xf32>
    %247 = arith.mulf %242, %244 : vector<8x32xf32>
    %248 = arith.addf %246, %247 : vector<8x32xf32>
    %249 = math.tanh %248 : vector<8x32xf32>
    %250 = arith.mulf %245, %249 : vector<8x32xf32>
    %251 = tpu.concatenate %250, %230 in 1 : vector<8x32xf32>, vector<8x32xf32> -> vector<8x64xf32>
    %c0_93 = arith.constant 0 : index
    %c0_94 = arith.constant 0 : index
    %252 = vector.load %arg6[%c0_93, %c0_94] : memref<64x128xf32, #tpu.memory_space<vmem>>, vector<64x128xf32>
    %cst_95 = arith.constant dense<0.000000e+00> : vector<8x128xf32>
    %253 = tpu.matmul %251, %252, %cst_95 {dimension_numbers = #tpu.dot_dimension_numbers<[1], [0], [0], [1], [0, 0, 1, 1], [], []>} : vector<8x64xf32>, vector<64x128xf32>, vector<8x128xf32> -> vector<8x128xf32>
    %254 = arith.addf %253, %2 : vector<8x128xf32>
    %255 = math.tanh %254 : vector<8x128xf32>
    %256 = arith.negf %254 : vector<8x128xf32>
    %257 = math.exp %256 : vector<8x128xf32>
    %cst_96 = arith.constant 1.000000e+00 : f32
    %258 = vector.broadcast %cst_96 : f32 to vector<8x128xf32>
    %259 = arith.addf %258, %257 : vector<8x128xf32>
    %260 = arith.divf %258, %259 : vector<8x128xf32>
    %261 = arith.select %8, %255, %260 : vector<8x128xi1>, vector<8x128xf32>
    %262 = vector.extract_strided_slice %261 {offsets = [0, 0], sizes = [8, 32], strides = [1, 1]} : vector<8x128xf32> to vector<8x32xf32>
    %263 = vector.extract_strided_slice %261 {offsets = [0, 32], sizes = [8, 32], strides = [1, 1]} : vector<8x128xf32> to vector<8x32xf32>
    %264 = vector.extract_strided_slice %261 {offsets = [0, 64], sizes = [8, 32], strides = [1, 1]} : vector<8x128xf32> to vector<8x32xf32>
    %265 = vector.extract_strided_slice %261 {offsets = [0, 96], sizes = [8, 32], strides = [1, 1]} : vector<8x128xf32> to vector<8x32xf32>
    %266 = arith.mulf %263, %228 : vector<8x32xf32>
    %267 = arith.mulf %262, %264 : vector<8x32xf32>
    %268 = arith.addf %266, %267 : vector<8x32xf32>
    %269 = math.tanh %268 : vector<8x32xf32>
    %270 = arith.mulf %265, %269 : vector<8x32xf32>
    %c0_97 = arith.constant 0 : index
    %c0_98 = arith.constant 0 : index
    %271 = vector.load %arg25[%c0_97, %c0_98] : memref<40x32xf32, #tpu.memory_space<vmem>>, vector<8x32xf32>
    tpu.vector_store %arg25[%c0_97, %c0_98], %270 {strides = array<i32>} : memref<40x32xf32, #tpu.memory_space<vmem>>, vector<8x32xf32>,
    %c40 = arith.constant 40 : index
    %c0_99 = arith.constant 0 : index
    %272 = vector.load %arg24[%c40, %c0_99] : memref<72x128xf32, #tpu.memory_space<vmem>>, vector<8x128xf32>
    %c0_100 = arith.constant 0 : index
    %c0_101 = arith.constant 0 : index
    %273 = vector.load %arg4[%c0_100, %c0_101] : memref<32x128xf32, #tpu.memory_space<vmem>>, vector<32x128xf32>
    %cst_102 = arith.constant dense<0.000000e+00> : vector<8x128xf32>
    %274 = tpu.matmul %250, %273, %cst_102 {dimension_numbers = #tpu.dot_dimension_numbers<[1], [0], [0], [1], [0, 0, 1, 1], [], []>} : vector<8x32xf32>, vector<32x128xf32>, vector<8x128xf32> -> vector<8x128xf32>
    %275 = arith.addf %272, %274 : vector<8x128xf32>
    %276 = math.tanh %275 : vector<8x128xf32>
    %277 = arith.negf %275 : vector<8x128xf32>
    %278 = math.exp %277 : vector<8x128xf32>
    %cst_103 = arith.constant 1.000000e+00 : f32
    %279 = vector.broadcast %cst_103 : f32 to vector<8x128xf32>
    %280 = arith.addf %279, %278 : vector<8x128xf32>
    %281 = arith.divf %279, %280 : vector<8x128xf32>
    %282 = arith.select %8, %276, %281 : vector<8x128xi1>, vector<8x128xf32>
    %283 = vector.extract_strided_slice %282 {offsets = [0, 0], sizes = [8, 32], strides = [1, 1]} : vector<8x128xf32> to vector<8x32xf32>
    %284 = vector.extract_strided_slice %282 {offsets = [0, 32], sizes = [8, 32], strides = [1, 1]} : vector<8x128xf32> to vector<8x32xf32>
    %285 = vector.extract_strided_slice %282 {offsets = [0, 64], sizes = [8, 32], strides = [1, 1]} : vector<8x128xf32> to vector<8x32xf32>
    %286 = vector.extract_strided_slice %282 {offsets = [0, 96], sizes = [8, 32], strides = [1, 1]} : vector<8x128xf32> to vector<8x32xf32>
    %287 = arith.mulf %284, %248 : vector<8x32xf32>
    %288 = arith.mulf %283, %285 : vector<8x32xf32>
    %289 = arith.addf %287, %288 : vector<8x32xf32>
    %290 = math.tanh %289 : vector<8x32xf32>
    %291 = arith.mulf %286, %290 : vector<8x32xf32>
    %292 = tpu.concatenate %291, %270 in 1 : vector<8x32xf32>, vector<8x32xf32> -> vector<8x64xf32>
    %c0_104 = arith.constant 0 : index
    %c0_105 = arith.constant 0 : index
    %293 = vector.load %arg6[%c0_104, %c0_105] : memref<64x128xf32, #tpu.memory_space<vmem>>, vector<64x128xf32>
    %cst_106 = arith.constant dense<0.000000e+00> : vector<8x128xf32>
    %294 = tpu.matmul %292, %293, %cst_106 {dimension_numbers = #tpu.dot_dimension_numbers<[1], [0], [0], [1], [0, 0, 1, 1], [], []>} : vector<8x64xf32>, vector<64x128xf32>, vector<8x128xf32> -> vector<8x128xf32>
    %295 = arith.addf %294, %2 : vector<8x128xf32>
    %296 = math.tanh %295 : vector<8x128xf32>
    %297 = arith.negf %295 : vector<8x128xf32>
    %298 = math.exp %297 : vector<8x128xf32>
    %cst_107 = arith.constant 1.000000e+00 : f32
    %299 = vector.broadcast %cst_107 : f32 to vector<8x128xf32>
    %300 = arith.addf %299, %298 : vector<8x128xf32>
    %301 = arith.divf %299, %300 : vector<8x128xf32>
    %302 = arith.select %8, %296, %301 : vector<8x128xi1>, vector<8x128xf32>
    %303 = vector.extract_strided_slice %302 {offsets = [0, 0], sizes = [8, 32], strides = [1, 1]} : vector<8x128xf32> to vector<8x32xf32>
    %304 = vector.extract_strided_slice %302 {offsets = [0, 32], sizes = [8, 32], strides = [1, 1]} : vector<8x128xf32> to vector<8x32xf32>
    %305 = vector.extract_strided_slice %302 {offsets = [0, 64], sizes = [8, 32], strides = [1, 1]} : vector<8x128xf32> to vector<8x32xf32>
    %306 = vector.extract_strided_slice %302 {offsets = [0, 96], sizes = [8, 32], strides = [1, 1]} : vector<8x128xf32> to vector<8x32xf32>
    %307 = arith.mulf %304, %268 : vector<8x32xf32>
    %308 = arith.mulf %303, %305 : vector<8x32xf32>
    %309 = arith.addf %307, %308 : vector<8x32xf32>
    %310 = math.tanh %309 : vector<8x32xf32>
    %311 = arith.mulf %306, %310 : vector<8x32xf32>
    %c8_108 = arith.constant 8 : index
    %c0_109 = arith.constant 0 : index
    %312 = vector.load %arg25[%c8_108, %c0_109] : memref<40x32xf32, #tpu.memory_space<vmem>>, vector<8x32xf32>
    tpu.vector_store %arg25[%c8_108, %c0_109], %311 {strides = array<i32>} : memref<40x32xf32, #tpu.memory_space<vmem>>, vector<8x32xf32>,
    %c48 = arith.constant 48 : index
    %c0_110 = arith.constant 0 : index
    %313 = vector.load %arg24[%c48, %c0_110] : memref<72x128xf32, #tpu.memory_space<vmem>>, vector<8x128xf32>
    %c0_111 = arith.constant 0 : index
    %c0_112 = arith.constant 0 : index
    %314 = vector.load %arg4[%c0_111, %c0_112] : memref<32x128xf32, #tpu.memory_space<vmem>>, vector<32x128xf32>
    %cst_113 = arith.constant dense<0.000000e+00> : vector<8x128xf32>
    %315 = tpu.matmul %291, %314, %cst_113 {dimension_numbers = #tpu.dot_dimension_numbers<[1], [0], [0], [1], [0, 0, 1, 1], [], []>} : vector<8x32xf32>, vector<32x128xf32>, vector<8x128xf32> -> vector<8x128xf32>
    %316 = arith.addf %313, %315 : vector<8x128xf32>
    %317 = math.tanh %316 : vector<8x128xf32>
    %318 = arith.negf %316 : vector<8x128xf32>
    %319 = math.exp %318 : vector<8x128xf32>
    %cst_114 = arith.constant 1.000000e+00 : f32
    %320 = vector.broadcast %cst_114 : f32 to vector<8x128xf32>
    %321 = arith.addf %320, %319 : vector<8x128xf32>
    %322 = arith.divf %320, %321 : vector<8x128xf32>
    %323 = arith.select %8, %317, %322 : vector<8x128xi1>, vector<8x128xf32>
    %324 = vector.extract_strided_slice %323 {offsets = [0, 0], sizes = [8, 32], strides = [1, 1]} : vector<8x128xf32> to vector<8x32xf32>
    %325 = vector.extract_strided_slice %323 {offsets = [0, 32], sizes = [8, 32], strides = [1, 1]} : vector<8x128xf32> to vector<8x32xf32>
    %326 = vector.extract_strided_slice %323 {offsets = [0, 64], sizes = [8, 32], strides = [1, 1]} : vector<8x128xf32> to vector<8x32xf32>
    %327 = vector.extract_strided_slice %323 {offsets = [0, 96], sizes = [8, 32], strides = [1, 1]} : vector<8x128xf32> to vector<8x32xf32>
    %328 = arith.mulf %325, %289 : vector<8x32xf32>
    %329 = arith.mulf %324, %326 : vector<8x32xf32>
    %330 = arith.addf %328, %329 : vector<8x32xf32>
    %331 = math.tanh %330 : vector<8x32xf32>
    %332 = arith.mulf %327, %331 : vector<8x32xf32>
    %333 = tpu.concatenate %332, %311 in 1 : vector<8x32xf32>, vector<8x32xf32> -> vector<8x64xf32>
    %c0_115 = arith.constant 0 : index
    %c0_116 = arith.constant 0 : index
    %334 = vector.load %arg6[%c0_115, %c0_116] : memref<64x128xf32, #tpu.memory_space<vmem>>, vector<64x128xf32>
    %cst_117 = arith.constant dense<0.000000e+00> : vector<8x128xf32>
    %335 = tpu.matmul %333, %334, %cst_117 {dimension_numbers = #tpu.dot_dimension_numbers<[1], [0], [0], [1], [0, 0, 1, 1], [], []>} : vector<8x64xf32>, vector<64x128xf32>, vector<8x128xf32> -> vector<8x128xf32>
    %336 = arith.addf %335, %2 : vector<8x128xf32>
    %337 = math.tanh %336 : vector<8x128xf32>
    %338 = arith.negf %336 : vector<8x128xf32>
    %339 = math.exp %338 : vector<8x128xf32>
    %cst_118 = arith.constant 1.000000e+00 : f32
    %340 = vector.broadcast %cst_118 : f32 to vector<8x128xf32>
    %341 = arith.addf %340, %339 : vector<8x128xf32>
    %342 = arith.divf %340, %341 : vector<8x128xf32>
    %343 = arith.select %8, %337, %342 : vector<8x128xi1>, vector<8x128xf32>
    %344 = vector.extract_strided_slice %343 {offsets = [0, 0], sizes = [8, 32], strides = [1, 1]} : vector<8x128xf32> to vector<8x32xf32>
    %345 = vector.extract_strided_slice %343 {offsets = [0, 32], sizes = [8, 32], strides = [1, 1]} : vector<8x128xf32> to vector<8x32xf32>
    %346 = vector.extract_strided_slice %343 {offsets = [0, 64], sizes = [8, 32], strides = [1, 1]} : vector<8x128xf32> to vector<8x32xf32>
    %347 = vector.extract_strided_slice %343 {offsets = [0, 96], sizes = [8, 32], strides = [1, 1]} : vector<8x128xf32> to vector<8x32xf32>
    %348 = arith.mulf %345, %309 : vector<8x32xf32>
    %349 = arith.mulf %344, %346 : vector<8x32xf32>
    %350 = arith.addf %348, %349 : vector<8x32xf32>
    %351 = math.tanh %350 : vector<8x32xf32>
    %352 = arith.mulf %347, %351 : vector<8x32xf32>
    %c16_119 = arith.constant 16 : index
    %c0_120 = arith.constant 0 : index
    %353 = vector.load %arg25[%c16_119, %c0_120] : memref<40x32xf32, #tpu.memory_space<vmem>>, vector<8x32xf32>
    tpu.vector_store %arg25[%c16_119, %c0_120], %352 {strides = array<i32>} : memref<40x32xf32, #tpu.memory_space<vmem>>, vector<8x32xf32>,
    %c56 = arith.constant 56 : index
    %c0_121 = arith.constant 0 : index
    %354 = vector.load %arg24[%c56, %c0_121] : memref<72x128xf32, #tpu.memory_space<vmem>>, vector<8x128xf32>
    %c0_122 = arith.constant 0 : index
    %c0_123 = arith.constant 0 : index
    %355 = vector.load %arg4[%c0_122, %c0_123] : memref<32x128xf32, #tpu.memory_space<vmem>>, vector<32x128xf32>
    %cst_124 = arith.constant dense<0.000000e+00> : vector<8x128xf32>
    %356 = tpu.matmul %332, %355, %cst_124 {dimension_numbers = #tpu.dot_dimension_numbers<[1], [0], [0], [1], [0, 0, 1, 1], [], []>} : vector<8x32xf32>, vector<32x128xf32>, vector<8x128xf32> -> vector<8x128xf32>
    %357 = arith.addf %354, %356 : vector<8x128xf32>
    %358 = math.tanh %357 : vector<8x128xf32>
    %359 = arith.negf %357 : vector<8x128xf32>
    %360 = math.exp %359 : vector<8x128xf32>
    %cst_125 = arith.constant 1.000000e+00 : f32
    %361 = vector.broadcast %cst_125 : f32 to vector<8x128xf32>
    %362 = arith.addf %361, %360 : vector<8x128xf32>
    %363 = arith.divf %361, %362 : vector<8x128xf32>
    %364 = arith.select %8, %358, %363 : vector<8x128xi1>, vector<8x128xf32>
    %365 = vector.extract_strided_slice %364 {offsets = [0, 0], sizes = [8, 32], strides = [1, 1]} : vector<8x128xf32> to vector<8x32xf32>
    %366 = vector.extract_strided_slice %364 {offsets = [0, 32], sizes = [8, 32], strides = [1, 1]} : vector<8x128xf32> to vector<8x32xf32>
    %367 = vector.extract_strided_slice %364 {offsets = [0, 64], sizes = [8, 32], strides = [1, 1]} : vector<8x128xf32> to vector<8x32xf32>
    %368 = vector.extract_strided_slice %364 {offsets = [0, 96], sizes = [8, 32], strides = [1, 1]} : vector<8x128xf32> to vector<8x32xf32>
    %369 = arith.mulf %366, %330 : vector<8x32xf32>
    %370 = arith.mulf %365, %367 : vector<8x32xf32>
    %371 = arith.addf %369, %370 : vector<8x32xf32>
    %372 = math.tanh %371 : vector<8x32xf32>
    %373 = arith.mulf %368, %372 : vector<8x32xf32>
    %374 = tpu.concatenate %373, %352 in 1 : vector<8x32xf32>, vector<8x32xf32> -> vector<8x64xf32>
    %c0_126 = arith.constant 0 : index
    %c0_127 = arith.constant 0 : index
    %375 = vector.load %arg6[%c0_126, %c0_127] : memref<64x128xf32, #tpu.memory_space<vmem>>, vector<64x128xf32>
    %cst_128 = arith.constant dense<0.000000e+00> : vector<8x128xf32>
    %376 = tpu.matmul %374, %375, %cst_128 {dimension_numbers = #tpu.dot_dimension_numbers<[1], [0], [0], [1], [0, 0, 1, 1], [], []>} : vector<8x64xf32>, vector<64x128xf32>, vector<8x128xf32> -> vector<8x128xf32>
    %377 = arith.addf %376, %2 : vector<8x128xf32>
    %378 = math.tanh %377 : vector<8x128xf32>
    %379 = arith.negf %377 : vector<8x128xf32>
    %380 = math.exp %379 : vector<8x128xf32>
    %cst_129 = arith.constant 1.000000e+00 : f32
    %381 = vector.broadcast %cst_129 : f32 to vector<8x128xf32>
    %382 = arith.addf %381, %380 : vector<8x128xf32>
    %383 = arith.divf %381, %382 : vector<8x128xf32>
    %384 = arith.select %8, %378, %383 : vector<8x128xi1>, vector<8x128xf32>
    %385 = vector.extract_strided_slice %384 {offsets = [0, 0], sizes = [8, 32], strides = [1, 1]} : vector<8x128xf32> to vector<8x32xf32>
    %386 = vector.extract_strided_slice %384 {offsets = [0, 32], sizes = [8, 32], strides = [1, 1]} : vector<8x128xf32> to vector<8x32xf32>
    %387 = vector.extract_strided_slice %384 {offsets = [0, 64], sizes = [8, 32], strides = [1, 1]} : vector<8x128xf32> to vector<8x32xf32>
    %388 = vector.extract_strided_slice %384 {offsets = [0, 96], sizes = [8, 32], strides = [1, 1]} : vector<8x128xf32> to vector<8x32xf32>
    %389 = arith.mulf %386, %350 : vector<8x32xf32>
    %390 = arith.mulf %385, %387 : vector<8x32xf32>
    %391 = arith.addf %389, %390 : vector<8x32xf32>
    %392 = math.tanh %391 : vector<8x32xf32>
    %393 = arith.mulf %388, %392 : vector<8x32xf32>
    %c24_130 = arith.constant 24 : index
    %c0_131 = arith.constant 0 : index
    %394 = vector.load %arg25[%c24_130, %c0_131] : memref<40x32xf32, #tpu.memory_space<vmem>>, vector<8x32xf32>
    tpu.vector_store %arg25[%c24_130, %c0_131], %393 {strides = array<i32>} : memref<40x32xf32, #tpu.memory_space<vmem>>, vector<8x32xf32>,
    %c64 = arith.constant 64 : index
    %c0_132 = arith.constant 0 : index
    %395 = vector.load %arg24[%c64, %c0_132] : memref<72x128xf32, #tpu.memory_space<vmem>>, vector<8x128xf32>
    %c0_133 = arith.constant 0 : index
    %c0_134 = arith.constant 0 : index
    %396 = vector.load %arg4[%c0_133, %c0_134] : memref<32x128xf32, #tpu.memory_space<vmem>>, vector<32x128xf32>
    %cst_135 = arith.constant dense<0.000000e+00> : vector<8x128xf32>
    %397 = tpu.matmul %373, %396, %cst_135 {dimension_numbers = #tpu.dot_dimension_numbers<[1], [0], [0], [1], [0, 0, 1, 1], [], []>} : vector<8x32xf32>, vector<32x128xf32>, vector<8x128xf32> -> vector<8x128xf32>
    %398 = arith.addf %395, %397 : vector<8x128xf32>
    %399 = math.tanh %398 : vector<8x128xf32>
    %400 = arith.negf %398 : vector<8x128xf32>
    %401 = math.exp %400 : vector<8x128xf32>
    %cst_136 = arith.constant 1.000000e+00 : f32
    %402 = vector.broadcast %cst_136 : f32 to vector<8x128xf32>
    %403 = arith.addf %402, %401 : vector<8x128xf32>
    %404 = arith.divf %402, %403 : vector<8x128xf32>
    %405 = arith.select %8, %399, %404 : vector<8x128xi1>, vector<8x128xf32>
    %406 = vector.extract_strided_slice %405 {offsets = [0, 0], sizes = [8, 32], strides = [1, 1]} : vector<8x128xf32> to vector<8x32xf32>
    %407 = vector.extract_strided_slice %405 {offsets = [0, 32], sizes = [8, 32], strides = [1, 1]} : vector<8x128xf32> to vector<8x32xf32>
    %408 = vector.extract_strided_slice %405 {offsets = [0, 64], sizes = [8, 32], strides = [1, 1]} : vector<8x128xf32> to vector<8x32xf32>
    %409 = vector.extract_strided_slice %405 {offsets = [0, 96], sizes = [8, 32], strides = [1, 1]} : vector<8x128xf32> to vector<8x32xf32>
    %410 = arith.mulf %407, %371 : vector<8x32xf32>
    %411 = arith.mulf %406, %408 : vector<8x32xf32>
    %412 = arith.addf %410, %411 : vector<8x32xf32>
    %413 = math.tanh %412 : vector<8x32xf32>
    %414 = arith.mulf %409, %413 : vector<8x32xf32>
    %415 = tpu.concatenate %414, %393 in 1 : vector<8x32xf32>, vector<8x32xf32> -> vector<8x64xf32>
    %c0_137 = arith.constant 0 : index
    %c0_138 = arith.constant 0 : index
    %416 = vector.load %arg6[%c0_137, %c0_138] : memref<64x128xf32, #tpu.memory_space<vmem>>, vector<64x128xf32>
    %cst_139 = arith.constant dense<0.000000e+00> : vector<8x128xf32>
    %417 = tpu.matmul %415, %416, %cst_139 {dimension_numbers = #tpu.dot_dimension_numbers<[1], [0], [0], [1], [0, 0, 1, 1], [], []>} : vector<8x64xf32>, vector<64x128xf32>, vector<8x128xf32> -> vector<8x128xf32>
    %418 = arith.addf %417, %2 : vector<8x128xf32>
    %419 = math.tanh %418 : vector<8x128xf32>
    %420 = arith.negf %418 : vector<8x128xf32>
    %421 = math.exp %420 : vector<8x128xf32>
    %cst_140 = arith.constant 1.000000e+00 : f32
    %422 = vector.broadcast %cst_140 : f32 to vector<8x128xf32>
    %423 = arith.addf %422, %421 : vector<8x128xf32>
    %424 = arith.divf %422, %423 : vector<8x128xf32>
    %425 = arith.select %8, %419, %424 : vector<8x128xi1>, vector<8x128xf32>
    %426 = vector.extract_strided_slice %425 {offsets = [0, 0], sizes = [8, 32], strides = [1, 1]} : vector<8x128xf32> to vector<8x32xf32>
    %427 = vector.extract_strided_slice %425 {offsets = [0, 32], sizes = [8, 32], strides = [1, 1]} : vector<8x128xf32> to vector<8x32xf32>
    %428 = vector.extract_strided_slice %425 {offsets = [0, 64], sizes = [8, 32], strides = [1, 1]} : vector<8x128xf32> to vector<8x32xf32>
    %429 = vector.extract_strided_slice %425 {offsets = [0, 96], sizes = [8, 32], strides = [1, 1]} : vector<8x128xf32> to vector<8x32xf32>
    %430 = arith.mulf %427, %391 : vector<8x32xf32>
    %431 = arith.mulf %426, %428 : vector<8x32xf32>
    %432 = arith.addf %430, %431 : vector<8x32xf32>
    %433 = math.tanh %432 : vector<8x32xf32>
    %434 = arith.mulf %429, %433 : vector<8x32xf32>
    %c32_141 = arith.constant 32 : index
    %c0_142 = arith.constant 0 : index
    %435 = vector.load %arg25[%c32_141, %c0_142] : memref<40x32xf32, #tpu.memory_space<vmem>>, vector<8x32xf32>
    tpu.vector_store %arg25[%c32_141, %c0_142], %434 {strides = array<i32>} : memref<40x32xf32, #tpu.memory_space<vmem>>, vector<8x32xf32>,
    %c0_143 = arith.constant 0 : index
    %c0_144 = arith.constant 0 : index
    %436 = vector.load %arg25[%c0_143, %c0_144] : memref<40x32xf32, #tpu.memory_space<vmem>>, vector<40x32xf32>
    %c0_145 = arith.constant 0 : index
    %c0_146 = arith.constant 0 : index
    %437 = vector.load %arg16[%c0_145, %c0_146] : memref<32x128xf32, #tpu.memory_space<vmem>>, vector<32x128xf32>
    %cst_147 = arith.constant dense<0.000000e+00> : vector<40x128xf32>
    %438 = tpu.matmul %436, %437, %cst_147 {dimension_numbers = #tpu.dot_dimension_numbers<[1], [0], [0], [1], [0, 0, 1, 1], [], []>} : vector<40x32xf32>, vector<32x128xf32>, vector<40x128xf32> -> vector<40x128xf32>
    %c0_148 = arith.constant 0 : index
    %c0_149 = arith.constant 0 : index
    %439 = vector.load %arg17[%c0_148, %c0_149] : memref<1x128xf32, #tpu.memory_space<vmem>>, vector<1x128xf32>
    %440 = vector.broadcast %439 : vector<1x128xf32> to vector<40x128xf32>
    %441 = arith.addf %438, %440 : vector<40x128xf32>
    %c0_150 = arith.constant 0 : index
    %c0_151 = arith.constant 0 : index
    %442 = vector.load %arg23[%c0_150, %c0_151] : memref<40x128xf32, #tpu.memory_space<vmem>>, vector<40x128xf32>
    tpu.vector_store %arg23[%c0_150, %c0_151], %441 {strides = array<i32>} : memref<40x128xf32, #tpu.memory_space<vmem>>, vector<40x128xf32>,
    return
  }
}

</mosaic_0001>

<llo_original>
// kernel: tpu_custom_call.1
$region0: #{tpu_custom_call.1}
  #allocation0 [shape = 'u32[]', space=smem, size = 0x4, offset = 0x4, fixed_abs, tag = 'smem constant byte address 0x4 - core index']
  #allocation1 [shape = 'u32[72,128]{1,0:T(1,128)}', space=vmem, size = 0x9000, scoped, tag = 'internal scratch']
  #allocation2 [shape = 'f32[72,128]{1,0:T(8,128)}', space=vmem, size = 0x9000, scoped, tag = 'scratch operand']
  #allocation3 [shape = 'f32[40,32]{1,0:T(8,128)}', space=vmem, size = 0x5000, scoped, tag = 'scratch operand']
  %s0 = inlined_call_operand.vmem [shape: f32[72,16], index: 0, kind: input, shape index: {}]
  %s1 = inlined_call_operand.hbm [shape: f32[8,128], index: 1, kind: input, shape index: {}]
  %s2 = inlined_call_operand.hbm [shape: f32[16,128], index: 2, kind: input, shape index: {}]
  %s3 = inlined_call_operand.hbm [shape: f32[128,128], index: 3, kind: input, shape index: {}]
  %s4 = inlined_call_operand.hbm [shape: f32[32,128], index: 4, kind: input, shape index: {}]
  %s5 = inlined_call_operand.vmem [shape: f32[1,128], index: 5, kind: input, shape index: {}]
  %s6 = inlined_call_operand.vmem [shape: f32[64,128], index: 6, kind: input, shape index: {}]
  %s7 = inlined_call_operand.hbm [shape: f32[1,128], index: 7, kind: input, shape index: {}]
  %s8 = inlined_call_operand.hbm [shape: f32[32,256], index: 8, kind: input, shape index: {}]
  %s9 = inlined_call_operand.hbm [shape: f32[1,256], index: 9, kind: input, shape index: {}]
  %s10 = inlined_call_operand.vmem [shape: f32[16,256], index: 10, kind: input, shape index: {}]
  %s11 = inlined_call_operand.hbm [shape: f32[32,256], index: 11, kind: input, shape index: {}]
  %s12 = inlined_call_operand.vmem [shape: f32[1,256], index: 12, kind: input, shape index: {}]
  %s13 = inlined_call_operand.hbm [shape: f32[128,128], index: 13, kind: input, shape index: {}]
  %s14 = inlined_call_operand.hbm [shape: f32[32,128], index: 14, kind: input, shape index: {}]
  %s15 = inlined_call_operand.vmem [shape: f32[1,128], index: 15, kind: input, shape index: {}]
  %s16 = inlined_call_operand.hbm [shape: f32[32,128], index: 16, kind: input, shape index: {}]
  %s17 = inlined_call_operand.vmem [shape: f32[1,128], index: 17, kind: input, shape index: {}]
  %s18 = inlined_call_operand.hbm [shape: f32[8,128], index: 18, kind: output, shape index: {0}]
  %s19 = inlined_call_operand.hbm [shape: f32[8,128], index: 19, kind: output, shape index: {1}]
  %s20 = inlined_call_operand.hbm [shape: f32[8,128], index: 20, kind: output, shape index: {2}]
  %s21 = inlined_call_operand.hbm [shape: f32[8,128], index: 21, kind: output, shape index: {3}]
  %s22 = inlined_call_operand.hbm [shape: f32[8,128], index: 22, kind: output, shape index: {4}]
  %s23 = inlined_call_operand.hbm [shape: f32[40,128], index: 23, kind: output, shape index: {5}]
  %24 = xla_tuple %s18, %s19, %s20, %s21, %s22, %s23
  %s25 = sld [smem:[#allocation0]]
  $region166: #{tpu_custom_call.1} parent=0
    _
  %s27 = ssub.s32 1, %s25
  %s28 = scalar_select 0, %s27, %s25
  $region1: #{tpu_custom_call.1} parent=0
    #allocation4 [shape = 'u8[4096]{0}', space=vmem, size = 0x1000, scoped, tag = 'input window, operand 1, single buffered']
    #allocation5 [shape = 's32[1]{0}', space=sflag, size = 0x4, scoped, tag = 'scoped memory for tpu_custom_call.1']
    #allocation6 [shape = 's32[1]{0}', space=sflag, size = 0x4, scoped, tag = 'scoped memory for tpu_custom_call.1']
    #allocation7 [shape = 'u8[8192]{0}', space=vmem, size = 0x2000, scoped, tag = 'input window, operand 2, single buffered']
    #allocation8 [shape = 's32[1]{0}', space=sflag, size = 0x4, scoped, tag = 'scoped memory for tpu_custom_call.1']
    #allocation9 [shape = 'u8[65536]{0}', space=vmem, size = 0x10000, scoped, tag = 'input window, operand 3, single buffered']
    #allocation10 [shape = 'u8[16384]{0}', space=vmem, size = 0x4000, scoped, tag = 'input window, operand 4, single buffered']
    #allocation11 [shape = 's32[1]{0}', space=sflag, size = 0x4, scoped, tag = 'scoped memory for tpu_custom_call.1']
    #allocation12 [shape = 'u8[512]{0}', space=vmem, size = 0x400, scoped, tag = 'input window, operand 7, single buffered']
    #allocation13 [shape = 'u8[32768]{0}', space=vmem, size = 0x8000, scoped, tag = 'input window, operand 8, single buffered']
    #allocation14 [shape = 's32[1]{0}', space=sflag, size = 0x4, scoped, tag = 'scoped memory for tpu_custom_call.1']
    #allocation15 [shape = 'u8[1024]{0}', space=vmem, size = 0x400, scoped, tag = 'input window, operand 9, single buffered']
    #allocation16 [shape = 'u8[32768]{0}', space=vmem, size = 0x8000, scoped, tag = 'input window, operand 11, single buffered']
    #allocation17 [shape = 's32[1]{0}', space=sflag, size = 0x4, scoped, tag = 'scoped memory for tpu_custom_call.1']
    #allocation18 [shape = 'u8[65536]{0}', space=vmem, size = 0x10000, scoped, tag = 'input window, operand 13, single buffered']
    #allocation19 [shape = 'u8[16384]{0}', space=vmem, size = 0x4000, scoped, tag = 'input window, operand 14, single buffered']
    #allocation20 [shape = 's32[1]{0}', space=sflag, size = 0x4, scoped, tag = 'scoped memory for tpu_custom_call.1']
    #allocation21 [shape = 'u8[16384]{0}', space=vmem, size = 0x4000, scoped, tag = 'input window, operand 16, single buffered']
    #allocation22 [shape = 'u8[4096]{0}', space=vmem, size = 0x1000, scoped, tag = 'output window, operand 0, single buffered']
    #allocation23 [shape = 'u8[4096]{0}', space=vmem, size = 0x1000, scoped, tag = 'output window, operand 1, single buffered']
    #allocation24 [shape = 's32[1]{0}', space=sflag, size = 0x4, scoped, tag = 'scoped memory for tpu_custom_call.1']
    #allocation25 [shape = 'u8[4096]{0}', space=vmem, size = 0x1000, scoped, tag = 'output window, operand 2, single buffered']
    #allocation26 [shape = 'u8[4096]{0}', space=vmem, size = 0x1000, scoped, tag = 'output window, operand 3, single buffered']
    #allocation27 [shape = 's32[1]{0}', space=sflag, size = 0x4, scoped, tag = 'scoped memory for tpu_custom_call.1']
    #allocation28 [shape = 'u8[4096]{0}', space=vmem, size = 0x1000, scoped, tag = 'output window, operand 4, single buffered']
    #allocation29 [shape = 'u8[20480]{0}', space=vmem, size = 0x5000, scoped, tag = 'output window, operand 5, single buffered']
    #allocation30 [shape = 's32[1]{0}', space=sflag, size = 0x4, scoped, tag = 'scoped memory for tpu_custom_call.1']
    %29 = vsyncpa [#allocation5], 0
    %30 = vsyncpa [#allocation8], 0
    %31 = vsyncpa [#allocation11], 0
    %32 = vsyncpa [#allocation14], 0
    %33 = vsyncpa [#allocation17], 0
    %34 = vsyncpa [#allocation20], 0
    %35 = vsyncpa [#allocation6], 0
    %36 = vsyncpa [#allocation24], 0
    %37 = vsyncpa [#allocation27], 0
    %38 = vsyncpa [#allocation30], 0
    // Predicated region
    $region2: #{tpu_custom_call.1} parent=1 // pred_check
      _
    $region3: #{tpu_custom_call.1} parent=1 // pred_check_branch
      %40 = sbr.rel (0) target = $region5
    $region4: #{tpu_custom_call.1} parent=1 // pred_region
      _
    $region5: #{tpu_custom_call.1} parent=1 // pred_fallthru
      _
    // Predicated region
    $region6: #{tpu_custom_call.1} parent=1 // pred_check
      _
    $region7: #{tpu_custom_call.1} parent=1 // pred_check_branch
      %42 = sbr.rel (0) target = $region9
    $region8: #{tpu_custom_call.1} parent=1 // pred_region
      %44 = vsyncadd [#allocation5], 0
      %s46 = sshll.u32 %s1, 4
      %s47 = int_to_ptr.hbm [resolvable:$true] %s46
      %s48 = sshll.u32 [#allocation4], 4
      %s49 = int_to_ptr.vmem [resolvable:$true] %s48
      %51 = dma.hbm_to_vmem [thread:$0]  %s47, 128, %s49, [#allocation5]
    $region9: #{tpu_custom_call.1} parent=1 // pred_fallthru
      _
    // Predicated region
    $region10: #{tpu_custom_call.1} parent=1 // pred_check
      _
    $region11: #{tpu_custom_call.1} parent=1 // pred_check_branch
      %53 = sbr.rel (0) target = $region13
    $region12: #{tpu_custom_call.1} parent=1 // pred_region
      %55 = vsyncadd [#allocation8], 0
      %s56 = sshll.u32 %s2, 4
      %s57 = int_to_ptr.hbm [resolvable:$true] %s56
      %s58 = sshll.u32 [#allocation7], 4
      %s59 = int_to_ptr.vmem [resolvable:$true] %s58
      %64 = dma.hbm_to_vmem [thread:$0]  %s57, 256, %s59, [#allocation8], 128, 128, 8
    $region13: #{tpu_custom_call.1} parent=1 // pred_fallthru
      _
    // Predicated region
    $region14: #{tpu_custom_call.1} parent=1 // pred_check
      _
    $region15: #{tpu_custom_call.1} parent=1 // pred_check_branch
      %66 = sbr.rel (0) target = $region17
    $region16: #{tpu_custom_call.1} parent=1 // pred_region
      %68 = vsyncadd [#allocation8], 0
      %s69 = sshll.u32 %s3, 4
      %s70 = int_to_ptr.hbm [resolvable:$true] %s69
      %s71 = sshll.u32 [#allocation9], 4
      %s72 = int_to_ptr.vmem [resolvable:$true] %s71
      %77 = dma.hbm_to_vmem [thread:$0]  %s70, 2048, %s72, [#allocation8], 128, 128, 8
    $region17: #{tpu_custom_call.1} parent=1 // pred_fallthru
      _
    // Predicated region
    $region18: #{tpu_custom_call.1} parent=1 // pred_check
      _
    $region19: #{tpu_custom_call.1} parent=1 // pred_check_branch
      %79 = sbr.rel (0) target = $region21
    $region20: #{tpu_custom_call.1} parent=1 // pred_region
      %81 = vsyncadd [#allocation11], 0
      %s82 = sshll.u32 %s4, 4
      %s83 = int_to_ptr.hbm [resolvable:$true] %s82
      %s84 = sshll.u32 [#allocation10], 4
      %s85 = int_to_ptr.vmem [resolvable:$true] %s84
      %90 = dma.hbm_to_vmem [thread:$0]  %s83, 512, %s85, [#allocation11], 128, 128, 8
    $region21: #{tpu_custom_call.1} parent=1 // pred_fallthru
      _
    // Predicated region
    $region22: #{tpu_custom_call.1} parent=1 // pred_check
      _
    $region23: #{tpu_custom_call.1} parent=1 // pred_check_branch
      %92 = sbr.rel (0) target = $region25
    $region24: #{tpu_custom_call.1} parent=1 // pred_region
      _
    $region25: #{tpu_custom_call.1} parent=1 // pred_fallthru
      _
    // Predicated region
    $region26: #{tpu_custom_call.1} parent=1 // pred_check
      _
    $region27: #{tpu_custom_call.1} parent=1 // pred_check_branch
      %94 = sbr.rel (0) target = $region29
    $region28: #{tpu_custom_call.1} parent=1 // pred_region
      _
    $region29: #{tpu_custom_call.1} parent=1 // pred_fallthru
      _
    // Predicated region
    $region30: #{tpu_custom_call.1} parent=1 // pred_check
      _
    $region31: #{tpu_custom_call.1} parent=1 // pred_check_branch
      %96 = sbr.rel (0) target = $region33
    $region32: #{tpu_custom_call.1} parent=1 // pred_region
      %98 = vsyncadd [#allocation11], 0
      %s100 = sshll.u32 %s7, 4
      %s101 = int_to_ptr.hbm [resolvable:$true] %s100
      %s102 = sshll.u32 [#allocation12], 4
      %s103 = int_to_ptr.vmem [resolvable:$true] %s102
      %105 = dma.hbm_to_vmem [thread:$0]  %s101, 16, %s103, [#allocation11]
    $region33: #{tpu_custom_call.1} parent=1 // pred_fallthru
      _
    // Predicated region
    $region34: #{tpu_custom_call.1} parent=1 // pred_check
      _
    $region35: #{tpu_custom_call.1} parent=1 // pred_check_branch
      %107 = sbr.rel (0) target = $region37
    $region36: #{tpu_custom_call.1} parent=1 // pred_region
      %109 = vsyncadd [#allocation14], 0
      %s110 = sshll.u32 %s8, 4
      %s111 = int_to_ptr.hbm [resolvable:$true] %s110
      %s112 = sshll.u32 [#allocation13], 4
      %s113 = int_to_ptr.vmem [resolvable:$true] %s112
      %118 = dma.hbm_to_vmem [thread:$0]  %s111, 1024, %s113, [#allocation14], 256, 256, 16
    $region37: #{tpu_custom_call.1} parent=1 // pred_fallthru
      _
    // Predicated region
    $region38: #{tpu_custom_call.1} parent=1 // pred_check
      _
    $region39: #{tpu_custom_call.1} parent=1 // pred_check_branch
      %120 = sbr.rel (0) target = $region41
    $region40: #{tpu_custom_call.1} parent=1 // pred_region
      %122 = vsyncadd [#allocation14], 0
      %s124 = sshll.u32 %s9, 4
      %s125 = int_to_ptr.hbm [resolvable:$true] %s124
      %s126 = sshll.u32 [#allocation15], 4
      %s127 = int_to_ptr.vmem [resolvable:$true] %s126
      %129 = dma.hbm_to_vmem [thread:$0]  %s125, 32, %s127, [#allocation14]
    $region41: #{tpu_custom_call.1} parent=1 // pred_fallthru
      _
    // Predicated region
    $region42: #{tpu_custom_call.1} parent=1 // pred_check
      _
    $region43: #{tpu_custom_call.1} parent=1 // pred_check_branch
      %131 = sbr.rel (0) target = $region45
    $region44: #{tpu_custom_call.1} parent=1 // pred_region
      _
    $region45: #{tpu_custom_call.1} parent=1 // pred_fallthru
      _
    // Predicated region
    $region46: #{tpu_custom_call.1} parent=1 // pred_check
      _
    $region47: #{tpu_custom_call.1} parent=1 // pred_check_branch
      %133 = sbr.rel (0) target = $region49
    $region48: #{tpu_custom_call.1} parent=1 // pred_region
      %135 = vsyncadd [#allocation17], 0
      %s136 = sshll.u32 %s11, 4
      %s137 = int_to_ptr.hbm [resolvable:$true] %s136
      %s138 = sshll.u32 [#allocation16], 4
      %s139 = int_to_ptr.vmem [resolvable:$true] %s138
      %144 = dma.hbm_to_vmem [thread:$0]  %s137, 1024, %s139, [#allocation17], 256, 256, 16
    $region49: #{tpu_custom_call.1} parent=1 // pred_fallthru
      _
    // Predicated region
    $region50: #{tpu_custom_call.1} parent=1 // pred_check
      _
    $region51: #{tpu_custom_call.1} parent=1 // pred_check_branch
      %146 = sbr.rel (0) target = $region53
    $region52: #{tpu_custom_call.1} parent=1 // pred_region
      _
    $region53: #{tpu_custom_call.1} parent=1 // pred_fallthru
      _
    // Predicated region
    $region54: #{tpu_custom_call.1} parent=1 // pred_check
      _
    $region55: #{tpu_custom_call.1} parent=1 // pred_check_branch
      %148 = sbr.rel (0) target = $region57
    $region56: #{tpu_custom_call.1} parent=1 // pred_region
      %150 = vsyncadd [#allocation17], 0
      %s151 = sshll.u32 %s13, 4
      %s152 = int_to_ptr.hbm [resolvable:$true] %s151
      %s153 = sshll.u32 [#allocation18], 4
      %s154 = int_to_ptr.vmem [resolvable:$true] %s153
      %159 = dma.hbm_to_vmem [thread:$0]  %s152, 2048, %s154, [#allocation17], 128, 128, 8
    $region57: #{tpu_custom_call.1} parent=1 // pred_fallthru
      _
    // Predicated region
    $region58: #{tpu_custom_call.1} parent=1 // pred_check
      _
    $region59: #{tpu_custom_call.1} parent=1 // pred_check_branch
      %161 = sbr.rel (0) target = $region61
    $region60: #{tpu_custom_call.1} parent=1 // pred_region
      %163 = vsyncadd [#allocation20], 0
      %s164 = sshll.u32 %s14, 4
      %s165 = int_to_ptr.hbm [resolvable:$true] %s164
      %s166 = sshll.u32 [#allocation19], 4
      %s167 = int_to_ptr.vmem [resolvable:$true] %s166
      %172 = dma.hbm_to_vmem [thread:$0]  %s165, 512, %s167, [#allocation20], 128, 128, 8
    $region61: #{tpu_custom_call.1} parent=1 // pred_fallthru
      _
    // Predicated region
    $region62: #{tpu_custom_call.1} parent=1 // pred_check
      _
    $region63: #{tpu_custom_call.1} parent=1 // pred_check_branch
      %174 = sbr.rel (0) target = $region65
    $region64: #{tpu_custom_call.1} parent=1 // pred_region
      _
    $region65: #{tpu_custom_call.1} parent=1 // pred_fallthru
      _
    // Predicated region
    $region66: #{tpu_custom_call.1} parent=1 // pred_check
      _
    $region67: #{tpu_custom_call.1} parent=1 // pred_check_branch
      %176 = sbr.rel (0) target = $region69
    $region68: #{tpu_custom_call.1} parent=1 // pred_region
      %178 = vsyncadd [#allocation20], 0
      %s179 = sshll.u32 %s16, 4
      %s180 = int_to_ptr.hbm [resolvable:$true] %s179
      %s181 = sshll.u32 [#allocation21], 4
      %s182 = int_to_ptr.vmem [resolvable:$true] %s181
      %187 = dma.hbm_to_vmem [thread:$0]  %s180, 512, %s182, [#allocation20], 128, 128, 8
    $region69: #{tpu_custom_call.1} parent=1 // pred_fallthru
      _
    // Predicated region
    $region70: #{tpu_custom_call.1} parent=1 // pred_check
      _
    $region71: #{tpu_custom_call.1} parent=1 // pred_check_branch
      %189 = sbr.rel (0) target = $region73
    $region72: #{tpu_custom_call.1} parent=1 // pred_region
      _
    $region73: #{tpu_custom_call.1} parent=1 // pred_fallthru
      _
    // Predicated region
    $region74: #{tpu_custom_call.1} parent=1 // pred_check
      _
    $region75: #{tpu_custom_call.1} parent=1 // pred_check_branch
      %191 = sbr.rel (0) target = $region77
    $region76: #{tpu_custom_call.1} parent=1 // pred_region
      %193 = dma.done [#allocation5], 128
    $region77: #{tpu_custom_call.1} parent=1 // pred_fallthru
      _
    // Predicated region
    $region78: #{tpu_custom_call.1} parent=1 // pred_check
      _
    $region79: #{tpu_custom_call.1} parent=1 // pred_check_branch
      %195 = sbr.rel (0) target = $region81
    $region80: #{tpu_custom_call.1} parent=1 // pred_region
      %197 = dma.done [#allocation8], 256
    $region81: #{tpu_custom_call.1} parent=1 // pred_fallthru
      _
    // Predicated region
    $region82: #{tpu_custom_call.1} parent=1 // pred_check
      _
    $region83: #{tpu_custom_call.1} parent=1 // pred_check_branch
      %199 = sbr.rel (0) target = $region85
    $region84: #{tpu_custom_call.1} parent=1 // pred_region
      %201 = dma.done [#allocation8], 2048
    $region85: #{tpu_custom_call.1} parent=1 // pred_fallthru
      _
    // Predicated region
    $region86: #{tpu_custom_call.1} parent=1 // pred_check
      _
    $region87: #{tpu_custom_call.1} parent=1 // pred_check_branch
      %203 = sbr.rel (0) target = $region89
    $region88: #{tpu_custom_call.1} parent=1 // pred_region
      %205 = dma.done [#allocation11], 512
    $region89: #{tpu_custom_call.1} parent=1 // pred_fallthru
      _
    // Predicated region
    $region90: #{tpu_custom_call.1} parent=1 // pred_check
      _
    $region91: #{tpu_custom_call.1} parent=1 // pred_check_branch
      %207 = sbr.rel (0) target = $region93
    $region92: #{tpu_custom_call.1} parent=1 // pred_region
      %209 = dma.done [#allocation11], 16
    $region93: #{tpu_custom_call.1} parent=1 // pred_fallthru
      _
    // Predicated region
    $region94: #{tpu_custom_call.1} parent=1 // pred_check
      _
    $region95: #{tpu_custom_call.1} parent=1 // pred_check_branch
      %211 = sbr.rel (0) target = $region97
    $region96: #{tpu_custom_call.1} parent=1 // pred_region
      %213 = dma.done [#allocation14], 1024
    $region97: #{tpu_custom_call.1} parent=1 // pred_fallthru
      _
    // Predicated region
    $region98: #{tpu_custom_call.1} parent=1 // pred_check
      _
    $region99: #{tpu_custom_call.1} parent=1 // pred_check_branch
      %215 = sbr.rel (0) target = $region101
    $region100: #{tpu_custom_call.1} parent=1 // pred_region
      %217 = dma.done [#allocation14], 32
    $region101: #{tpu_custom_call.1} parent=1 // pred_fallthru
      _
    // Predicated region
    $region102: #{tpu_custom_call.1} parent=1 // pred_check
      _
    $region103: #{tpu_custom_call.1} parent=1 // pred_check_branch
      %219 = sbr.rel (0) target = $region105
    $region104: #{tpu_custom_call.1} parent=1 // pred_region
      %221 = dma.done [#allocation17], 1024
    $region105: #{tpu_custom_call.1} parent=1 // pred_fallthru
      _
    // Predicated region
    $region106: #{tpu_custom_call.1} parent=1 // pred_check
      _
    $region107: #{tpu_custom_call.1} parent=1 // pred_check_branch
      %223 = sbr.rel (0) target = $region109
    $region108: #{tpu_custom_call.1} parent=1 // pred_region
      %225 = dma.done [#allocation17], 2048
    $region109: #{tpu_custom_call.1} parent=1 // pred_fallthru
      _
    // Predicated region
    $region110: #{tpu_custom_call.1} parent=1 // pred_check
      _
    $region111: #{tpu_custom_call.1} parent=1 // pred_check_branch
      %227 = sbr.rel (0) target = $region113
    $region112: #{tpu_custom_call.1} parent=1 // pred_region
      %229 = dma.done [#allocation20], 512
    $region113: #{tpu_custom_call.1} parent=1 // pred_fallthru
      _
    // Predicated region
    $region114: #{tpu_custom_call.1} parent=1 // pred_check
      _
    $region115: #{tpu_custom_call.1} parent=1 // pred_check_branch
      %231 = sbr.rel (0) target = $region117
    $region116: #{tpu_custom_call.1} parent=1 // pred_region
      %233 = dma.done [#allocation20], 512
    $region117: #{tpu_custom_call.1} parent=1 // pred_fallthru
      _
    %v234 = vld [vmem:[#allocation12] sm:$0x1]
    %v236 = vperm.slane %v234, 0
    %v238 = vlaneseq
    %v239 = vand.u32 %v238, 127
    %vm240 = vcmp.ge.s32.totalorder %v239, 64
    %vm241 = vcmp.lt.s32.totalorder %v239, 96
    %vm242 = vmand %vm240, %vm241
    %v243 = vld [vmem:[%s0] sm:$0xff]
    %v244 = vld [vmem:[%s0 + $0x8] sm:$0xff]
    %v245 = vld [vmem:[%s0 + $0x10] sm:$0xff]
    %v246 = vld [vmem:[%s0 + $0x18] sm:$0xff]
    %v247 = vld [vmem:[%s0 + $0x20] sm:$0xff]
    %v248 = vld [vmem:[%s0 + $0x28] sm:$0xff]
    %v249 = vld [vmem:[%s0 + $0x30] sm:$0xff]
    %v250 = vld [vmem:[%s0 + $0x38] sm:$0xff]
    %v251 = vld [vmem:[%s0 + $0x40] sm:$0xff]
    %v252 = vld [vmem:[#allocation7] sm:$0xff]
    %v253 = vld [vmem:[#allocation7 + $0x8] sm:$0xff]
    %v254 = vld [vmem:[%s5] sm:$0x1]
    %v256 = vperm.slane %v254, 0
    %vm258 = vcmask 130048
    %v260 = vsel %vm258, %v243, 0
    %v263 = vsel %vm258, %v244, 0
    %v266 = vsel %vm258, %v245, 0
    %v269 = vsel %vm258, %v246, 0
    %v272 = vsel %vm258, %v247, 0
    %v275 = vsel %vm258, %v248, 0
    %v278 = vsel %vm258, %v249, 0
    %v281 = vsel %vm258, %v250, 0
    %v284 = vsel %vm258, %v251, 0
    %286 = vmatpush.msra.mxu0 0.0
    %287 = vmatpush.msra.mxu0 0.0
    %288 = vmatpush.msra.mxu0 0.0
    %289 = vmatpush.msra.mxu0 0.0
    %290 = vmatpush.msra.mxu0 0.0
    %291 = vmatpush.msra.mxu0 0.0
    %292 = vmatpush.msra.mxu0 0.0
    %293 = vmatpush.msra.mxu0 0.0
    %294 = vmatpush.msra.mxu0 0.0
    %295 = vmatpush.msra.mxu0 0.0
    %296 = vmatpush.msra.mxu0 0.0
    %297 = vmatpush.msra.mxu0 0.0
    %298 = vmatpush.msra.mxu0 0.0
    %299 = vmatpush.msra.mxu0 0.0
    %300 = vmatpush.msra.mxu0 %v253
    %301 = vmatpush.msra.mxu0 %v252
    %302 = vmatmul.f32.gmra.mxu0 %v260
    %v303 = vpop.f32.mrf.mxu0
    %v304 = vadd.f32 %v256, %v303
    %305 = vmatmul.f32.gmra.mxu0 %v263
    %v306 = vpop.f32.mrf.mxu0
    %v307 = vadd.f32 %v256, %v306
    %308 = vmatmul.f32.gmra.mxu0 %v266
    %v309 = vpop.f32.mrf.mxu0
    %v310 = vadd.f32 %v256, %v309
    %311 = vmatmul.f32.gmra.mxu0 %v269
    %v312 = vpop.f32.mrf.mxu0
    %v313 = vadd.f32 %v256, %v312
    %314 = vmatmul.f32.gmra.mxu0 %v272
    %v315 = vpop.f32.mrf.mxu0
    %v316 = vadd.f32 %v256, %v315
    %317 = vmatmul.f32.gmra.mxu0 %v275
    %v318 = vpop.f32.mrf.mxu0
    %v319 = vadd.f32 %v256, %v318
    %320 = vmatmul.f32.gmra.mxu0 %v278
    %v321 = vpop.f32.mrf.mxu0
    %v322 = vadd.f32 %v256, %v321
    %323 = vmatmul.f32.gmra.mxu0 %v281
    %v324 = vpop.f32.mrf.mxu0
    %v325 = vadd.f32 %v256, %v324
    %326 = vmatmul.f32.gmra.mxu0 %v284
    %v327 = vpop.f32.mrf.mxu0
    %v328 = vadd.f32 %v256, %v327
    %329 = vdwg.mxu0
    %330 = vst [vmem:[#allocation2] sm:$0xff] %v304
    %331 = vst [vmem:[#allocation2 + $0x8] sm:$0xff] %v307
    %332 = vst [vmem:[#allocation2 + $0x10] sm:$0xff] %v310
    %333 = vst [vmem:[#allocation2 + $0x18] sm:$0xff] %v313
    %334 = vst [vmem:[#allocation2 + $0x20] sm:$0xff] %v316
    %335 = vst [vmem:[#allocation2 + $0x28] sm:$0xff] %v319
    %336 = vst [vmem:[#allocation2 + $0x30] sm:$0xff] %v322
    %337 = vst [vmem:[#allocation2 + $0x38] sm:$0xff] %v325
    %338 = vst [vmem:[#allocation2 + $0x40] sm:$0xff] %v328
    %v339 = vld [vmem:[#allocation2] sm:$0xff]
    %v340 = vld [vmem:[#allocation10] sm:$0xff]
    %v341 = vld [vmem:[#allocation10 + $0x8] sm:$0xff]
    %v342 = vld [vmem:[#allocation10 + $0x10] sm:$0xff]
    %v343 = vld [vmem:[#allocation10 + $0x18] sm:$0xff]
    %vm344 = vcmask 261120
    %v346 = vsel %vm344, 0.0, 0
    %348 = vmatpush.msra.mxu0 0.0
    %349 = vmatpush.msra.mxu0 0.0
    %350 = vmatpush.msra.mxu0 0.0
    %351 = vmatpush.msra.mxu0 0.0
    %352 = vmatpush.msra.mxu0 0.0
    %353 = vmatpush.msra.mxu0 0.0
    %354 = vmatpush.msra.mxu0 0.0
    %355 = vmatpush.msra.mxu0 0.0
    %356 = vmatpush.msra.mxu0 0.0
    %357 = vmatpush.msra.mxu0 0.0
    %358 = vmatpush.msra.mxu0 0.0
    %359 = vmatpush.msra.mxu0 0.0
    %360 = vmatpush.msra.mxu0 %v343
    %361 = vmatpush.msra.mxu0 %v342
    %362 = vmatpush.msra.mxu0 %v341
    %363 = vmatpush.msra.mxu0 %v340
    %364 = vmatmul.f32.gmra.mxu0 %v346
    %v365 = vpop.f32.mrf.mxu0
    %v366 = vadd.f32 0.0, %v365
    %367 = vdwg.mxu0
    %v368 = vadd.f32 %v339, %v366
    %v369 = vtanh.pop %v368
    %v370 = vxor.u32 %v368, 2147483648
    %v371 = vmul.f32 %v370, 1.442695
    %v372 = vpow.pop %v371
    %v373 = vadd.f32 %v372, 1.0
    %v374 = vrcp.pop %v373
    %v375 = vmul.f32 %v373, %v374
    %v376 = vsub.f32 1.0, %v375
    %v377 = vmul.f32 %v374, %v376
    %v378 = vadd.f32 %v374, %v377
    %vm379 = vweird.f32 %v373
    %vm380 = vweird.f32 %v374
    %vm381 = vmor %vm379, %vm380
    %v382 = vsel %vm381, %v374, %v378
    %v383 = vand.u32 2147483647, %v373
    %vm384 = vcmp.eq.f32.partialorder %v383, 8.507059e+37
    %v385 = vand.u32 %v373, 2147483648
    %v386 = vor.u32 1.1754944e-38, %v385
    %v387 = vsel %vm384, %v386, %v382
    %v388 = vmul.f32 1.0, %v387
    %v389 = vsel %vm242, %v369, %v388
    %v390 = vmul.f32 %v389, 0.0
    %392 = vrot.lane.b32.xlu0 %v389, 64
    %v393 = vpop.permute.xlu0 %392
    %v395 = vmul.f32 %v389, %v393
    %397 = vrot.lane.b32.xlu0 %v395, 32
    %v398 = vpop.permute.xlu0 %397
    %v400 = vadd.f32 %v390, %v398
    %v401 = vtanh.pop %v400
    %403 = vrot.lane.b32.xlu0 %v401, 64
    %v404 = vpop.permute.xlu0 %403
    %v406 = vmul.f32 %v389, %v404
    %408 = vrot.lane.b32.xlu0 %v406, 32
    %v409 = vpop.permute.xlu0 %408
    %v411 = vsel %vm344, %v409, 0.0
    %v412 = vld [vmem:[%s6] sm:$0xff]
    %v413 = vld [vmem:[%s6 + $0x8] sm:$0xff]
    %v414 = vld [vmem:[%s6 + $0x10] sm:$0xff]
    %v415 = vld [vmem:[%s6 + $0x18] sm:$0xff]
    %v416 = vld [vmem:[%s6 + $0x20] sm:$0xff]
    %v417 = vld [vmem:[%s6 + $0x28] sm:$0xff]
    %v418 = vld [vmem:[%s6 + $0x30] sm:$0xff]
    %v419 = vld [vmem:[%s6 + $0x38] sm:$0xff]
    %vm420 = vcmask 523264
    %v422 = vsel %vm420, %v411, 0
    %424 = vmatpush.msra.mxu0 0.0
    %425 = vmatpush.msra.mxu0 0.0
    %426 = vmatpush.msra.mxu0 0.0
    %427 = vmatpush.msra.mxu0 0.0
    %428 = vmatpush.msra.mxu0 0.0
    %429 = vmatpush.msra.mxu0 0.0
    %430 = vmatpush.msra.mxu0 0.0
    %431 = vmatpush.msra.mxu0 0.0
    %432 = vmatpush.msra.mxu0 %v419
    %433 = vmatpush.msra.mxu0 %v418
    %434 = vmatpush.msra.mxu0 %v417
    %435 = vmatpush.msra.mxu0 %v416
    %436 = vmatpush.msra.mxu0 %v415
    %437 = vmatpush.msra.mxu0 %v414
    %438 = vmatpush.msra.mxu0 %v413
    %439 = vmatpush.msra.mxu0 %v412
    %440 = vmatmul.f32.gmra.mxu0 %v422
    %v441 = vpop.f32.mrf.mxu0
    %v442 = vadd.f32 %v236, %v441
    %443 = vdwg.mxu0
    %v444 = vtanh.pop %v442
    %v445 = vxor.u32 %v442, 2147483648
    %v446 = vmul.f32 %v445, 1.442695
    %v447 = vpow.pop %v446
    %v448 = vadd.f32 %v447, 1.0
    %v449 = vrcp.pop %v448
    %v450 = vmul.f32 %v448, %v449
    %v451 = vsub.f32 1.0, %v450
    %v452 = vmul.f32 %v449, %v451
    %v453 = vadd.f32 %v449, %v452
    %vm454 = vweird.f32 %v448
    %vm455 = vweird.f32 %v449
    %vm456 = vmor %vm454, %vm455
    %v457 = vsel %vm456, %v449, %v453
    %v458 = vand.u32 2147483647, %v448
    %vm459 = vcmp.eq.f32.partialorder %v458, 8.507059e+37
    %v460 = vand.u32 %v448, 2147483648
    %v461 = vor.u32 1.1754944e-38, %v460
    %v462 = vsel %vm459, %v461, %v457
    %v463 = vmul.f32 1.0, %v462
    %v464 = vsel %vm242, %v444, %v463
    %v465 = vmul.f32 %v464, 0.0
    %467 = vrot.lane.b32.xlu0 %v464, 64
    %v468 = vpop.permute.xlu0 %467
    %v470 = vmul.f32 %v464, %v468
    %472 = vrot.lane.b32.xlu0 %v470, 32
    %v473 = vpop.permute.xlu0 %472
    %v475 = vadd.f32 %v465, %v473
    %v476 = vtanh.pop %v475
    %478 = vrot.lane.b32.xlu0 %v476, 64
    %v479 = vpop.permute.xlu0 %478
    %v481 = vmul.f32 %v464, %v479
    %v482 = vld [vmem:[#allocation2 + $0x8] sm:$0xff]
    %v483 = vsel %vm344, %v409, 0
    %485 = vmatpush.msra.mxu0 0.0
    %486 = vmatpush.msra.mxu0 0.0
    %487 = vmatpush.msra.mxu0 0.0
    %488 = vmatpush.msra.mxu0 0.0
    %489 = vmatpush.msra.mxu0 0.0
    %490 = vmatpush.msra.mxu0 0.0
    %491 = vmatpush.msra.mxu0 0.0
    %492 = vmatpush.msra.mxu0 0.0
    %493 = vmatpush.msra.mxu0 0.0
    %494 = vmatpush.msra.mxu0 0.0
    %495 = vmatpush.msra.mxu0 0.0
    %496 = vmatpush.msra.mxu0 0.0
    %497 = vmatpush.msra.mxu0 %v343
    %498 = vmatpush.msra.mxu0 %v342
    %499 = vmatpush.msra.mxu0 %v341
    %500 = vmatpush.msra.mxu0 %v340
    %501 = vmatmul.f32.gmra.mxu0 %v483
    %v502 = vpop.f32.mrf.mxu0
    %v503 = vadd.f32 0.0, %v502
    %504 = vdwg.mxu0
    %v505 = vadd.f32 %v482, %v503
    %v506 = vtanh.pop %v505
    %v507 = vxor.u32 %v505, 2147483648
    %v508 = vmul.f32 %v507, 1.442695
    %v509 = vpow.pop %v508
    %v510 = vadd.f32 %v509, 1.0
    %v511 = vrcp.pop %v510
    %v512 = vmul.f32 %v510, %v511
    %v513 = vsub.f32 1.0, %v512
    %v514 = vmul.f32 %v511, %v513
    %v515 = vadd.f32 %v511, %v514
    %vm516 = vweird.f32 %v510
    %vm517 = vweird.f32 %v511
    %vm518 = vmor %vm516, %vm517
    %v519 = vsel %vm518, %v511, %v515
    %v520 = vand.u32 2147483647, %v510
    %vm521 = vcmp.eq.f32.partialorder %v520, 8.507059e+37
    %v522 = vand.u32 %v510, 2147483648
    %v523 = vor.u32 1.1754944e-38, %v522
    %v524 = vsel %vm521, %v523, %v519
    %v525 = vmul.f32 1.0, %v524
    %v526 = vsel %vm242, %v506, %v525
    %v527 = vmul.f32 %v526, %v400
    %529 = vrot.lane.b32.xlu0 %v526, 64
    %v530 = vpop.permute.xlu0 %529
    %v532 = vmul.f32 %v526, %v530
    %534 = vrot.lane.b32.xlu0 %v532, 32
    %v535 = vpop.permute.xlu0 %534
    %v537 = vadd.f32 %v527, %v535
    %v538 = vtanh.pop %v537
    %540 = vrot.lane.b32.xlu0 %v538, 64
    %v541 = vpop.permute.xlu0 %540
    %v543 = vmul.f32 %v526, %v541
    %545 = vrot.lane.b32.xlu0 %v543, 32
    %v546 = vpop.permute.xlu0 %545
    %549 = vrot.lane.b32.xlu0 %v481, 64
    %v550 = vpop.permute.xlu0 %549
    %v552 = vsel %vm344, %v546, %v550
    %v554 = vsel %vm420, %v552, 0
    %556 = vmatpush.msra.mxu0 0.0
    %557 = vmatpush.msra.mxu0 0.0
    %558 = vmatpush.msra.mxu0 0.0
    %559 = vmatpush.msra.mxu0 0.0
    %560 = vmatpush.msra.mxu0 0.0
    %561 = vmatpush.msra.mxu0 0.0
    %562 = vmatpush.msra.mxu0 0.0
    %563 = vmatpush.msra.mxu0 0.0
    %564 = vmatpush.msra.mxu0 %v419
    %565 = vmatpush.msra.mxu0 %v418
    %566 = vmatpush.msra.mxu0 %v417
    %567 = vmatpush.msra.mxu0 %v416
    %568 = vmatpush.msra.mxu0 %v415
    %569 = vmatpush.msra.mxu0 %v414
    %570 = vmatpush.msra.mxu0 %v413
    %571 = vmatpush.msra.mxu0 %v412
    %572 = vmatmul.f32.gmra.mxu0 %v554
    %v573 = vpop.f32.mrf.mxu0
    %v574 = vadd.f32 %v236, %v573
    %575 = vdwg.mxu0
    %v576 = vtanh.pop %v574
    %v577 = vxor.u32 %v574, 2147483648
    %v578 = vmul.f32 %v577, 1.442695
    %v579 = vpow.pop %v578
    %v580 = vadd.f32 %v579, 1.0
    %v581 = vrcp.pop %v580
    %v582 = vmul.f32 %v580, %v581
    %v583 = vsub.f32 1.0, %v582
    %v584 = vmul.f32 %v581, %v583
    %v585 = vadd.f32 %v581, %v584
    %vm586 = vweird.f32 %v580
    %vm587 = vweird.f32 %v581
    %vm588 = vmor %vm586, %vm587
    %v589 = vsel %vm588, %v581, %v585
    %v590 = vand.u32 2147483647, %v580
    %vm591 = vcmp.eq.f32.partialorder %v590, 8.507059e+37
    %v592 = vand.u32 %v580, 2147483648
    %v593 = vor.u32 1.1754944e-38, %v592
    %v594 = vsel %vm591, %v593, %v589
    %v595 = vmul.f32 1.0, %v594
    %v596 = vsel %vm242, %v576, %v595
    %v597 = vmul.f32 %v596, %v475
    %599 = vrot.lane.b32.xlu0 %v596, 64
    %v600 = vpop.permute.xlu0 %599
    %v602 = vmul.f32 %v596, %v600
    %604 = vrot.lane.b32.xlu0 %v602, 32
    %v605 = vpop.permute.xlu0 %604
    %v607 = vadd.f32 %v597, %v605
    %v608 = vtanh.pop %v607
    %610 = vrot.lane.b32.xlu0 %v608, 64
    %v611 = vpop.permute.xlu0 %610
    %v613 = vmul.f32 %v596, %v611
    %v614 = vld [vmem:[#allocation2 + $0x10] sm:$0xff]
    %v615 = vsel %vm344, %v546, 0
    %617 = vmatpush.msra.mxu0 0.0
    %618 = vmatpush.msra.mxu0 0.0
    %619 = vmatpush.msra.mxu0 0.0
    %620 = vmatpush.msra.mxu0 0.0
    %621 = vmatpush.msra.mxu0 0.0
    %622 = vmatpush.msra.mxu0 0.0
    %623 = vmatpush.msra.mxu0 0.0
    %624 = vmatpush.msra.mxu0 0.0
    %625 = vmatpush.msra.mxu0 0.0
    %626 = vmatpush.msra.mxu0 0.0
    %627 = vmatpush.msra.mxu0 0.0
    %628 = vmatpush.msra.mxu0 0.0
    %629 = vmatpush.msra.mxu0 %v343
    %630 = vmatpush.msra.mxu0 %v342
    %631 = vmatpush.msra.mxu0 %v341
    %632 = vmatpush.msra.mxu0 %v340
    %633 = vmatmul.f32.gmra.mxu0 %v615
    %v634 = vpop.f32.mrf.mxu0
    %v635 = vadd.f32 0.0, %v634
    %636 = vdwg.mxu0
    %v637 = vadd.f32 %v614, %v635
    %v638 = vtanh.pop %v637
    %v639 = vxor.u32 %v637, 2147483648
    %v640 = vmul.f32 %v639, 1.442695
    %v641 = vpow.pop %v640
    %v642 = vadd.f32 %v641, 1.0
    %v643 = vrcp.pop %v642
    %v644 = vmul.f32 %v642, %v643
    %v645 = vsub.f32 1.0, %v644
    %v646 = vmul.f32 %v643, %v645
    %v647 = vadd.f32 %v643, %v646
    %vm648 = vweird.f32 %v642
    %vm649 = vweird.f32 %v643
    %vm650 = vmor %vm648, %vm649
    %v651 = vsel %vm650, %v643, %v647
    %v652 = vand.u32 2147483647, %v642
    %vm653 = vcmp.eq.f32.partialorder %v652, 8.507059e+37
    %v654 = vand.u32 %v642, 2147483648
    %v655 = vor.u32 1.1754944e-38, %v654
    %v656 = vsel %vm653, %v655, %v651
    %v657 = vmul.f32 1.0, %v656
    %v658 = vsel %vm242, %v638, %v657
    %v659 = vmul.f32 %v658, %v537
    %661 = vrot.lane.b32.xlu0 %v658, 64
    %v662 = vpop.permute.xlu0 %661
    %v664 = vmul.f32 %v658, %v662
    %666 = vrot.lane.b32.xlu0 %v664, 32
    %v667 = vpop.permute.xlu0 %666
    %v669 = vadd.f32 %v659, %v667
    %v670 = vtanh.pop %v669
    %672 = vrot.lane.b32.xlu0 %v670, 64
    %v673 = vpop.permute.xlu0 %672
    %v675 = vmul.f32 %v658, %v673
    %677 = vrot.lane.b32.xlu0 %v675, 32
    %v678 = vpop.permute.xlu0 %677
    %681 = vrot.lane.b32.xlu0 %v613, 64
    %v682 = vpop.permute.xlu0 %681
    %v684 = vsel %vm344, %v678, %v682
    %v686 = vsel %vm420, %v684, 0
    %688 = vmatpush.msra.mxu0 0.0
    %689 = vmatpush.msra.mxu0 0.0
    %690 = vmatpush.msra.mxu0 0.0
    %691 = vmatpush.msra.mxu0 0.0
    %692 = vmatpush.msra.mxu0 0.0
    %693 = vmatpush.msra.mxu0 0.0
    %694 = vmatpush.msra.mxu0 0.0
    %695 = vmatpush.msra.mxu0 0.0
    %696 = vmatpush.msra.mxu0 %v419
    %697 = vmatpush.msra.mxu0 %v418
    %698 = vmatpush.msra.mxu0 %v417
    %699 = vmatpush.msra.mxu0 %v416
    %700 = vmatpush.msra.mxu0 %v415
    %701 = vmatpush.msra.mxu0 %v414
    %702 = vmatpush.msra.mxu0 %v413
    %703 = vmatpush.msra.mxu0 %v412
    %704 = vmatmul.f32.gmra.mxu0 %v686
    %v705 = vpop.f32.mrf.mxu0
    %v706 = vadd.f32 %v236, %v705
    %707 = vdwg.mxu0
    %v708 = vtanh.pop %v706
    %v709 = vxor.u32 %v706, 2147483648
    %v710 = vmul.f32 %v709, 1.442695
    %v711 = vpow.pop %v710
    %v712 = vadd.f32 %v711, 1.0
    %v713 = vrcp.pop %v712
    %v714 = vmul.f32 %v712, %v713
    %v715 = vsub.f32 1.0, %v714
    %v716 = vmul.f32 %v713, %v715
    %v717 = vadd.f32 %v713, %v716
    %vm718 = vweird.f32 %v712
    %vm719 = vweird.f32 %v713
    %vm720 = vmor %vm718, %vm719
    %v721 = vsel %vm720, %v713, %v717
    %v722 = vand.u32 2147483647, %v712
    %vm723 = vcmp.eq.f32.partialorder %v722, 8.507059e+37
    %v724 = vand.u32 %v712, 2147483648
    %v725 = vor.u32 1.1754944e-38, %v724
    %v726 = vsel %vm723, %v725, %v721
    %v727 = vmul.f32 1.0, %v726
    %v728 = vsel %vm242, %v708, %v727
    %v729 = vmul.f32 %v728, %v607
    %731 = vrot.lane.b32.xlu0 %v728, 64
    %v732 = vpop.permute.xlu0 %731
    %v734 = vmul.f32 %v728, %v732
    %736 = vrot.lane.b32.xlu0 %v734, 32
    %v737 = vpop.permute.xlu0 %736
    %v739 = vadd.f32 %v729, %v737
    %v740 = vtanh.pop %v739
    %742 = vrot.lane.b32.xlu0 %v740, 64
    %v743 = vpop.permute.xlu0 %742
    %v745 = vmul.f32 %v728, %v743
    %v746 = vld [vmem:[#allocation2 + $0x18] sm:$0xff]
    %v747 = vld [vmem:[#allocation13] sm:$0xff]
    %v748 = vld [vmem:[#allocation13 + $0x8] sm:$0xff]
    %v749 = vld [vmem:[#allocation13 + $0x10] sm:$0xff]
    %v750 = vld [vmem:[#allocation13 + $0x18] sm:$0xff]
    %v751 = vld [vmem:[#allocation13 + $0x20] sm:$0xff]
    %v752 = vld [vmem:[#allocation13 + $0x28] sm:$0xff]
    %v753 = vld [vmem:[#allocation13 + $0x30] sm:$0xff]
    %v754 = vld [vmem:[#allocation13 + $0x38] sm:$0xff]
    %v755 = vld [vmem:[#allocation15] sm:$0x3]
    %v757 = vperm.slane %v755, 0
    %v758 = vperm.slane %v755, 1
    %762 = vrot.lane.b32.xlu0 %v745, 32
    %v763 = vpop.permute.xlu0 %762
    %v764 = vsel %vm344, %v763, 0
    %766 = vmatpush.msra.mxu0 0.0
    %767 = vmatpush.msra.mxu0 0.0
    %768 = vmatpush.msra.mxu0 0.0
    %769 = vmatpush.msra.mxu0 0.0
    %770 = vmatpush.msra.mxu0 0.0
    %771 = vmatpush.msra.mxu0 0.0
    %772 = vmatpush.msra.mxu0 0.0
    %773 = vmatpush.msra.mxu0 0.0
    %774 = vmatpush.msra.mxu0 0.0
    %775 = vmatpush.msra.mxu0 0.0
    %776 = vmatpush.msra.mxu0 0.0
    %777 = vmatpush.msra.mxu0 0.0
    %778 = vmatpush.msra.mxu0 %v753
    %779 = vmatpush.msra.mxu0 %v751
    %780 = vmatpush.msra.mxu0 %v749
    %781 = vmatpush.msra.mxu0 %v747
    %782 = vmatmul.f32.gmra.mxu0 %v764
    %v783 = vpop.f32.mrf.mxu0
    %v784 = vadd.f32 %v757, %v783
    %785 = vdwg.mxu0
    %786 = vmatpush.msra.mxu0 0.0
    %787 = vmatpush.msra.mxu0 0.0
    %788 = vmatpush.msra.mxu0 0.0
    %789 = vmatpush.msra.mxu0 0.0
    %790 = vmatpush.msra.mxu0 0.0
    %791 = vmatpush.msra.mxu0 0.0
    %792 = vmatpush.msra.mxu0 0.0
    %793 = vmatpush.msra.mxu0 0.0
    %794 = vmatpush.msra.mxu0 0.0
    %795 = vmatpush.msra.mxu0 0.0
    %796 = vmatpush.msra.mxu0 0.0
    %797 = vmatpush.msra.mxu0 0.0
    %798 = vmatpush.msra.mxu0 %v754
    %799 = vmatpush.msra.mxu0 %v752
    %800 = vmatpush.msra.mxu0 %v750
    %801 = vmatpush.msra.mxu0 %v748
    %802 = vmatmul.f32.gmra.mxu0 %v764
    %v803 = vpop.f32.mrf.mxu0
    %v804 = vadd.f32 %v758, %v803
    %805 = vdwg.mxu0
    %v806 = vld [vmem:[%s0 + $0x18] sm:$0xff]
    %v807 = vld [vmem:[%s10] sm:$0xff]
    %v808 = vld [vmem:[%s10 + $0x8] sm:$0xff]
    %v809 = vld [vmem:[%s10 + $0x10] sm:$0xff]
    %v810 = vld [vmem:[%s10 + $0x18] sm:$0xff]
    %v811 = vld [vmem:[#allocation16] sm:$0xff]
    %v812 = vld [vmem:[#allocation16 + $0x8] sm:$0xff]
    %v813 = vld [vmem:[#allocation16 + $0x10] sm:$0xff]
    %v814 = vld [vmem:[#allocation16 + $0x18] sm:$0xff]
    %v815 = vld [vmem:[#allocation16 + $0x20] sm:$0xff]
    %v816 = vld [vmem:[#allocation16 + $0x28] sm:$0xff]
    %v817 = vld [vmem:[#allocation16 + $0x30] sm:$0xff]
    %v818 = vld [vmem:[#allocation16 + $0x38] sm:$0xff]
    %819 = vmatpush.msra.mxu0 0.0
    %820 = vmatpush.msra.mxu0 0.0
    %821 = vmatpush.msra.mxu0 0.0
    %822 = vmatpush.msra.mxu0 0.0
    %823 = vmatpush.msra.mxu0 0.0
    %824 = vmatpush.msra.mxu0 0.0
    %825 = vmatpush.msra.mxu0 0.0
    %826 = vmatpush.msra.mxu0 0.0
    %827 = vmatpush.msra.mxu0 0.0
    %828 = vmatpush.msra.mxu0 0.0
    %829 = vmatpush.msra.mxu0 0.0
    %830 = vmatpush.msra.mxu0 0.0
    %831 = vmatpush.msra.mxu0 %v817
    %832 = vmatpush.msra.mxu0 %v815
    %833 = vmatpush.msra.mxu0 %v813
    %834 = vmatpush.msra.mxu0 %v811
    %835 = vmatmul.f32.gmra.mxu0 %v764
    %v836 = vpop.f32.mrf.mxu0
    %v837 = vadd.f32 0.0, %v836
    %838 = vdwg.mxu0
    %839 = vmatpush.msra.mxu0 0.0
    %840 = vmatpush.msra.mxu0 0.0
    %841 = vmatpush.msra.mxu0 0.0
    %842 = vmatpush.msra.mxu0 0.0
    %843 = vmatpush.msra.mxu0 0.0
    %844 = vmatpush.msra.mxu0 0.0
    %845 = vmatpush.msra.mxu0 0.0
    %846 = vmatpush.msra.mxu0 0.0
    %847 = vmatpush.msra.mxu0 0.0
    %848 = vmatpush.msra.mxu0 0.0
    %849 = vmatpush.msra.mxu0 0.0
    %850 = vmatpush.msra.mxu0 0.0
    %851 = vmatpush.msra.mxu0 %v818
    %852 = vmatpush.msra.mxu0 %v816
    %853 = vmatpush.msra.mxu0 %v814
    %854 = vmatpush.msra.mxu0 %v812
    %855 = vmatmul.f32.gmra.mxu0 %v764
    %v856 = vpop.f32.mrf.mxu0
    %v857 = vadd.f32 0.0, %v856
    %858 = vdwg.mxu0
    %v860 = vsel %vm258, %v806, 0
    %862 = vmatpush.msra.mxu0 0.0
    %863 = vmatpush.msra.mxu0 0.0
    %864 = vmatpush.msra.mxu0 0.0
    %865 = vmatpush.msra.mxu0 0.0
    %866 = vmatpush.msra.mxu0 0.0
    %867 = vmatpush.msra.mxu0 0.0
    %868 = vmatpush.msra.mxu0 0.0
    %869 = vmatpush.msra.mxu0 0.0
    %870 = vmatpush.msra.mxu0 0.0
    %871 = vmatpush.msra.mxu0 0.0
    %872 = vmatpush.msra.mxu0 0.0
    %873 = vmatpush.msra.mxu0 0.0
    %874 = vmatpush.msra.mxu0 0.0
    %875 = vmatpush.msra.mxu0 0.0
    %876 = vmatpush.msra.mxu0 %v809
    %877 = vmatpush.msra.mxu0 %v807
    %878 = vmatmul.f32.gmra.mxu0 %v860
    %v879 = vpop.f32.mrf.mxu0
    %v880 = vadd.f32 %v837, %v879
    %881 = vdwg.mxu0
    %882 = vmatpush.msra.mxu0 0.0
    %883 = vmatpush.msra.mxu0 0.0
    %884 = vmatpush.msra.mxu0 0.0
    %885 = vmatpush.msra.mxu0 0.0
    %886 = vmatpush.msra.mxu0 0.0
    %887 = vmatpush.msra.mxu0 0.0
    %888 = vmatpush.msra.mxu0 0.0
    %889 = vmatpush.msra.mxu0 0.0
    %890 = vmatpush.msra.mxu0 0.0
    %891 = vmatpush.msra.mxu0 0.0
    %892 = vmatpush.msra.mxu0 0.0
    %893 = vmatpush.msra.mxu0 0.0
    %894 = vmatpush.msra.mxu0 0.0
    %895 = vmatpush.msra.mxu0 0.0
    %896 = vmatpush.msra.mxu0 %v810
    %897 = vmatpush.msra.mxu0 %v808
    %898 = vmatmul.f32.gmra.mxu0 %v860
    %v899 = vpop.f32.mrf.mxu0
    %v900 = vadd.f32 %v857, %v899
    %901 = vdwg.mxu0
    %v902 = vld [vmem:[%s12] sm:$0x3]
    %v904 = vperm.slane %v902, 0
    %v905 = vperm.slane %v902, 1
    %v908 = vadd.f32 %v880, %v904
    %v909 = vadd.f32 %v900, %v905
    %v910 = vld [vmem:[#allocation4] sm:$0xff]
    %v911 = vmul.f32 %v910, %v909
    %v912 = vadd.f32 %v911, %v908
    %v913 = vld [vmem:[#allocation18] sm:$0xff]
    %v914 = vld [vmem:[#allocation18 + $0x8] sm:$0xff]
    %v915 = vld [vmem:[#allocation18 + $0x10] sm:$0xff]
    %v916 = vld [vmem:[#allocation18 + $0x18] sm:$0xff]
    %v917 = vld [vmem:[#allocation18 + $0x20] sm:$0xff]
    %v918 = vld [vmem:[#allocation18 + $0x28] sm:$0xff]
    %v919 = vld [vmem:[#allocation18 + $0x30] sm:$0xff]
    %v920 = vld [vmem:[#allocation18 + $0x38] sm:$0xff]
    %v921 = vld [vmem:[#allocation18 + $0x40] sm:$0xff]
    %v922 = vld [vmem:[#allocation18 + $0x48] sm:$0xff]
    %v923 = vld [vmem:[#allocation18 + $0x50] sm:$0xff]
    %v924 = vld [vmem:[#allocation18 + $0x58] sm:$0xff]
    %v925 = vld [vmem:[#allocation18 + $0x60] sm:$0xff]
    %v926 = vld [vmem:[#allocation18 + $0x68] sm:$0xff]
    %v927 = vld [vmem:[#allocation18 + $0x70] sm:$0xff]
    %v928 = vld [vmem:[#allocation18 + $0x78] sm:$0xff]
    %v929 = vld [vmem:[#allocation19] sm:$0xff]
    %v930 = vld [vmem:[#allocation19 + $0x8] sm:$0xff]
    %v931 = vld [vmem:[#allocation19 + $0x10] sm:$0xff]
    %v932 = vld [vmem:[#allocation19 + $0x18] sm:$0xff]
    %933 = vmatpush.msra.mxu0 0.0
    %934 = vmatpush.msra.mxu0 0.0
    %935 = vmatpush.msra.mxu0 0.0
    %936 = vmatpush.msra.mxu0 0.0
    %937 = vmatpush.msra.mxu0 0.0
    %938 = vmatpush.msra.mxu0 0.0
    %939 = vmatpush.msra.mxu0 0.0
    %940 = vmatpush.msra.mxu0 0.0
    %941 = vmatpush.msra.mxu0 0.0
    %942 = vmatpush.msra.mxu0 0.0
    %943 = vmatpush.msra.mxu0 0.0
    %944 = vmatpush.msra.mxu0 0.0
    %945 = vmatpush.msra.mxu0 %v932
    %946 = vmatpush.msra.mxu0 %v931
    %947 = vmatpush.msra.mxu0 %v930
    %948 = vmatpush.msra.mxu0 %v929
    %949 = vmatmul.f32.gmra.mxu0 %v764
    %v950 = vpop.f32.mrf.mxu0
    %v951 = vadd.f32 0.0, %v950
    %952 = vdwg.mxu0
    %953 = vmatpush.msra.mxu0 %v928
    %954 = vmatpush.msra.mxu0 %v927
    %955 = vmatpush.msra.mxu0 %v926
    %956 = vmatpush.msra.mxu0 %v925
    %957 = vmatpush.msra.mxu0 %v924
    %958 = vmatpush.msra.mxu0 %v923
    %959 = vmatpush.msra.mxu0 %v922
    %960 = vmatpush.msra.mxu0 %v921
    %961 = vmatpush.msra.mxu0 %v920
    %962 = vmatpush.msra.mxu0 %v919
    %963 = vmatpush.msra.mxu0 %v918
    %964 = vmatpush.msra.mxu0 %v917
    %965 = vmatpush.msra.mxu0 %v916
    %966 = vmatpush.msra.mxu0 %v915
    %967 = vmatpush.msra.mxu0 %v914
    %968 = vmatpush.msra.mxu0 %v913
    %969 = vmatmul.f32.gmra.mxu0 %v912
    %v970 = vpop.f32.mrf.mxu0
    %v971 = vadd.f32 %v951, %v970
    %972 = vdwg.mxu0
    %v973 = vld [vmem:[%s15] sm:$0x1]
    %v975 = vperm.slane %v973, 0
    %v977 = vadd.f32 %v971, %v975
    %vm978 = vcmp.lt.s32.totalorder %v239, 24
    %v979 = vsel %vm978, %v977, -1e+30
    %980 = vmax.xlane.f32.xlu0 %v979
    %v981 = vpop.xlane.xlu0 %980
    %v982 = vsub.f32 %v979, %v981
    %v983 = vmul.f32 %v982, 1.442695
    %v984 = vpow.pop %v983
    %985 = vadd.xlane.f32.xlu0 %v984
    %v986 = vpop.xlane.xlu0 %985
    %v987 = vlog2.pop %v986
    %v988 = vmul.f32 %v987, 0.6931472
    %v989 = vsub.f32 %v982, %v988
    %990 = vst [vmem:[#allocation22] sm:$0xff] %v784
    %991 = vst [vmem:[#allocation23] sm:$0xff] %v804
    %992 = vst [vmem:[#allocation25] sm:$0xff] %v908
    %993 = vst [vmem:[#allocation26] sm:$0xff] %v909
    %994 = vst [vmem:[#allocation28] sm:$0xff] %v989
    %v995 = vld [vmem:[#allocation9] sm:$0xff]
    %v996 = vld [vmem:[#allocation9 + $0x8] sm:$0xff]
    %v997 = vld [vmem:[#allocation9 + $0x10] sm:$0xff]
    %v998 = vld [vmem:[#allocation9 + $0x18] sm:$0xff]
    %v999 = vld [vmem:[#allocation9 + $0x20] sm:$0xff]
    %v1000 = vld [vmem:[#allocation9 + $0x28] sm:$0xff]
    %v1001 = vld [vmem:[#allocation9 + $0x30] sm:$0xff]
    %v1002 = vld [vmem:[#allocation9 + $0x38] sm:$0xff]
    %v1003 = vld [vmem:[#allocation9 + $0x40] sm:$0xff]
    %v1004 = vld [vmem:[#allocation9 + $0x48] sm:$0xff]
    %v1005 = vld [vmem:[#allocation9 + $0x50] sm:$0xff]
    %v1006 = vld [vmem:[#allocation9 + $0x58] sm:$0xff]
    %v1007 = vld [vmem:[#allocation9 + $0x60] sm:$0xff]
    %v1008 = vld [vmem:[#allocation9 + $0x68] sm:$0xff]
    %v1009 = vld [vmem:[#allocation9 + $0x70] sm:$0xff]
    %v1010 = vld [vmem:[#allocation9 + $0x78] sm:$0xff]
    %1011 = vmatpush.msra.mxu0 %v1010
    %1012 = vmatpush.msra.mxu0 %v1009
    %1013 = vmatpush.msra.mxu0 %v1008
    %1014 = vmatpush.msra.mxu0 %v1007
    %1015 = vmatpush.msra.mxu0 %v1006
    %1016 = vmatpush.msra.mxu0 %v1005
    %1017 = vmatpush.msra.mxu0 %v1004
    %1018 = vmatpush.msra.mxu0 %v1003
    %1019 = vmatpush.msra.mxu0 %v1002
    %1020 = vmatpush.msra.mxu0 %v1001
    %1021 = vmatpush.msra.mxu0 %v1000
    %1022 = vmatpush.msra.mxu0 %v999
    %1023 = vmatpush.msra.mxu0 %v998
    %1024 = vmatpush.msra.mxu0 %v997
    %1025 = vmatpush.msra.mxu0 %v996
    %1026 = vmatpush.msra.mxu0 %v995
    %1027 = vmatmul.f32.gmra.mxu0 %v912
    %v1028 = vpop.f32.mrf.mxu0
    %v1029 = vadd.f32 0.0, %v1028
    %1030 = vdwg.mxu0
    %v1031 = vadd.f32 %v746, %v1029
    %v1032 = vld [vmem:[#allocation10] sm:$0xff]
    %v1033 = vld [vmem:[#allocation10 + $0x8] sm:$0xff]
    %v1034 = vld [vmem:[#allocation10 + $0x10] sm:$0xff]
    %v1035 = vld [vmem:[#allocation10 + $0x18] sm:$0xff]
    %v1036 = vsel %vm344, %v678, 0
    %1038 = vmatpush.msra.mxu0 0.0
    %1039 = vmatpush.msra.mxu0 0.0
    %1040 = vmatpush.msra.mxu0 0.0
    %1041 = vmatpush.msra.mxu0 0.0
    %1042 = vmatpush.msra.mxu0 0.0
    %1043 = vmatpush.msra.mxu0 0.0
    %1044 = vmatpush.msra.mxu0 0.0
    %1045 = vmatpush.msra.mxu0 0.0
    %1046 = vmatpush.msra.mxu0 0.0
    %1047 = vmatpush.msra.mxu0 0.0
    %1048 = vmatpush.msra.mxu0 0.0
    %1049 = vmatpush.msra.mxu0 0.0
    %1050 = vmatpush.msra.mxu0 %v1035
    %1051 = vmatpush.msra.mxu0 %v1034
    %1052 = vmatpush.msra.mxu0 %v1033
    %1053 = vmatpush.msra.mxu0 %v1032
    %1054 = vmatmul.f32.gmra.mxu0 %v1036
    %v1055 = vpop.f32.mrf.mxu0
    %v1056 = vadd.f32 0.0, %v1055
    %1057 = vdwg.mxu0
    %v1058 = vadd.f32 %v1031, %v1056
    %v1059 = vtanh.pop %v1058
    %v1060 = vxor.u32 %v1058, 2147483648
    %v1061 = vmul.f32 %v1060, 1.442695
    %v1062 = vpow.pop %v1061
    %v1063 = vadd.f32 %v1062, 1.0
    %v1064 = vrcp.pop %v1063
    %v1065 = vmul.f32 %v1063, %v1064
    %v1066 = vsub.f32 1.0, %v1065
    %v1067 = vmul.f32 %v1064, %v1066
    %v1068 = vadd.f32 %v1064, %v1067
    %vm1069 = vweird.f32 %v1063
    %vm1070 = vweird.f32 %v1064
    %vm1071 = vmor %vm1069, %vm1070
    %v1072 = vsel %vm1071, %v1064, %v1068
    %v1073 = vand.u32 2147483647, %v1063
    %vm1074 = vcmp.eq.f32.partialorder %v1073, 8.507059e+37
    %v1075 = vand.u32 %v1063, 2147483648
    %v1076 = vor.u32 1.1754944e-38, %v1075
    %v1077 = vsel %vm1074, %v1076, %v1072
    %v1078 = vmul.f32 1.0, %v1077
    %v1079 = vsel %vm242, %v1059, %v1078
    %v1080 = vmul.f32 %v1079, %v669
    %1082 = vrot.lane.b32.xlu0 %v1079, 64
    %v1083 = vpop.permute.xlu0 %1082
    %v1085 = vmul.f32 %v1079, %v1083
    %1087 = vrot.lane.b32.xlu0 %v1085, 32
    %v1088 = vpop.permute.xlu0 %1087
    %v1090 = vadd.f32 %v1080, %v1088
    %v1091 = vtanh.pop %v1090
    %1093 = vrot.lane.b32.xlu0 %v1091, 64
    %v1094 = vpop.permute.xlu0 %1093
    %v1096 = vmul.f32 %v1079, %v1094
    %1098 = vrot.lane.b32.xlu0 %v1096, 32
    %v1099 = vpop.permute.xlu0 %1098
    %1101 = vrot.lane.b32.xlu0 %v745, 64
    %v1102 = vpop.permute.xlu0 %1101
    %v1104 = vsel %vm344, %v1099, %v1102
    %v1105 = vld [vmem:[%s6] sm:$0xff]
    %v1106 = vld [vmem:[%s6 + $0x8] sm:$0xff]
    %v1107 = vld [vmem:[%s6 + $0x10] sm:$0xff]
    %v1108 = vld [vmem:[%s6 + $0x18] sm:$0xff]
    %v1109 = vld [vmem:[%s6 + $0x20] sm:$0xff]
    %v1110 = vld [vmem:[%s6 + $0x28] sm:$0xff]
    %v1111 = vld [vmem:[%s6 + $0x30] sm:$0xff]
    %v1112 = vld [vmem:[%s6 + $0x38] sm:$0xff]
    %v1114 = vsel %vm420, %v1104, 0
    %1116 = vmatpush.msra.mxu0 0.0
    %1117 = vmatpush.msra.mxu0 0.0
    %1118 = vmatpush.msra.mxu0 0.0
    %1119 = vmatpush.msra.mxu0 0.0
    %1120 = vmatpush.msra.mxu0 0.0
    %1121 = vmatpush.msra.mxu0 0.0
    %1122 = vmatpush.msra.mxu0 0.0
    %1123 = vmatpush.msra.mxu0 0.0
    %1124 = vmatpush.msra.mxu0 %v1112
    %1125 = vmatpush.msra.mxu0 %v1111
    %1126 = vmatpush.msra.mxu0 %v1110
    %1127 = vmatpush.msra.mxu0 %v1109
    %1128 = vmatpush.msra.mxu0 %v1108
    %1129 = vmatpush.msra.mxu0 %v1107
    %1130 = vmatpush.msra.mxu0 %v1106
    %1131 = vmatpush.msra.mxu0 %v1105
    %1132 = vmatmul.f32.gmra.mxu0 %v1114
    %v1133 = vpop.f32.mrf.mxu0
    %v1134 = vadd.f32 %v236, %v1133
    %1135 = vdwg.mxu0
    %v1136 = vtanh.pop %v1134
    %v1137 = vxor.u32 %v1134, 2147483648
    %v1138 = vmul.f32 %v1137, 1.442695
    %v1139 = vpow.pop %v1138
    %v1140 = vadd.f32 %v1139, 1.0
    %v1141 = vrcp.pop %v1140
    %v1142 = vmul.f32 %v1140, %v1141
    %v1143 = vsub.f32 1.0, %v1142
    %v1144 = vmul.f32 %v1141, %v1143
    %v1145 = vadd.f32 %v1141, %v1144
    %vm1146 = vweird.f32 %v1140
    %vm1147 = vweird.f32 %v1141
    %vm1148 = vmor %vm1146, %vm1147
    %v1149 = vsel %vm1148, %v1141, %v1145
    %v1150 = vand.u32 2147483647, %v1140
    %vm1151 = vcmp.eq.f32.partialorder %v1150, 8.507059e+37
    %v1152 = vand.u32 %v1140, 2147483648
    %v1153 = vor.u32 1.1754944e-38, %v1152
    %v1154 = vsel %vm1151, %v1153, %v1149
    %v1155 = vmul.f32 1.0, %v1154
    %v1156 = vsel %vm242, %v1136, %v1155
    %v1157 = vmul.f32 %v1156, %v739
    %1159 = vrot.lane.b32.xlu0 %v1156, 64
    %v1160 = vpop.permute.xlu0 %1159
    %v1162 = vmul.f32 %v1156, %v1160
    %1164 = vrot.lane.b32.xlu0 %v1162, 32
    %v1165 = vpop.permute.xlu0 %1164
    %v1167 = vadd.f32 %v1157, %v1165
    %v1168 = vtanh.pop %v1167
    %1170 = vrot.lane.b32.xlu0 %v1168, 64
    %v1171 = vpop.permute.xlu0 %1170
    %v1173 = vmul.f32 %v1156, %v1171
    %v1174 = vld [vmem:[#allocation2 + $0x20] sm:$0xff]
    %v1175 = vsel %vm344, %v1099, 0
    %1177 = vmatpush.msra.mxu0 0.0
    %1178 = vmatpush.msra.mxu0 0.0
    %1179 = vmatpush.msra.mxu0 0.0
    %1180 = vmatpush.msra.mxu0 0.0
    %1181 = vmatpush.msra.mxu0 0.0
    %1182 = vmatpush.msra.mxu0 0.0
    %1183 = vmatpush.msra.mxu0 0.0
    %1184 = vmatpush.msra.mxu0 0.0
    %1185 = vmatpush.msra.mxu0 0.0
    %1186 = vmatpush.msra.mxu0 0.0
    %1187 = vmatpush.msra.mxu0 0.0
    %1188 = vmatpush.msra.mxu0 0.0
    %1189 = vmatpush.msra.mxu0 %v1035
    %1190 = vmatpush.msra.mxu0 %v1034
    %1191 = vmatpush.msra.mxu0 %v1033
    %1192 = vmatpush.msra.mxu0 %v1032
    %1193 = vmatmul.f32.gmra.mxu0 %v1175
    %v1194 = vpop.f32.mrf.mxu0
    %v1195 = vadd.f32 0.0, %v1194
    %1196 = vdwg.mxu0
    %v1197 = vadd.f32 %v1174, %v1195
    %v1198 = vtanh.pop %v1197
    %v1199 = vxor.u32 %v1197, 2147483648
    %v1200 = vmul.f32 %v1199, 1.442695
    %v1201 = vpow.pop %v1200
    %v1202 = vadd.f32 %v1201, 1.0
    %v1203 = vrcp.pop %v1202
    %v1204 = vmul.f32 %v1202, %v1203
    %v1205 = vsub.f32 1.0, %v1204
    %v1206 = vmul.f32 %v1203, %v1205
    %v1207 = vadd.f32 %v1203, %v1206
    %vm1208 = vweird.f32 %v1202
    %vm1209 = vweird.f32 %v1203
    %vm1210 = vmor %vm1208, %vm1209
    %v1211 = vsel %vm1210, %v1203, %v1207
    %v1212 = vand.u32 2147483647, %v1202
    %vm1213 = vcmp.eq.f32.partialorder %v1212, 8.507059e+37
    %v1214 = vand.u32 %v1202, 2147483648
    %v1215 = vor.u32 1.1754944e-38, %v1214
    %v1216 = vsel %vm1213, %v1215, %v1211
    %v1217 = vmul.f32 1.0, %v1216
    %v1218 = vsel %vm242, %v1198, %v1217
    %v1219 = vmul.f32 %v1218, %v1090
    %1221 = vrot.lane.b32.xlu0 %v1218, 64
    %v1222 = vpop.permute.xlu0 %1221
    %v1224 = vmul.f32 %v1218, %v1222
    %1226 = vrot.lane.b32.xlu0 %v1224, 32
    %v1227 = vpop.permute.xlu0 %1226
    %v1229 = vadd.f32 %v1219, %v1227
    %v1230 = vtanh.pop %v1229
    %1232 = vrot.lane.b32.xlu0 %v1230, 64
    %v1233 = vpop.permute.xlu0 %1232
    %v1235 = vmul.f32 %v1218, %v1233
    %1237 = vrot.lane.b32.xlu0 %v1235, 32
    %v1238 = vpop.permute.xlu0 %1237
    %1241 = vrot.lane.b32.xlu0 %v1173, 64
    %v1242 = vpop.permute.xlu0 %1241
    %v1244 = vsel %vm344, %v1238, %v1242
    %v1246 = vsel %vm420, %v1244, 0
    %1248 = vmatpush.msra.mxu0 0.0
    %1249 = vmatpush.msra.mxu0 0.0
    %1250 = vmatpush.msra.mxu0 0.0
    %1251 = vmatpush.msra.mxu0 0.0
    %1252 = vmatpush.msra.mxu0 0.0
    %1253 = vmatpush.msra.mxu0 0.0
    %1254 = vmatpush.msra.mxu0 0.0
    %1255 = vmatpush.msra.mxu0 0.0
    %1256 = vmatpush.msra.mxu0 %v1112
    %1257 = vmatpush.msra.mxu0 %v1111
    %1258 = vmatpush.msra.mxu0 %v1110
    %1259 = vmatpush.msra.mxu0 %v1109
    %1260 = vmatpush.msra.mxu0 %v1108
    %1261 = vmatpush.msra.mxu0 %v1107
    %1262 = vmatpush.msra.mxu0 %v1106
    %1263 = vmatpush.msra.mxu0 %v1105
    %1264 = vmatmul.f32.gmra.mxu0 %v1246
    %v1265 = vpop.f32.mrf.mxu0
    %v1266 = vadd.f32 %v236, %v1265
    %1267 = vdwg.mxu0
    %v1268 = vtanh.pop %v1266
    %v1269 = vxor.u32 %v1266, 2147483648
    %v1270 = vmul.f32 %v1269, 1.442695
    %v1271 = vpow.pop %v1270
    %v1272 = vadd.f32 %v1271, 1.0
    %v1273 = vrcp.pop %v1272
    %v1274 = vmul.f32 %v1272, %v1273
    %v1275 = vsub.f32 1.0, %v1274
    %v1276 = vmul.f32 %v1273, %v1275
    %v1277 = vadd.f32 %v1273, %v1276
    %vm1278 = vweird.f32 %v1272
    %vm1279 = vweird.f32 %v1273
    %vm1280 = vmor %vm1278, %vm1279
    %v1281 = vsel %vm1280, %v1273, %v1277
    %v1282 = vand.u32 2147483647, %v1272
    %vm1283 = vcmp.eq.f32.partialorder %v1282, 8.507059e+37
    %v1284 = vand.u32 %v1272, 2147483648
    %v1285 = vor.u32 1.1754944e-38, %v1284
    %v1286 = vsel %vm1283, %v1285, %v1281
    %v1287 = vmul.f32 1.0, %v1286
    %v1288 = vsel %vm242, %v1268, %v1287
    %v1289 = vmul.f32 %v1288, %v1167
    %1291 = vrot.lane.b32.xlu0 %v1288, 64
    %v1292 = vpop.permute.xlu0 %1291
    %v1294 = vmul.f32 %v1288, %v1292
    %1296 = vrot.lane.b32.xlu0 %v1294, 32
    %v1297 = vpop.permute.xlu0 %1296
    %v1299 = vadd.f32 %v1289, %v1297
    %v1300 = vtanh.pop %v1299
    %1302 = vrot.lane.b32.xlu0 %v1300, 64
    %v1303 = vpop.permute.xlu0 %1302
    %v1305 = vmul.f32 %v1288, %v1303
    %1307 = vrot.lane.b32.xlu0 %v1305, 32
    %v1308 = vpop.permute.xlu0 %1307
    %1310 = vst.msk [vmem:[#allocation3] sm:$0xff] %vm344, %v1308
    %v1311 = vld [vmem:[#allocation2 + $0x28] sm:$0xff]
    %v1312 = vld [vmem:[#allocation10] sm:$0xff]
    %v1313 = vld [vmem:[#allocation10 + $0x8] sm:$0xff]
    %v1314 = vld [vmem:[#allocation10 + $0x10] sm:$0xff]
    %v1315 = vld [vmem:[#allocation10 + $0x18] sm:$0xff]
    %v1316 = vsel %vm344, %v1238, 0
    %1318 = vmatpush.msra.mxu0 0.0
    %1319 = vmatpush.msra.mxu0 0.0
    %1320 = vmatpush.msra.mxu0 0.0
    %1321 = vmatpush.msra.mxu0 0.0
    %1322 = vmatpush.msra.mxu0 0.0
    %1323 = vmatpush.msra.mxu0 0.0
    %1324 = vmatpush.msra.mxu0 0.0
    %1325 = vmatpush.msra.mxu0 0.0
    %1326 = vmatpush.msra.mxu0 0.0
    %1327 = vmatpush.msra.mxu0 0.0
    %1328 = vmatpush.msra.mxu0 0.0
    %1329 = vmatpush.msra.mxu0 0.0
    %1330 = vmatpush.msra.mxu0 %v1315
    %1331 = vmatpush.msra.mxu0 %v1314
    %1332 = vmatpush.msra.mxu0 %v1313
    %1333 = vmatpush.msra.mxu0 %v1312
    %1334 = vmatmul.f32.gmra.mxu0 %v1316
    %v1335 = vpop.f32.mrf.mxu0
    %v1336 = vadd.f32 0.0, %v1335
    %1337 = vdwg.mxu0
    %v1338 = vadd.f32 %v1311, %v1336
    %v1339 = vtanh.pop %v1338
    %v1340 = vxor.u32 %v1338, 2147483648
    %v1341 = vmul.f32 %v1340, 1.442695
    %v1342 = vpow.pop %v1341
    %v1343 = vadd.f32 %v1342, 1.0
    %v1344 = vrcp.pop %v1343
    %v1345 = vmul.f32 %v1343, %v1344
    %v1346 = vsub.f32 1.0, %v1345
    %v1347 = vmul.f32 %v1344, %v1346
    %v1348 = vadd.f32 %v1344, %v1347
    %vm1349 = vweird.f32 %v1343
    %vm1350 = vweird.f32 %v1344
    %vm1351 = vmor %vm1349, %vm1350
    %v1352 = vsel %vm1351, %v1344, %v1348
    %v1353 = vand.u32 2147483647, %v1343
    %vm1354 = vcmp.eq.f32.partialorder %v1353, 8.507059e+37
    %v1355 = vand.u32 %v1343, 2147483648
    %v1356 = vor.u32 1.1754944e-38, %v1355
    %v1357 = vsel %vm1354, %v1356, %v1352
    %v1358 = vmul.f32 1.0, %v1357
    %v1359 = vsel %vm242, %v1339, %v1358
    %v1360 = vmul.f32 %v1359, %v1229
    %1362 = vrot.lane.b32.xlu0 %v1359, 64
    %v1363 = vpop.permute.xlu0 %1362
    %v1365 = vmul.f32 %v1359, %v1363
    %1367 = vrot.lane.b32.xlu0 %v1365, 32
    %v1368 = vpop.permute.xlu0 %1367
    %v1370 = vadd.f32 %v1360, %v1368
    %v1371 = vtanh.pop %v1370
    %1373 = vrot.lane.b32.xlu0 %v1371, 64
    %v1374 = vpop.permute.xlu0 %1373
    %v1376 = vmul.f32 %v1359, %v1374
    %1378 = vrot.lane.b32.xlu0 %v1376, 32
    %v1379 = vpop.permute.xlu0 %1378
    %1381 = vrot.lane.b32.xlu0 %v1305, 64
    %v1382 = vpop.permute.xlu0 %1381
    %v1384 = vsel %vm344, %v1379, %v1382
    %v1385 = vld [vmem:[%s6] sm:$0xff]
    %v1386 = vld [vmem:[%s6 + $0x8] sm:$0xff]
    %v1387 = vld [vmem:[%s6 + $0x10] sm:$0xff]
    %v1388 = vld [vmem:[%s6 + $0x18] sm:$0xff]
    %v1389 = vld [vmem:[%s6 + $0x20] sm:$0xff]
    %v1390 = vld [vmem:[%s6 + $0x28] sm:$0xff]
    %v1391 = vld [vmem:[%s6 + $0x30] sm:$0xff]
    %v1392 = vld [vmem:[%s6 + $0x38] sm:$0xff]
    %v1394 = vsel %vm420, %v1384, 0
    %1396 = vmatpush.msra.mxu0 0.0
    %1397 = vmatpush.msra.mxu0 0.0
    %1398 = vmatpush.msra.mxu0 0.0
    %1399 = vmatpush.msra.mxu0 0.0
    %1400 = vmatpush.msra.mxu0 0.0
    %1401 = vmatpush.msra.mxu0 0.0
    %1402 = vmatpush.msra.mxu0 0.0
    %1403 = vmatpush.msra.mxu0 0.0
    %1404 = vmatpush.msra.mxu0 %v1392
    %1405 = vmatpush.msra.mxu0 %v1391
    %1406 = vmatpush.msra.mxu0 %v1390
    %1407 = vmatpush.msra.mxu0 %v1389
    %1408 = vmatpush.msra.mxu0 %v1388
    %1409 = vmatpush.msra.mxu0 %v1387
    %1410 = vmatpush.msra.mxu0 %v1386
    %1411 = vmatpush.msra.mxu0 %v1385
    %1412 = vmatmul.f32.gmra.mxu0 %v1394
    %v1413 = vpop.f32.mrf.mxu0
    %v1414 = vadd.f32 %v236, %v1413
    %1415 = vdwg.mxu0
    %v1416 = vtanh.pop %v1414
    %v1417 = vxor.u32 %v1414, 2147483648
    %v1418 = vmul.f32 %v1417, 1.442695
    %v1419 = vpow.pop %v1418
    %v1420 = vadd.f32 %v1419, 1.0
    %v1421 = vrcp.pop %v1420
    %v1422 = vmul.f32 %v1420, %v1421
    %v1423 = vsub.f32 1.0, %v1422
    %v1424 = vmul.f32 %v1421, %v1423
    %v1425 = vadd.f32 %v1421, %v1424
    %vm1426 = vweird.f32 %v1420
    %vm1427 = vweird.f32 %v1421
    %vm1428 = vmor %vm1426, %vm1427
    %v1429 = vsel %vm1428, %v1421, %v1425
    %v1430 = vand.u32 2147483647, %v1420
    %vm1431 = vcmp.eq.f32.partialorder %v1430, 8.507059e+37
    %v1432 = vand.u32 %v1420, 2147483648
    %v1433 = vor.u32 1.1754944e-38, %v1432
    %v1434 = vsel %vm1431, %v1433, %v1429
    %v1435 = vmul.f32 1.0, %v1434
    %v1436 = vsel %vm242, %v1416, %v1435
    %v1437 = vmul.f32 %v1436, %v1299
    %1439 = vrot.lane.b32.xlu0 %v1436, 64
    %v1440 = vpop.permute.xlu0 %1439
    %v1442 = vmul.f32 %v1436, %v1440
    %1444 = vrot.lane.b32.xlu0 %v1442, 32
    %v1445 = vpop.permute.xlu0 %1444
    %v1447 = vadd.f32 %v1437, %v1445
    %v1448 = vtanh.pop %v1447
    %1450 = vrot.lane.b32.xlu0 %v1448, 64
    %v1451 = vpop.permute.xlu0 %1450
    %v1453 = vmul.f32 %v1436, %v1451
    %1455 = vrot.lane.b32.xlu0 %v1453, 32
    %v1456 = vpop.permute.xlu0 %1455
    %1458 = vst.msk [vmem:[#allocation3 + $0x8] sm:$0xff] %vm344, %v1456
    %v1459 = vld [vmem:[#allocation2 + $0x30] sm:$0xff]
    %v1460 = vld [vmem:[#allocation10] sm:$0xff]
    %v1461 = vld [vmem:[#allocation10 + $0x8] sm:$0xff]
    %v1462 = vld [vmem:[#allocation10 + $0x10] sm:$0xff]
    %v1463 = vld [vmem:[#allocation10 + $0x18] sm:$0xff]
    %v1464 = vsel %vm344, %v1379, 0
    %1466 = vmatpush.msra.mxu0 0.0
    %1467 = vmatpush.msra.mxu0 0.0
    %1468 = vmatpush.msra.mxu0 0.0
    %1469 = vmatpush.msra.mxu0 0.0
    %1470 = vmatpush.msra.mxu0 0.0
    %1471 = vmatpush.msra.mxu0 0.0
    %1472 = vmatpush.msra.mxu0 0.0
    %1473 = vmatpush.msra.mxu0 0.0
    %1474 = vmatpush.msra.mxu0 0.0
    %1475 = vmatpush.msra.mxu0 0.0
    %1476 = vmatpush.msra.mxu0 0.0
    %1477 = vmatpush.msra.mxu0 0.0
    %1478 = vmatpush.msra.mxu0 %v1463
    %1479 = vmatpush.msra.mxu0 %v1462
    %1480 = vmatpush.msra.mxu0 %v1461
    %1481 = vmatpush.msra.mxu0 %v1460
    %1482 = vmatmul.f32.gmra.mxu0 %v1464
    %v1483 = vpop.f32.mrf.mxu0
    %v1484 = vadd.f32 0.0, %v1483
    %1485 = vdwg.mxu0
    %v1486 = vadd.f32 %v1459, %v1484
    %v1487 = vtanh.pop %v1486
    %v1488 = vxor.u32 %v1486, 2147483648
    %v1489 = vmul.f32 %v1488, 1.442695
    %v1490 = vpow.pop %v1489
    %v1491 = vadd.f32 %v1490, 1.0
    %v1492 = vrcp.pop %v1491
    %v1493 = vmul.f32 %v1491, %v1492
    %v1494 = vsub.f32 1.0, %v1493
    %v1495 = vmul.f32 %v1492, %v1494
    %v1496 = vadd.f32 %v1492, %v1495
    %vm1497 = vweird.f32 %v1491
    %vm1498 = vweird.f32 %v1492
    %vm1499 = vmor %vm1497, %vm1498
    %v1500 = vsel %vm1499, %v1492, %v1496
    %v1501 = vand.u32 2147483647, %v1491
    %vm1502 = vcmp.eq.f32.partialorder %v1501, 8.507059e+37
    %v1503 = vand.u32 %v1491, 2147483648
    %v1504 = vor.u32 1.1754944e-38, %v1503
    %v1505 = vsel %vm1502, %v1504, %v1500
    %v1506 = vmul.f32 1.0, %v1505
    %v1507 = vsel %vm242, %v1487, %v1506
    %v1508 = vmul.f32 %v1507, %v1370
    %1510 = vrot.lane.b32.xlu0 %v1507, 64
    %v1511 = vpop.permute.xlu0 %1510
    %v1513 = vmul.f32 %v1507, %v1511
    %1515 = vrot.lane.b32.xlu0 %v1513, 32
    %v1516 = vpop.permute.xlu0 %1515
    %v1518 = vadd.f32 %v1508, %v1516
    %v1519 = vtanh.pop %v1518
    %1521 = vrot.lane.b32.xlu0 %v1519, 64
    %v1522 = vpop.permute.xlu0 %1521
    %v1524 = vmul.f32 %v1507, %v1522
    %1526 = vrot.lane.b32.xlu0 %v1524, 32
    %v1527 = vpop.permute.xlu0 %1526
    %1529 = vrot.lane.b32.xlu0 %v1453, 64
    %v1530 = vpop.permute.xlu0 %1529
    %v1532 = vsel %vm344, %v1527, %v1530
    %v1533 = vld [vmem:[%s6] sm:$0xff]
    %v1534 = vld [vmem:[%s6 + $0x8] sm:$0xff]
    %v1535 = vld [vmem:[%s6 + $0x10] sm:$0xff]
    %v1536 = vld [vmem:[%s6 + $0x18] sm:$0xff]
    %v1537 = vld [vmem:[%s6 + $0x20] sm:$0xff]
    %v1538 = vld [vmem:[%s6 + $0x28] sm:$0xff]
    %v1539 = vld [vmem:[%s6 + $0x30] sm:$0xff]
    %v1540 = vld [vmem:[%s6 + $0x38] sm:$0xff]
    %v1542 = vsel %vm420, %v1532, 0
    %1544 = vmatpush.msra.mxu0 0.0
    %1545 = vmatpush.msra.mxu0 0.0
    %1546 = vmatpush.msra.mxu0 0.0
    %1547 = vmatpush.msra.mxu0 0.0
    %1548 = vmatpush.msra.mxu0 0.0
    %1549 = vmatpush.msra.mxu0 0.0
    %1550 = vmatpush.msra.mxu0 0.0
    %1551 = vmatpush.msra.mxu0 0.0
    %1552 = vmatpush.msra.mxu0 %v1540
    %1553 = vmatpush.msra.mxu0 %v1539
    %1554 = vmatpush.msra.mxu0 %v1538
    %1555 = vmatpush.msra.mxu0 %v1537
    %1556 = vmatpush.msra.mxu0 %v1536
    %1557 = vmatpush.msra.mxu0 %v1535
    %1558 = vmatpush.msra.mxu0 %v1534
    %1559 = vmatpush.msra.mxu0 %v1533
    %1560 = vmatmul.f32.gmra.mxu0 %v1542
    %v1561 = vpop.f32.mrf.mxu0
    %v1562 = vadd.f32 %v236, %v1561
    %1563 = vdwg.mxu0
    %v1564 = vtanh.pop %v1562
    %v1565 = vxor.u32 %v1562, 2147483648
    %v1566 = vmul.f32 %v1565, 1.442695
    %v1567 = vpow.pop %v1566
    %v1568 = vadd.f32 %v1567, 1.0
    %v1569 = vrcp.pop %v1568
    %v1570 = vmul.f32 %v1568, %v1569
    %v1571 = vsub.f32 1.0, %v1570
    %v1572 = vmul.f32 %v1569, %v1571
    %v1573 = vadd.f32 %v1569, %v1572
    %vm1574 = vweird.f32 %v1568
    %vm1575 = vweird.f32 %v1569
    %vm1576 = vmor %vm1574, %vm1575
    %v1577 = vsel %vm1576, %v1569, %v1573
    %v1578 = vand.u32 2147483647, %v1568
    %vm1579 = vcmp.eq.f32.partialorder %v1578, 8.507059e+37
    %v1580 = vand.u32 %v1568, 2147483648
    %v1581 = vor.u32 1.1754944e-38, %v1580
    %v1582 = vsel %vm1579, %v1581, %v1577
    %v1583 = vmul.f32 1.0, %v1582
    %v1584 = vsel %vm242, %v1564, %v1583
    %v1585 = vmul.f32 %v1584, %v1447
    %1587 = vrot.lane.b32.xlu0 %v1584, 64
    %v1588 = vpop.permute.xlu0 %1587
    %v1590 = vmul.f32 %v1584, %v1588
    %1592 = vrot.lane.b32.xlu0 %v1590, 32
    %v1593 = vpop.permute.xlu0 %1592
    %v1595 = vadd.f32 %v1585, %v1593
    %v1596 = vtanh.pop %v1595
    %1598 = vrot.lane.b32.xlu0 %v1596, 64
    %v1599 = vpop.permute.xlu0 %1598
    %v1601 = vmul.f32 %v1584, %v1599
    %1603 = vrot.lane.b32.xlu0 %v1601, 32
    %v1604 = vpop.permute.xlu0 %1603
    %1606 = vst.msk [vmem:[#allocation3 + $0x10] sm:$0xff] %vm344, %v1604
    %v1607 = vld [vmem:[#allocation2 + $0x38] sm:$0xff]
    %v1608 = vld [vmem:[#allocation10] sm:$0xff]
    %v1609 = vld [vmem:[#allocation10 + $0x8] sm:$0xff]
    %v1610 = vld [vmem:[#allocation10 + $0x10] sm:$0xff]
    %v1611 = vld [vmem:[#allocation10 + $0x18] sm:$0xff]
    %v1612 = vsel %vm344, %v1527, 0
    %1614 = vmatpush.msra.mxu0 0.0
    %1615 = vmatpush.msra.mxu0 0.0
    %1616 = vmatpush.msra.mxu0 0.0
    %1617 = vmatpush.msra.mxu0 0.0
    %1618 = vmatpush.msra.mxu0 0.0
    %1619 = vmatpush.msra.mxu0 0.0
    %1620 = vmatpush.msra.mxu0 0.0
    %1621 = vmatpush.msra.mxu0 0.0
    %1622 = vmatpush.msra.mxu0 0.0
    %1623 = vmatpush.msra.mxu0 0.0
    %1624 = vmatpush.msra.mxu0 0.0
    %1625 = vmatpush.msra.mxu0 0.0
    %1626 = vmatpush.msra.mxu0 %v1611
    %1627 = vmatpush.msra.mxu0 %v1610
    %1628 = vmatpush.msra.mxu0 %v1609
    %1629 = vmatpush.msra.mxu0 %v1608
    %1630 = vmatmul.f32.gmra.mxu0 %v1612
    %v1631 = vpop.f32.mrf.mxu0
    %v1632 = vadd.f32 0.0, %v1631
    %1633 = vdwg.mxu0
    %v1634 = vadd.f32 %v1607, %v1632
    %v1635 = vtanh.pop %v1634
    %v1636 = vxor.u32 %v1634, 2147483648
    %v1637 = vmul.f32 %v1636, 1.442695
    %v1638 = vpow.pop %v1637
    %v1639 = vadd.f32 %v1638, 1.0
    %v1640 = vrcp.pop %v1639
    %v1641 = vmul.f32 %v1639, %v1640
    %v1642 = vsub.f32 1.0, %v1641
    %v1643 = vmul.f32 %v1640, %v1642
    %v1644 = vadd.f32 %v1640, %v1643
    %vm1645 = vweird.f32 %v1639
    %vm1646 = vweird.f32 %v1640
    %vm1647 = vmor %vm1645, %vm1646
    %v1648 = vsel %vm1647, %v1640, %v1644
    %v1649 = vand.u32 2147483647, %v1639
    %vm1650 = vcmp.eq.f32.partialorder %v1649, 8.507059e+37
    %v1651 = vand.u32 %v1639, 2147483648
    %v1652 = vor.u32 1.1754944e-38, %v1651
    %v1653 = vsel %vm1650, %v1652, %v1648
    %v1654 = vmul.f32 1.0, %v1653
    %v1655 = vsel %vm242, %v1635, %v1654
    %v1656 = vmul.f32 %v1655, %v1518
    %1658 = vrot.lane.b32.xlu0 %v1655, 64
    %v1659 = vpop.permute.xlu0 %1658
    %v1661 = vmul.f32 %v1655, %v1659
    %1663 = vrot.lane.b32.xlu0 %v1661, 32
    %v1664 = vpop.permute.xlu0 %1663
    %v1666 = vadd.f32 %v1656, %v1664
    %v1667 = vtanh.pop %v1666
    %1669 = vrot.lane.b32.xlu0 %v1667, 64
    %v1670 = vpop.permute.xlu0 %1669
    %v1672 = vmul.f32 %v1655, %v1670
    %1674 = vrot.lane.b32.xlu0 %v1672, 32
    %v1675 = vpop.permute.xlu0 %1674
    %1677 = vrot.lane.b32.xlu0 %v1601, 64
    %v1678 = vpop.permute.xlu0 %1677
    %v1680 = vsel %vm344, %v1675, %v1678
    %v1681 = vld [vmem:[%s6] sm:$0xff]
    %v1682 = vld [vmem:[%s6 + $0x8] sm:$0xff]
    %v1683 = vld [vmem:[%s6 + $0x10] sm:$0xff]
    %v1684 = vld [vmem:[%s6 + $0x18] sm:$0xff]
    %v1685 = vld [vmem:[%s6 + $0x20] sm:$0xff]
    %v1686 = vld [vmem:[%s6 + $0x28] sm:$0xff]
    %v1687 = vld [vmem:[%s6 + $0x30] sm:$0xff]
    %v1688 = vld [vmem:[%s6 + $0x38] sm:$0xff]
    %v1690 = vsel %vm420, %v1680, 0
    %1692 = vmatpush.msra.mxu0 0.0
    %1693 = vmatpush.msra.mxu0 0.0
    %1694 = vmatpush.msra.mxu0 0.0
    %1695 = vmatpush.msra.mxu0 0.0
    %1696 = vmatpush.msra.mxu0 0.0
    %1697 = vmatpush.msra.mxu0 0.0
    %1698 = vmatpush.msra.mxu0 0.0
    %1699 = vmatpush.msra.mxu0 0.0
    %1700 = vmatpush.msra.mxu0 %v1688
    %1701 = vmatpush.msra.mxu0 %v1687
    %1702 = vmatpush.msra.mxu0 %v1686
    %1703 = vmatpush.msra.mxu0 %v1685
    %1704 = vmatpush.msra.mxu0 %v1684
    %1705 = vmatpush.msra.mxu0 %v1683
    %1706 = vmatpush.msra.mxu0 %v1682
    %1707 = vmatpush.msra.mxu0 %v1681
    %1708 = vmatmul.f32.gmra.mxu0 %v1690
    %v1709 = vpop.f32.mrf.mxu0
    %v1710 = vadd.f32 %v236, %v1709
    %1711 = vdwg.mxu0
    %v1712 = vtanh.pop %v1710
    %v1713 = vxor.u32 %v1710, 2147483648
    %v1714 = vmul.f32 %v1713, 1.442695
    %v1715 = vpow.pop %v1714
    %v1716 = vadd.f32 %v1715, 1.0
    %v1717 = vrcp.pop %v1716
    %v1718 = vmul.f32 %v1716, %v1717
    %v1719 = vsub.f32 1.0, %v1718
    %v1720 = vmul.f32 %v1717, %v1719
    %v1721 = vadd.f32 %v1717, %v1720
    %vm1722 = vweird.f32 %v1716
    %vm1723 = vweird.f32 %v1717
    %vm1724 = vmor %vm1722, %vm1723
    %v1725 = vsel %vm1724, %v1717, %v1721
    %v1726 = vand.u32 2147483647, %v1716
    %vm1727 = vcmp.eq.f32.partialorder %v1726, 8.507059e+37
    %v1728 = vand.u32 %v1716, 2147483648
    %v1729 = vor.u32 1.1754944e-38, %v1728
    %v1730 = vsel %vm1727, %v1729, %v1725
    %v1731 = vmul.f32 1.0, %v1730
    %v1732 = vsel %vm242, %v1712, %v1731
    %v1733 = vmul.f32 %v1732, %v1595
    %1735 = vrot.lane.b32.xlu0 %v1732, 64
    %v1736 = vpop.permute.xlu0 %1735
    %v1738 = vmul.f32 %v1732, %v1736
    %1740 = vrot.lane.b32.xlu0 %v1738, 32
    %v1741 = vpop.permute.xlu0 %1740
    %v1743 = vadd.f32 %v1733, %v1741
    %v1744 = vtanh.pop %v1743
    %1746 = vrot.lane.b32.xlu0 %v1744, 64
    %v1747 = vpop.permute.xlu0 %1746
    %v1749 = vmul.f32 %v1732, %v1747
    %1751 = vrot.lane.b32.xlu0 %v1749, 32
    %v1752 = vpop.permute.xlu0 %1751
    %1754 = vst.msk [vmem:[#allocation3 + $0x18] sm:$0xff] %vm344, %v1752
    %v1755 = vld [vmem:[#allocation2 + $0x40] sm:$0xff]
    %v1756 = vld [vmem:[#allocation10] sm:$0xff]
    %v1757 = vld [vmem:[#allocation10 + $0x8] sm:$0xff]
    %v1758 = vld [vmem:[#allocation10 + $0x10] sm:$0xff]
    %v1759 = vld [vmem:[#allocation10 + $0x18] sm:$0xff]
    %v1760 = vsel %vm344, %v1675, 0
    %1762 = vmatpush.msra.mxu0 0.0
    %1763 = vmatpush.msra.mxu0 0.0
    %1764 = vmatpush.msra.mxu0 0.0
    %1765 = vmatpush.msra.mxu0 0.0
    %1766 = vmatpush.msra.mxu0 0.0
    %1767 = vmatpush.msra.mxu0 0.0
    %1768 = vmatpush.msra.mxu0 0.0
    %1769 = vmatpush.msra.mxu0 0.0
    %1770 = vmatpush.msra.mxu0 0.0
    %1771 = vmatpush.msra.mxu0 0.0
    %1772 = vmatpush.msra.mxu0 0.0
    %1773 = vmatpush.msra.mxu0 0.0
    %1774 = vmatpush.msra.mxu0 %v1759
    %1775 = vmatpush.msra.mxu0 %v1758
    %1776 = vmatpush.msra.mxu0 %v1757
    %1777 = vmatpush.msra.mxu0 %v1756
    %1778 = vmatmul.f32.gmra.mxu0 %v1760
    %v1779 = vpop.f32.mrf.mxu0
    %v1780 = vadd.f32 0.0, %v1779
    %1781 = vdwg.mxu0
    %v1782 = vadd.f32 %v1755, %v1780
    %v1783 = vtanh.pop %v1782
    %v1784 = vxor.u32 %v1782, 2147483648
    %v1785 = vmul.f32 %v1784, 1.442695
    %v1786 = vpow.pop %v1785
    %v1787 = vadd.f32 %v1786, 1.0
    %v1788 = vrcp.pop %v1787
    %v1789 = vmul.f32 %v1787, %v1788
    %v1790 = vsub.f32 1.0, %v1789
    %v1791 = vmul.f32 %v1788, %v1790
    %v1792 = vadd.f32 %v1788, %v1791
    %vm1793 = vweird.f32 %v1787
    %vm1794 = vweird.f32 %v1788
    %vm1795 = vmor %vm1793, %vm1794
    %v1796 = vsel %vm1795, %v1788, %v1792
    %v1797 = vand.u32 2147483647, %v1787
    %vm1798 = vcmp.eq.f32.partialorder %v1797, 8.507059e+37
    %v1799 = vand.u32 %v1787, 2147483648
    %v1800 = vor.u32 1.1754944e-38, %v1799
    %v1801 = vsel %vm1798, %v1800, %v1796
    %v1802 = vmul.f32 1.0, %v1801
    %v1803 = vsel %vm242, %v1783, %v1802
    %v1804 = vmul.f32 %v1803, %v1666
    %1806 = vrot.lane.b32.xlu0 %v1803, 64
    %v1807 = vpop.permute.xlu0 %1806
    %v1809 = vmul.f32 %v1803, %v1807
    %1811 = vrot.lane.b32.xlu0 %v1809, 32
    %v1812 = vpop.permute.xlu0 %1811
    %v1814 = vadd.f32 %v1804, %v1812
    %v1815 = vtanh.pop %v1814
    %1817 = vrot.lane.b32.xlu0 %v1815, 64
    %v1818 = vpop.permute.xlu0 %1817
    %v1820 = vmul.f32 %v1803, %v1818
    %1822 = vrot.lane.b32.xlu0 %v1820, 32
    %v1823 = vpop.permute.xlu0 %1822
    %1825 = vrot.lane.b32.xlu0 %v1749, 64
    %v1826 = vpop.permute.xlu0 %1825
    %v1828 = vsel %vm344, %v1823, %v1826
    %v1829 = vld [vmem:[%s6] sm:$0xff]
    %v1830 = vld [vmem:[%s6 + $0x8] sm:$0xff]
    %v1831 = vld [vmem:[%s6 + $0x10] sm:$0xff]
    %v1832 = vld [vmem:[%s6 + $0x18] sm:$0xff]
    %v1833 = vld [vmem:[%s6 + $0x20] sm:$0xff]
    %v1834 = vld [vmem:[%s6 + $0x28] sm:$0xff]
    %v1835 = vld [vmem:[%s6 + $0x30] sm:$0xff]
    %v1836 = vld [vmem:[%s6 + $0x38] sm:$0xff]
    %v1838 = vsel %vm420, %v1828, 0
    %1840 = vmatpush.msra.mxu0 0.0
    %1841 = vmatpush.msra.mxu0 0.0
    %1842 = vmatpush.msra.mxu0 0.0
    %1843 = vmatpush.msra.mxu0 0.0
    %1844 = vmatpush.msra.mxu0 0.0
    %1845 = vmatpush.msra.mxu0 0.0
    %1846 = vmatpush.msra.mxu0 0.0
    %1847 = vmatpush.msra.mxu0 0.0
    %1848 = vmatpush.msra.mxu0 %v1836
    %1849 = vmatpush.msra.mxu0 %v1835
    %1850 = vmatpush.msra.mxu0 %v1834
    %1851 = vmatpush.msra.mxu0 %v1833
    %1852 = vmatpush.msra.mxu0 %v1832
    %1853 = vmatpush.msra.mxu0 %v1831
    %1854 = vmatpush.msra.mxu0 %v1830
    %1855 = vmatpush.msra.mxu0 %v1829
    %1856 = vmatmul.f32.gmra.mxu0 %v1838
    %v1857 = vpop.f32.mrf.mxu0
    %v1858 = vadd.f32 %v236, %v1857
    %1859 = vdwg.mxu0
    %v1860 = vtanh.pop %v1858
    %v1861 = vxor.u32 %v1858, 2147483648
    %v1862 = vmul.f32 %v1861, 1.442695
    %v1863 = vpow.pop %v1862
    %v1864 = vadd.f32 %v1863, 1.0
    %v1865 = vrcp.pop %v1864
    %v1866 = vmul.f32 %v1864, %v1865
    %v1867 = vsub.f32 1.0, %v1866
    %v1868 = vmul.f32 %v1865, %v1867
    %v1869 = vadd.f32 %v1865, %v1868
    %vm1870 = vweird.f32 %v1864
    %vm1871 = vweird.f32 %v1865
    %vm1872 = vmor %vm1870, %vm1871
    %v1873 = vsel %vm1872, %v1865, %v1869
    %v1874 = vand.u32 2147483647, %v1864
    %vm1875 = vcmp.eq.f32.partialorder %v1874, 8.507059e+37
    %v1876 = vand.u32 %v1864, 2147483648
    %v1877 = vor.u32 1.1754944e-38, %v1876
    %v1878 = vsel %vm1875, %v1877, %v1873
    %v1879 = vmul.f32 1.0, %v1878
    %v1880 = vsel %vm242, %v1860, %v1879
    %v1881 = vmul.f32 %v1880, %v1743
    %1883 = vrot.lane.b32.xlu0 %v1880, 64
    %v1884 = vpop.permute.xlu0 %1883
    %v1886 = vmul.f32 %v1880, %v1884
    %1888 = vrot.lane.b32.xlu0 %v1886, 32
    %v1889 = vpop.permute.xlu0 %1888
    %v1891 = vadd.f32 %v1881, %v1889
    %v1892 = vtanh.pop %v1891
    %1894 = vrot.lane.b32.xlu0 %v1892, 64
    %v1895 = vpop.permute.xlu0 %1894
    %v1897 = vmul.f32 %v1880, %v1895
    %1899 = vrot.lane.b32.xlu0 %v1897, 32
    %v1900 = vpop.permute.xlu0 %1899
    %1902 = vst.msk [vmem:[#allocation3 + $0x20] sm:$0xff] %vm344, %v1900
    %v1903 = vld [vmem:[#allocation3] sm:$0xff]
    %v1904 = vld [vmem:[#allocation3 + $0x8] sm:$0xff]
    %v1905 = vld [vmem:[#allocation3 + $0x10] sm:$0xff]
    %v1906 = vld [vmem:[#allocation3 + $0x18] sm:$0xff]
    %v1907 = vld [vmem:[#allocation3 + $0x20] sm:$0xff]
    %v1908 = vld [vmem:[#allocation21] sm:$0xff]
    %v1909 = vld [vmem:[#allocation21 + $0x8] sm:$0xff]
    %v1910 = vld [vmem:[#allocation21 + $0x10] sm:$0xff]
    %v1911 = vld [vmem:[#allocation21 + $0x18] sm:$0xff]
    %v1912 = vld [vmem:[%s17] sm:$0x1]
    %v1914 = vperm.slane %v1912, 0
    %v1917 = vsel %vm344, %v1903, 0
    %v1920 = vsel %vm344, %v1904, 0
    %v1923 = vsel %vm344, %v1905, 0
    %v1926 = vsel %vm344, %v1906, 0
    %v1929 = vsel %vm344, %v1907, 0
    %1931 = vmatpush.msra.mxu0 0.0
    %1932 = vmatpush.msra.mxu0 0.0
    %1933 = vmatpush.msra.mxu0 0.0
    %1934 = vmatpush.msra.mxu0 0.0
    %1935 = vmatpush.msra.mxu0 0.0
    %1936 = vmatpush.msra.mxu0 0.0
    %1937 = vmatpush.msra.mxu0 0.0
    %1938 = vmatpush.msra.mxu0 0.0
    %1939 = vmatpush.msra.mxu0 0.0
    %1940 = vmatpush.msra.mxu0 0.0
    %1941 = vmatpush.msra.mxu0 0.0
    %1942 = vmatpush.msra.mxu0 0.0
    %1943 = vmatpush.msra.mxu0 %v1911
    %1944 = vmatpush.msra.mxu0 %v1910
    %1945 = vmatpush.msra.mxu0 %v1909
    %1946 = vmatpush.msra.mxu0 %v1908
    %1947 = vmatmul.f32.gmra.mxu0 %v1917
    %v1948 = vpop.f32.mrf.mxu0
    %v1949 = vadd.f32 %v1914, %v1948
    %1950 = vmatmul.f32.gmra.mxu0 %v1920
    %v1951 = vpop.f32.mrf.mxu0
    %v1952 = vadd.f32 %v1914, %v1951
    %1953 = vmatmul.f32.gmra.mxu0 %v1923
    %v1954 = vpop.f32.mrf.mxu0
    %v1955 = vadd.f32 %v1914, %v1954
    %1956 = vmatmul.f32.gmra.mxu0 %v1926
    %v1957 = vpop.f32.mrf.mxu0
    %v1958 = vadd.f32 %v1914, %v1957
    %1959 = vmatmul.f32.gmra.mxu0 %v1929
    %v1960 = vpop.f32.mrf.mxu0
    %v1961 = vadd.f32 %v1914, %v1960
    %1962 = vdwg.mxu0
    %1963 = vst [vmem:[#allocation29] sm:$0xff] %v1949
    %1964 = vst [vmem:[#allocation29 + $0x8] sm:$0xff] %v1952
    %1965 = vst [vmem:[#allocation29 + $0x10] sm:$0xff] %v1955
    %1966 = vst [vmem:[#allocation29 + $0x18] sm:$0xff] %v1958
    %1967 = vst [vmem:[#allocation29 + $0x20] sm:$0xff] %v1961
    // Predicated region
    $region118: #{tpu_custom_call.1} parent=1 // pred_check
      _
    $region119: #{tpu_custom_call.1} parent=1 // pred_check_branch
      %1969 = sbr.rel (0) target = $region121
    $region120: #{tpu_custom_call.1} parent=1 // pred_region
      %1971 = vsyncadd [#allocation6], 0
      %s1973 = sshll.u32 [#allocation22], 4
      %s1974 = int_to_ptr.vmem [resolvable:$true] %s1973
      %s1975 = sshll.u32 %s18, 4
      %s1976 = int_to_ptr.hbm [resolvable:$true] %s1975
      %1978 = dma.vmem_to_hbm [thread:$0]  %s1974, 128, %s1976, [#allocation6]
    $region121: #{tpu_custom_call.1} parent=1 // pred_fallthru
      _
    // Predicated region
    $region122: #{tpu_custom_call.1} parent=1 // pred_check
      _
    $region123: #{tpu_custom_call.1} parent=1 // pred_check_branch
      %1980 = sbr.rel (0) target = $region125
    $region124: #{tpu_custom_call.1} parent=1 // pred_region
      %1982 = vsyncadd [#allocation24], 0
      %s1984 = sshll.u32 [#allocation23], 4
      %s1985 = int_to_ptr.vmem [resolvable:$true] %s1984
      %s1986 = sshll.u32 %s19, 4
      %s1987 = int_to_ptr.hbm [resolvable:$true] %s1986
      %1989 = dma.vmem_to_hbm [thread:$0]  %s1985, 128, %s1987, [#allocation24]
    $region125: #{tpu_custom_call.1} parent=1 // pred_fallthru
      _
    // Predicated region
    $region126: #{tpu_custom_call.1} parent=1 // pred_check
      _
    $region127: #{tpu_custom_call.1} parent=1 // pred_check_branch
      %1991 = sbr.rel (0) target = $region129
    $region128: #{tpu_custom_call.1} parent=1 // pred_region
      %1993 = vsyncadd [#allocation24], 0
      %s1995 = sshll.u32 [#allocation25], 4
      %s1996 = int_to_ptr.vmem [resolvable:$true] %s1995
      %s1997 = sshll.u32 %s20, 4
      %s1998 = int_to_ptr.hbm [resolvable:$true] %s1997
      %2000 = dma.vmem_to_hbm [thread:$0]  %s1996, 128, %s1998, [#allocation24]
    $region129: #{tpu_custom_call.1} parent=1 // pred_fallthru
      _
    // Predicated region
    $region130: #{tpu_custom_call.1} parent=1 // pred_check
      _
    $region131: #{tpu_custom_call.1} parent=1 // pred_check_branch
      %2002 = sbr.rel (0) target = $region133
    $region132: #{tpu_custom_call.1} parent=1 // pred_region
      %2004 = vsyncadd [#allocation27], 0
      %s2006 = sshll.u32 [#allocation26], 4
      %s2007 = int_to_ptr.vmem [resolvable:$true] %s2006
      %s2008 = sshll.u32 %s21, 4
      %s2009 = int_to_ptr.hbm [resolvable:$true] %s2008
      %2011 = dma.vmem_to_hbm [thread:$0]  %s2007, 128, %s2009, [#allocation27]
    $region133: #{tpu_custom_call.1} parent=1 // pred_fallthru
      _
    // Predicated region
    $region134: #{tpu_custom_call.1} parent=1 // pred_check
      _
    $region135: #{tpu_custom_call.1} parent=1 // pred_check_branch
      %2013 = sbr.rel (0) target = $region137
    $region136: #{tpu_custom_call.1} parent=1 // pred_region
      %2015 = vsyncadd [#allocation27], 0
      %s2017 = sshll.u32 [#allocation28], 4
      %s2018 = int_to_ptr.vmem [resolvable:$true] %s2017
      %s2019 = sshll.u32 %s22, 4
      %s2020 = int_to_ptr.hbm [resolvable:$true] %s2019
      %2022 = dma.vmem_to_hbm [thread:$0]  %s2018, 128, %s2020, [#allocation27]
    $region137: #{tpu_custom_call.1} parent=1 // pred_fallthru
      _
    // Predicated region
    $region138: #{tpu_custom_call.1} parent=1 // pred_check
      _
    $region139: #{tpu_custom_call.1} parent=1 // pred_check_branch
      %2024 = sbr.rel (0) target = $region141
    $region140: #{tpu_custom_call.1} parent=1 // pred_region
      %2026 = vsyncadd [#allocation30], 0
      %s2027 = sshll.u32 [#allocation29], 4
      %s2028 = int_to_ptr.vmem [resolvable:$true] %s2027
      %s2029 = sshll.u32 %s23, 4
      %s2030 = int_to_ptr.hbm [resolvable:$true] %s2029
      %2035 = dma.vmem_to_hbm [thread:$0]  %s2028, 640, %s2030, [#allocation30], 128, 128, 8
    $region141: #{tpu_custom_call.1} parent=1 // pred_fallthru
      _
    // Predicated region
    $region142: #{tpu_custom_call.1} parent=1 // pred_check
      _
    $region143: #{tpu_custom_call.1} parent=1 // pred_check_branch
      %2037 = sbr.rel (0) target = $region145
    $region144: #{tpu_custom_call.1} parent=1 // pred_region
      %2039 = dma.done [#allocation6], 128
    $region145: #{tpu_custom_call.1} parent=1 // pred_fallthru
      _
    // Predicated region
    $region146: #{tpu_custom_call.1} parent=1 // pred_check
      _
    $region147: #{tpu_custom_call.1} parent=1 // pred_check_branch
      %2041 = sbr.rel (0) target = $region149
    $region148: #{tpu_custom_call.1} parent=1 // pred_region
      %2043 = dma.done [#allocation24], 128
    $region149: #{tpu_custom_call.1} parent=1 // pred_fallthru
      _
    // Predicated region
    $region150: #{tpu_custom_call.1} parent=1 // pred_check
      _
    $region151: #{tpu_custom_call.1} parent=1 // pred_check_branch
      %2045 = sbr.rel (0) target = $region153
    $region152: #{tpu_custom_call.1} parent=1 // pred_region
      %2047 = dma.done [#allocation24], 128
    $region153: #{tpu_custom_call.1} parent=1 // pred_fallthru
      _
    // Predicated region
    $region154: #{tpu_custom_call.1} parent=1 // pred_check
      _
    $region155: #{tpu_custom_call.1} parent=1 // pred_check_branch
      %2049 = sbr.rel (0) target = $region157
    $region156: #{tpu_custom_call.1} parent=1 // pred_region
      %2051 = dma.done [#allocation27], 128
    $region157: #{tpu_custom_call.1} parent=1 // pred_fallthru
      _
    // Predicated region
    $region158: #{tpu_custom_call.1} parent=1 // pred_check
      _
    $region159: #{tpu_custom_call.1} parent=1 // pred_check_branch
      %2053 = sbr.rel (0) target = $region161
    $region160: #{tpu_custom_call.1} parent=1 // pred_region
      %2055 = dma.done [#allocation27], 128
    $region161: #{tpu_custom_call.1} parent=1 // pred_fallthru
      _
    // Predicated region
    $region162: #{tpu_custom_call.1} parent=1 // pred_check
      _
    $region163: #{tpu_custom_call.1} parent=1 // pred_check_branch
      %2057 = sbr.rel (0) target = $region165
    $region164: #{tpu_custom_call.1} parent=1 // pred_region
      %2059 = dma.done [#allocation30], 640
    $region165: #{tpu_custom_call.1} parent=1 // pred_fallthru
      _
    %2060 = vsyncpa [#allocation5], 1
    %2061 = vsyncpa [#allocation8], 1
    %2062 = vsyncpa [#allocation11], 1
    %2063 = vsyncpa [#allocation14], 1
    %2064 = vsyncpa [#allocation17], 1
    %2065 = vsyncpa [#allocation20], 1
    %2066 = vsyncpa [#allocation6], 1
    %2067 = vsyncpa [#allocation24], 1
    %2068 = vsyncpa [#allocation27], 1
    %2069 = vsyncpa [#allocation30], 1

</llo_original>
